<compile_context>
chip_gen: v7x
topology: tpu7x:2x2x1
jax: 0.10.0
libtpu: 0.0.40
codegen_flags: <defaults>
</compile_context>

<pallas_src>
import functools

import numpy as np
import jax
import jax.numpy as jnp
from jax import lax
from jax.experimental import pallas as pl
from jax.experimental.pallas import tpu as pltpu

KS = 5  # LeNet conv kernel size


# --------------------- host-side one-time weight packing --------------------

def _banded_conv_matrix(w, w_in):
    """w: [OutC, Cin, KS, KS] (torch layout).  Returns [KS*w_in*Cin, OW*OutC]
    such that, with activations laid out as a2d[h, w*Cin + c] = act[c, h, w]
    and LHS[oh, kh*w_in*Cin + :] = a2d[oh + kh, :]:
        conv_out[oh, ow*OutC + oc] = (LHS @ W)[oh, ow*OutC + oc]."""
    out_c, in_c, _, _ = w.shape
    ow_total = w_in - KS + 1
    band = np.zeros((KS, w_in * in_c, ow_total * out_c), np.float32)
    for kh in range(KS):
        wt = np.asarray(w[:, :, kh, :], np.float32)        # [OutC, Cin, KS]
        for o in range(ow_total):
            for kw in range(KS):
                col = o + kw
                band[kh, col * in_c:(col + 1) * in_c,
                     o * out_c:(o + 1) * out_c] = wt[:, :, kw].T
    return band.reshape(KS * w_in * in_c, ow_total * out_c)


def _pool_selection_matrices(oh, ow, ch):
    """Fused 0/1 selectors for an exact 2x2 stride-2 max pool on [oh, ow*ch]:
        m  = v @ S          -> [oh, 2*owp*ch]; lane-half max -> [oh, owp*ch]
        pw = T @ m          -> [2*ohp, owp*ch]; sublane-half max -> [ohp, owp*ch]
    """
    ohp, owp = oh // 2, ow // 2
    s = np.zeros((2, ow * ch, owp * ch), np.float32)
    for wo in range(owp):
        for c in range(ch):
            s[0, (2 * wo) * ch + c, wo * ch + c] = 1.0
            s[1, (2 * wo + 1) * ch + c, wo * ch + c] = 1.0
    t = np.zeros((2, ohp, oh), np.float32)
    for ho in range(ohp):
        t[0, ho, 2 * ho] = 1.0
        t[1, ho, 2 * ho + 1] = 1.0
    s_cat = np.concatenate([s[0], s[1]], axis=1)            # [ow*ch, 2*owp*ch]
    t_cat = np.concatenate([t[0], t[1]], axis=0)            # [2*ohp, oh]
    return s_cat, t_cat


def _permute_fc1(fw1, oh, ow, ch):
    """torch fc1 weight [120, ch*oh*ow] (flatten order c,h,w) -> [oh*ow*ch, 120]
    consuming the kernel's row-major [oh, ow*ch] pooled layout (so the
    NHWC->NCHW transpose + flatten disappear)."""
    n_hidden = fw1.shape[0]
    out = np.zeros((oh, ow * ch, n_hidden), np.float32)
    f = np.asarray(fw1, np.float32)
    for h in range(oh):
        for w in range(ow):
            for c in range(ch):
                out[h, w * ch + c, :] = f[:, c * oh * ow + h * ow + w]
    return out.reshape(oh * ow * ch, n_hidden)


def init_raw_params(key, channel, num_classes):
    """Same shapes / init style as the nn.Module (uniform +-1/sqrt(fan_in))."""
    ks = jax.random.split(key, 10)

    def u(k, shape, fan_in):
        b = 1.0 / np.sqrt(float(fan_in))
        return np.asarray(jax.random.uniform(k, shape, jnp.float32, -b, b))

    return {
        "w1": u(ks[0], (6, channel, KS, KS), channel * KS * KS),
        "b1": u(ks[1], (6,), channel * KS * KS),
        "w2": u(ks[2], (16, 6, KS, KS), 6 * KS * KS),
        "b2": u(ks[3], (16,), 6 * KS * KS),
        "fw1": u(ks[4], (120, 400), 400),
        "fb1": u(ks[5], (120,), 400),
        "fw2": u(ks[6], (84, 120), 120),
        "fb2": u(ks[7], (84,), 120),
        "fw3": u(ks[8], (num_classes, 84), 84),
        "fb3": u(ks[9], (num_classes,), 84),
    }


def pack_params(raw, channel, res, spatial=None):
    """One-time packing of torch-layout weights into fused-kernel operands."""
    assert res == 32, "stride-2 conv1 path (res != 32) is not supported"
    pad = 2 if channel == 1 else 0                  # matches nn.Conv2d padding
    if spatial is None:
        spatial = 28 if channel == 1 else 32        # MNIST / CIFAR-style inputs
    h0 = spatial + 2 * pad                          # post-pad spatial size
    assert h0 == 32, "post-padding spatial size must be 32 for fc_1(400, 120)"
    oh1 = h0 - KS + 1                               # 28
    oh1p = oh1 // 2                                 # 14
    oh2 = oh1p - KS + 1                             # 10
    oh2p = oh2 // 2                                 # 5
    assert 16 * oh2p * oh2p == raw["fw1"].shape[1], \
        "flatten size does not match fc_1 input features"

    s1, t1 = _pool_selection_matrices(oh1, oh1, 6)
    s2, t2 = _pool_selection_matrices(oh2, oh2, 16)

    num_classes = raw["fw3"].shape[0]
    ncp = max(128, ((num_classes + 127) // 128) * 128)   # lane-dense output
    fw3p = np.zeros((84, ncp), np.float32)
    fw3p[:, :num_classes] = np.asarray(raw["fw3"], np.float32).T
    fb3p = np.zeros((1, ncp), np.float32)
    fb3p[0, :num_classes] = np.asarray(raw["fb3"], np.float32)

    consts_np = {
        "c1": _banded_conv_matrix(raw["w1"], h0),               # [5*w*c, 28*6]
        "b1": np.tile(np.asarray(raw["b1"], np.float32), oh1)[None, :],
        "s1": s1, "t1": t1,
        "c2": _banded_conv_matrix(raw["w2"], oh1p),             # [5*84, 10*16]
        "b2": np.tile(np.asarray(raw["b2"], np.float32), oh2)[None, :],
        "s2": s2, "t2": t2,
        "fw1": _permute_fc1(raw["fw1"], oh2p, oh2p, 16),        # [400, 120]
        "fb1": np.asarray(raw["fb1"], np.float32)[None, :],
        "fw2": np.ascontiguousarray(np.asarray(raw["fw2"], np.float32).T),
        "fb2": np.asarray(raw["fb2"], np.float32)[None, :],
        "fw3": fw3p,
        "fb3": fb3p,
    }
    bf16_keys = {"c1", "s1", "t1", "c2", "s2", "t2", "fw1", "fw2", "fw3"}
    consts = {k: jnp.asarray(v, dtype=jnp.bfloat16 if k in bf16_keys
                             else jnp.float32)
              for k, v in consts_np.items()}
    dims = (h0, oh1, oh1p, oh2, oh2p, num_classes, ncp)
    return consts, dims


# ------------------------------ fused kernel --------------------------------

_CONST_ORDER = ("c1", "b1", "s1", "t1", "c2", "b2", "s2", "t2",
                "fw1", "fb1", "fw2", "fb2", "fw3", "fb3")


def _make_kernel(dims, bt):
    h0, oh1, oh1p, oh2, oh2p, _nc, _ncp = dims
    hw1 = oh1p * 6      # lane-half width after pool1 S matmul  (ow1p * 6  = 84)
    hw2 = oh2p * 16     # lane-half width after pool2 S matmul  (ow2p * 16 = 80)
    f32, bf16 = jnp.float32, jnp.bfloat16

    def kernel(x_ref, c1_ref, b1_ref, s1_ref, t1_ref,
               c2_ref, b2_ref, s2_ref, t2_ref,
               fw1_ref, fb1_ref, fw2_ref, fb2_ref, fw3_ref, fb3_ref, out_ref):
        # --- conv1: merged-band im2col LHS stacked over the batch tile ------
        lhs1_rows = []
        for b in range(bt):
            xb = x_ref[b]                                        # [h0, w*c] bf16
            lhs1_rows.append(jnp.concatenate(
                [xb[kh:kh + oh1, :] for kh in range(KS)], axis=1))
        lhs1 = jnp.concatenate(lhs1_rows, axis=0)                # [bt*28, 5*w*c]
        v1 = jnp.dot(lhs1, c1_ref[...], preferred_element_type=f32) + b1_ref[...]
        v1 = jnp.maximum(v1, 0.0).astype(bf16)                   # [bt*28, 28*6]
        # fused pool1 lane selection (batched) + lane-half max
        m1 = jnp.dot(v1, s1_ref[...], preferred_element_type=f32)
        m1 = jnp.maximum(m1[:, :hw1], m1[:, hw1:]).astype(bf16)  # [bt*28, 84]

        # --- pool1 rows (per image) + conv2 merged-band LHS -----------------
        lhs2_rows = []
        for b in range(bt):
            pb = jnp.dot(t1_ref[...], m1[b * oh1:(b + 1) * oh1, :],
                         preferred_element_type=f32)             # [28, 84]
            p1 = jnp.maximum(pb[:oh1p, :], pb[oh1p:, :]).astype(bf16)   # [14, 84]
            lhs2_rows.append(jnp.concatenate(
                [p1[kh:kh + oh2, :] for kh in range(KS)], axis=1))
        lhs2 = jnp.concatenate(lhs2_rows, axis=0)                # [bt*10, 5*84]
        v2 = jnp.dot(lhs2, c2_ref[...], preferred_element_type=f32) + b2_ref[...]
        v2 = jnp.maximum(v2, 0.0).astype(bf16)                   # [bt*10, 10*16]
        m2 = jnp.dot(v2, s2_ref[...], preferred_element_type=f32)
        m2 = jnp.maximum(m2[:, :hw2], m2[:, hw2:]).astype(bf16)  # [bt*10, 80]

        # --- pool2 rows + flatten -> one [bt, 400] LHS for fc1 --------------
        flat_rows = []
        for b in range(bt):
            pb = jnp.dot(t2_ref[...], m2[b * oh2:(b + 1) * oh2, :],
                         preferred_element_type=f32)             # [10, 80]
            p2 = jnp.maximum(pb[:oh2p, :], pb[oh2p:, :]).astype(bf16)   # [5, 80]
            flat_rows.append(jnp.concatenate(
                [p2[r:r + 1, :] for r in range(oh2p)], axis=1))  # [1, 400]
        flat = jnp.concatenate(flat_rows, axis=0)                # [bt, 400] bf16

        # --- batched FC tail -------------------------------------------------
        h = jnp.dot(flat, fw1_ref[...], preferred_element_type=f32) + fb1_ref[...]
        h = jnp.maximum(h, 0.0)                                  # [bt, 120]
        h = jnp.dot(h.astype(bf16), fw2_ref[...],
                    preferred_element_type=f32) + fb2_ref[...]
        h = jnp.maximum(h, 0.0)                                  # [bt, 84]
        out_ref[...] = (jnp.dot(h.astype(bf16), fw3_ref[...],
                                preferred_element_type=f32) + fb3_ref[...])

    return kernel


@functools.partial(jax.jit, static_argnames=("dims", "channel", "res", "b_tile"))
def lenet_forward(x_nchw, consts, *, dims, channel, res, b_tile=8):
    assert res == 32
    h0, oh1, oh1p, oh2, oh2p, num_classes, ncp = dims

    pad = 2 if channel == 1 else 0                   # module semantics
    if pad:
        x_nchw = jnp.pad(x_nchw, ((0, 0), (0, 0), (pad, pad), (pad, pad)))
    n, c, h, w = x_nchw.shape
    assert h == h0 and w == h0 and c == channel

    # batch tile: multiple of 8 (sublane-aligned output blocks) or whole batch
    bt = b_tile if n >= b_tile else n
    assert bt == n or bt % 8 == 0, "b_tile must be a multiple of 8 (or == batch)"
    n_pad = -(-n // bt) * bt

    # [N, H, W*C] bf16: sublanes = image rows, lanes = (width, channel).
    x2d = x_nchw.transpose(0, 2, 3, 1).reshape(n, h0, h0 * c).astype(jnp.bfloat16)
    if n_pad != n:
        x2d = jnp.pad(x2d, ((0, n_pad - n), (0, 0), (0, 0)))

    const_args = [consts[k] for k in _CONST_ORDER]

    out = pl.pallas_call(
        _make_kernel(dims, bt),
        out_shape=jax.ShapeDtypeStruct((n_pad, ncp), jnp.float32),
        grid=(n_pad // bt,),
        in_specs=[pl.BlockSpec((bt, h0, h0 * c), lambda i: (i, 0, 0))]
        + [pl.BlockSpec(a.shape, lambda i: (0, 0)) for a in const_args],
        out_specs=pl.BlockSpec((bt, ncp), lambda i: (i, 0)),
        compiler_params=pltpu.CompilerParams(
            dimension_semantics=("parallel",)),
    )(x2d, *const_args)
    return out[:n, :num_classes]


# ------------------------- pure-XLA reference check --------------------------

def lenet_reference(x, raw, channel, res):
    """Plain-JAX replica of the PyTorch module (for verification only)."""
    hp = lax.Precision.HIGHEST
    pad = 2 if channel == 1 else 0
    stride = 1 if res == 32 else 2
    y = lax.conv_general_dilated(
        x, jnp.asarray(raw["w1"]), (stride, stride), [(pad, pad), (pad, pad)],
        dimension_numbers=("NCHW", "OIHW", "NCHW"), precision=hp)
    y = jnp.maximum(y + jnp.asarray(raw["b1"])[None, :, None, None], 0.0)
    y = lax.reduce_window(y, -jnp.inf, lax.max, (1, 1, 2, 2), (1, 1, 2, 2), "VALID")
    y = lax.conv_general_dilated(
        y, jnp.asarray(raw["w2"]), (1, 1), [(0, 0), (0, 0)],
        dimension_numbers=("NCHW", "OIHW", "NCHW"), precision=hp)
    y = jnp.maximum(y + jnp.asarray(raw["b2"])[None, :, None, None], 0.0)
    y = lax.reduce_window(y, -jnp.inf, lax.max, (1, 1, 2, 2), (1, 1, 2, 2), "VALID")
    flat = y.reshape(y.shape[0], -1)
    h = jnp.maximum(jnp.dot(flat, jnp.asarray(raw["fw1"]).T, precision=hp)
                    + jnp.asarray(raw["fb1"]), 0.0)
    h = jnp.maximum(jnp.dot(h, jnp.asarray(raw["fw2"]).T, precision=hp)
                    + jnp.asarray(raw["fb2"]), 0.0)
    return (jnp.dot(h, jnp.asarray(raw["fw3"]).T, precision=hp)
            + jnp.asarray(raw["fb3"]))


if __name__ == "__main__":
    batch, channel, num_classes, res = 16, 3, 10, 32

    key = jax.random.PRNGKey(0)
    k_x, k_p = jax.random.split(key)
    x = jax.random.normal(k_x, (batch, channel, res, res), dtype=jnp.float32)

    raw = init_raw_params(k_p, channel, num_classes)
    consts, dims = pack_params(raw, channel, res, spatial=res)

    out = lenet_forward(x, consts, dims=dims, channel=channel, res=res, b_tile=8)
    out = jax.block_until_ready(out)
    assert out.shape == (batch, num_classes), out.shape

    # Sanity-check the fused bf16 kernel against the f32 XLA replica.
    ref = jax.block_until_ready(lenet_reference(x, raw, channel, res))
    np.testing.assert_allclose(np.asarray(out), np.asarray(ref),
                               rtol=5e-2, atol=5e-2)
    print("KERNEL_OK")
</pallas_src>

<mosaic_0001>
module attributes {stable_mosaic.version = 11 : i64} {
  func.func @kernel(%arg0: i32, %arg1: memref<8x32x96xbf16, #tpu.memory_space<vmem>>, %arg2: memref<480x168xbf16, #tpu.memory_space<vmem>>, %arg3: memref<1x168xf32, #tpu.memory_space<vmem>>, %arg4: memref<168x168xbf16, #tpu.memory_space<vmem>>, %arg5: memref<28x28xbf16, #tpu.memory_space<vmem>>, %arg6: memref<420x160xbf16, #tpu.memory_space<vmem>>, %arg7: memref<1x160xf32, #tpu.memory_space<vmem>>, %arg8: memref<160x160xbf16, #tpu.memory_space<vmem>>, %arg9: memref<10x10xbf16, #tpu.memory_space<vmem>>, %arg10: memref<400x120xbf16, #tpu.memory_space<vmem>>, %arg11: memref<1x120xf32, #tpu.memory_space<vmem>>, %arg12: memref<120x84xbf16, #tpu.memory_space<vmem>>, %arg13: memref<1x84xf32, #tpu.memory_space<vmem>>, %arg14: memref<84x128xbf16, #tpu.memory_space<vmem>>, %arg15: memref<1x128xf32, #tpu.memory_space<vmem>>, %arg16: memref<8x128xf32, #tpu.memory_space<vmem>>) attributes {dimension_semantics = [#tpu.dimension_semantics<parallel>], iteration_bounds = array<i64: 2>, scalar_prefetch = 0 : i64, scratch_operands = 0 : i64, tpu.core_type = #tpu.core_type<tc>, window_params = [{transform_indices = @transform_0, window_bounds = array<i64: 8, 32, 96>}, {pipeline_mode = #tpu.pipeline_mode<synchronous>, transform_indices = @transform_1, window_bounds = array<i64: 480, 168>}, {pipeline_mode = #tpu.pipeline_mode<synchronous>, transform_indices = @transform_2, window_bounds = array<i64: 1, 168>}, {pipeline_mode = #tpu.pipeline_mode<synchronous>, transform_indices = @transform_3, window_bounds = array<i64: 168, 168>}, {pipeline_mode = #tpu.pipeline_mode<synchronous>, transform_indices = @transform_4, window_bounds = array<i64: 28, 28>}, {pipeline_mode = #tpu.pipeline_mode<synchronous>, transform_indices = @transform_5, window_bounds = array<i64: 420, 160>}, {pipeline_mode = #tpu.pipeline_mode<synchronous>, transform_indices = @transform_6, window_bounds = array<i64: 1, 160>}, {pipeline_mode = #tpu.pipeline_mode<synchronous>, transform_indices = @transform_7, window_bounds = array<i64: 160, 160>}, {pipeline_mode = #tpu.pipeline_mode<synchronous>, transform_indices = @transform_8, window_bounds = array<i64: 10, 10>}, {pipeline_mode = #tpu.pipeline_mode<synchronous>, transform_indices = @transform_9, window_bounds = array<i64: 400, 120>}, {pipeline_mode = #tpu.pipeline_mode<synchronous>, transform_indices = @transform_10, window_bounds = array<i64: 1, 120>}, {pipeline_mode = #tpu.pipeline_mode<synchronous>, transform_indices = @transform_11, window_bounds = array<i64: 120, 84>}, {pipeline_mode = #tpu.pipeline_mode<synchronous>, transform_indices = @transform_12, window_bounds = array<i64: 1, 84>}, {pipeline_mode = #tpu.pipeline_mode<synchronous>, transform_indices = @transform_13, window_bounds = array<i64: 84, 128>}, {pipeline_mode = #tpu.pipeline_mode<synchronous>, transform_indices = @transform_14, window_bounds = array<i64: 1, 128>}, {transform_indices = @transform_15, window_bounds = array<i64: 8, 128>}]} {
    %c0 = arith.constant 0 : index
    %c0_0 = arith.constant 0 : index
    %c0_1 = arith.constant 0 : index
    %0 = vector.load %arg1[%c0, %c0_0, %c0_1] : memref<8x32x96xbf16, #tpu.memory_space<vmem>>, vector<1x32x96xbf16>
    %1 = vector.shape_cast %0 : vector<1x32x96xbf16> to vector<32x96xbf16>
    %2 = vector.extract_strided_slice %1 {offsets = [0, 0], sizes = [28, 96], strides = [1, 1]} : vector<32x96xbf16> to vector<28x96xbf16>
    %3 = vector.extract_strided_slice %1 {offsets = [1, 0], sizes = [28, 96], strides = [1, 1]} : vector<32x96xbf16> to vector<28x96xbf16>
    %4 = vector.extract_strided_slice %1 {offsets = [2, 0], sizes = [28, 96], strides = [1, 1]} : vector<32x96xbf16> to vector<28x96xbf16>
    %5 = vector.extract_strided_slice %1 {offsets = [3, 0], sizes = [28, 96], strides = [1, 1]} : vector<32x96xbf16> to vector<28x96xbf16>
    %6 = vector.extract_strided_slice %1 {offsets = [4, 0], sizes = [28, 96], strides = [1, 1]} : vector<32x96xbf16> to vector<28x96xbf16>
    %7 = tpu.concatenate %2, %3, %4, %5, %6 in 1 : vector<28x96xbf16>, vector<28x96xbf16>, vector<28x96xbf16>, vector<28x96xbf16>, vector<28x96xbf16> -> vector<28x480xbf16>
    %c1 = arith.constant 1 : index
    %c0_2 = arith.constant 0 : index
    %c0_3 = arith.constant 0 : index
    %8 = vector.load %arg1[%c1, %c0_2, %c0_3] : memref<8x32x96xbf16, #tpu.memory_space<vmem>>, vector<1x32x96xbf16>
    %9 = vector.shape_cast %8 : vector<1x32x96xbf16> to vector<32x96xbf16>
    %10 = vector.extract_strided_slice %9 {offsets = [0, 0], sizes = [28, 96], strides = [1, 1]} : vector<32x96xbf16> to vector<28x96xbf16>
    %11 = vector.extract_strided_slice %9 {offsets = [1, 0], sizes = [28, 96], strides = [1, 1]} : vector<32x96xbf16> to vector<28x96xbf16>
    %12 = vector.extract_strided_slice %9 {offsets = [2, 0], sizes = [28, 96], strides = [1, 1]} : vector<32x96xbf16> to vector<28x96xbf16>
    %13 = vector.extract_strided_slice %9 {offsets = [3, 0], sizes = [28, 96], strides = [1, 1]} : vector<32x96xbf16> to vector<28x96xbf16>
    %14 = vector.extract_strided_slice %9 {offsets = [4, 0], sizes = [28, 96], strides = [1, 1]} : vector<32x96xbf16> to vector<28x96xbf16>
    %15 = tpu.concatenate %10, %11, %12, %13, %14 in 1 : vector<28x96xbf16>, vector<28x96xbf16>, vector<28x96xbf16>, vector<28x96xbf16>, vector<28x96xbf16> -> vector<28x480xbf16>
    %c2 = arith.constant 2 : index
    %c0_4 = arith.constant 0 : index
    %c0_5 = arith.constant 0 : index
    %16 = vector.load %arg1[%c2, %c0_4, %c0_5] : memref<8x32x96xbf16, #tpu.memory_space<vmem>>, vector<1x32x96xbf16>
    %17 = vector.shape_cast %16 : vector<1x32x96xbf16> to vector<32x96xbf16>
    %18 = vector.extract_strided_slice %17 {offsets = [0, 0], sizes = [28, 96], strides = [1, 1]} : vector<32x96xbf16> to vector<28x96xbf16>
    %19 = vector.extract_strided_slice %17 {offsets = [1, 0], sizes = [28, 96], strides = [1, 1]} : vector<32x96xbf16> to vector<28x96xbf16>
    %20 = vector.extract_strided_slice %17 {offsets = [2, 0], sizes = [28, 96], strides = [1, 1]} : vector<32x96xbf16> to vector<28x96xbf16>
    %21 = vector.extract_strided_slice %17 {offsets = [3, 0], sizes = [28, 96], strides = [1, 1]} : vector<32x96xbf16> to vector<28x96xbf16>
    %22 = vector.extract_strided_slice %17 {offsets = [4, 0], sizes = [28, 96], strides = [1, 1]} : vector<32x96xbf16> to vector<28x96xbf16>
    %23 = tpu.concatenate %18, %19, %20, %21, %22 in 1 : vector<28x96xbf16>, vector<28x96xbf16>, vector<28x96xbf16>, vector<28x96xbf16>, vector<28x96xbf16> -> vector<28x480xbf16>
    %c3 = arith.constant 3 : index
    %c0_6 = arith.constant 0 : index
    %c0_7 = arith.constant 0 : index
    %24 = vector.load %arg1[%c3, %c0_6, %c0_7] : memref<8x32x96xbf16, #tpu.memory_space<vmem>>, vector<1x32x96xbf16>
    %25 = vector.shape_cast %24 : vector<1x32x96xbf16> to vector<32x96xbf16>
    %26 = vector.extract_strided_slice %25 {offsets = [0, 0], sizes = [28, 96], strides = [1, 1]} : vector<32x96xbf16> to vector<28x96xbf16>
    %27 = vector.extract_strided_slice %25 {offsets = [1, 0], sizes = [28, 96], strides = [1, 1]} : vector<32x96xbf16> to vector<28x96xbf16>
    %28 = vector.extract_strided_slice %25 {offsets = [2, 0], sizes = [28, 96], strides = [1, 1]} : vector<32x96xbf16> to vector<28x96xbf16>
    %29 = vector.extract_strided_slice %25 {offsets = [3, 0], sizes = [28, 96], strides = [1, 1]} : vector<32x96xbf16> to vector<28x96xbf16>
    %30 = vector.extract_strided_slice %25 {offsets = [4, 0], sizes = [28, 96], strides = [1, 1]} : vector<32x96xbf16> to vector<28x96xbf16>
    %31 = tpu.concatenate %26, %27, %28, %29, %30 in 1 : vector<28x96xbf16>, vector<28x96xbf16>, vector<28x96xbf16>, vector<28x96xbf16>, vector<28x96xbf16> -> vector<28x480xbf16>
    %c4 = arith.constant 4 : index
    %c0_8 = arith.constant 0 : index
    %c0_9 = arith.constant 0 : index
    %32 = vector.load %arg1[%c4, %c0_8, %c0_9] : memref<8x32x96xbf16, #tpu.memory_space<vmem>>, vector<1x32x96xbf16>
    %33 = vector.shape_cast %32 : vector<1x32x96xbf16> to vector<32x96xbf16>
    %34 = vector.extract_strided_slice %33 {offsets = [0, 0], sizes = [28, 96], strides = [1, 1]} : vector<32x96xbf16> to vector<28x96xbf16>
    %35 = vector.extract_strided_slice %33 {offsets = [1, 0], sizes = [28, 96], strides = [1, 1]} : vector<32x96xbf16> to vector<28x96xbf16>
    %36 = vector.extract_strided_slice %33 {offsets = [2, 0], sizes = [28, 96], strides = [1, 1]} : vector<32x96xbf16> to vector<28x96xbf16>
    %37 = vector.extract_strided_slice %33 {offsets = [3, 0], sizes = [28, 96], strides = [1, 1]} : vector<32x96xbf16> to vector<28x96xbf16>
    %38 = vector.extract_strided_slice %33 {offsets = [4, 0], sizes = [28, 96], strides = [1, 1]} : vector<32x96xbf16> to vector<28x96xbf16>
    %39 = tpu.concatenate %34, %35, %36, %37, %38 in 1 : vector<28x96xbf16>, vector<28x96xbf16>, vector<28x96xbf16>, vector<28x96xbf16>, vector<28x96xbf16> -> vector<28x480xbf16>
    %c5 = arith.constant 5 : index
    %c0_10 = arith.constant 0 : index
    %c0_11 = arith.constant 0 : index
    %40 = vector.load %arg1[%c5, %c0_10, %c0_11] : memref<8x32x96xbf16, #tpu.memory_space<vmem>>, vector<1x32x96xbf16>
    %41 = vector.shape_cast %40 : vector<1x32x96xbf16> to vector<32x96xbf16>
    %42 = vector.extract_strided_slice %41 {offsets = [0, 0], sizes = [28, 96], strides = [1, 1]} : vector<32x96xbf16> to vector<28x96xbf16>
    %43 = vector.extract_strided_slice %41 {offsets = [1, 0], sizes = [28, 96], strides = [1, 1]} : vector<32x96xbf16> to vector<28x96xbf16>
    %44 = vector.extract_strided_slice %41 {offsets = [2, 0], sizes = [28, 96], strides = [1, 1]} : vector<32x96xbf16> to vector<28x96xbf16>
    %45 = vector.extract_strided_slice %41 {offsets = [3, 0], sizes = [28, 96], strides = [1, 1]} : vector<32x96xbf16> to vector<28x96xbf16>
    %46 = vector.extract_strided_slice %41 {offsets = [4, 0], sizes = [28, 96], strides = [1, 1]} : vector<32x96xbf16> to vector<28x96xbf16>
    %47 = tpu.concatenate %42, %43, %44, %45, %46 in 1 : vector<28x96xbf16>, vector<28x96xbf16>, vector<28x96xbf16>, vector<28x96xbf16>, vector<28x96xbf16> -> vector<28x480xbf16>
    %c6 = arith.constant 6 : index
    %c0_12 = arith.constant 0 : index
    %c0_13 = arith.constant 0 : index
    %48 = vector.load %arg1[%c6, %c0_12, %c0_13] : memref<8x32x96xbf16, #tpu.memory_space<vmem>>, vector<1x32x96xbf16>
    %49 = vector.shape_cast %48 : vector<1x32x96xbf16> to vector<32x96xbf16>
    %50 = vector.extract_strided_slice %49 {offsets = [0, 0], sizes = [28, 96], strides = [1, 1]} : vector<32x96xbf16> to vector<28x96xbf16>
    %51 = vector.extract_strided_slice %49 {offsets = [1, 0], sizes = [28, 96], strides = [1, 1]} : vector<32x96xbf16> to vector<28x96xbf16>
    %52 = vector.extract_strided_slice %49 {offsets = [2, 0], sizes = [28, 96], strides = [1, 1]} : vector<32x96xbf16> to vector<28x96xbf16>
    %53 = vector.extract_strided_slice %49 {offsets = [3, 0], sizes = [28, 96], strides = [1, 1]} : vector<32x96xbf16> to vector<28x96xbf16>
    %54 = vector.extract_strided_slice %49 {offsets = [4, 0], sizes = [28, 96], strides = [1, 1]} : vector<32x96xbf16> to vector<28x96xbf16>
    %55 = tpu.concatenate %50, %51, %52, %53, %54 in 1 : vector<28x96xbf16>, vector<28x96xbf16>, vector<28x96xbf16>, vector<28x96xbf16>, vector<28x96xbf16> -> vector<28x480xbf16>
    %c7 = arith.constant 7 : index
    %c0_14 = arith.constant 0 : index
    %c0_15 = arith.constant 0 : index
    %56 = vector.load %arg1[%c7, %c0_14, %c0_15] : memref<8x32x96xbf16, #tpu.memory_space<vmem>>, vector<1x32x96xbf16>
    %57 = vector.shape_cast %56 : vector<1x32x96xbf16> to vector<32x96xbf16>
    %58 = vector.extract_strided_slice %57 {offsets = [0, 0], sizes = [28, 96], strides = [1, 1]} : vector<32x96xbf16> to vector<28x96xbf16>
    %59 = vector.extract_strided_slice %57 {offsets = [1, 0], sizes = [28, 96], strides = [1, 1]} : vector<32x96xbf16> to vector<28x96xbf16>
    %60 = vector.extract_strided_slice %57 {offsets = [2, 0], sizes = [28, 96], strides = [1, 1]} : vector<32x96xbf16> to vector<28x96xbf16>
    %61 = vector.extract_strided_slice %57 {offsets = [3, 0], sizes = [28, 96], strides = [1, 1]} : vector<32x96xbf16> to vector<28x96xbf16>
    %62 = vector.extract_strided_slice %57 {offsets = [4, 0], sizes = [28, 96], strides = [1, 1]} : vector<32x96xbf16> to vector<28x96xbf16>
    %63 = tpu.concatenate %58, %59, %60, %61, %62 in 1 : vector<28x96xbf16>, vector<28x96xbf16>, vector<28x96xbf16>, vector<28x96xbf16>, vector<28x96xbf16> -> vector<28x480xbf16>
    %64 = tpu.concatenate %7, %15, %23, %31, %39, %47, %55, %63 in 0 : vector<28x480xbf16>, vector<28x480xbf16>, vector<28x480xbf16>, vector<28x480xbf16>, vector<28x480xbf16>, vector<28x480xbf16>, vector<28x480xbf16>, vector<28x480xbf16> -> vector<224x480xbf16>
    %c0_16 = arith.constant 0 : index
    %c0_17 = arith.constant 0 : index
    %65 = vector.load %arg2[%c0_16, %c0_17] : memref<480x168xbf16, #tpu.memory_space<vmem>>, vector<480x168xbf16>
    %cst = arith.constant dense<0.000000e+00> : vector<224x168xf32>
    %66 = tpu.matmul %64, %65, %cst {dimension_numbers = #tpu.dot_dimension_numbers<[1], [0], [0], [1], [0, 0, 1, 1], [], []>} : vector<224x480xbf16>, vector<480x168xbf16>, vector<224x168xf32> -> vector<224x168xf32>
    %c0_18 = arith.constant 0 : index
    %c0_19 = arith.constant 0 : index
    %67 = vector.load %arg3[%c0_18, %c0_19] : memref<1x168xf32, #tpu.memory_space<vmem>>, vector<1x168xf32>
    %68 = vector.broadcast %67 : vector<1x168xf32> to vector<224x168xf32>
    %69 = arith.addf %66, %68 : vector<224x168xf32>
    %cst_20 = arith.constant 0.000000e+00 : f32
    %70 = vector.broadcast %cst_20 : f32 to vector<224x168xf32>
    %71 = arith.maximumf %69, %70 : vector<224x168xf32>
    %72 = arith.truncf %71 : vector<224x168xf32> to vector<224x168xbf16>
    %c0_21 = arith.constant 0 : index
    %c0_22 = arith.constant 0 : index
    %73 = vector.load %arg4[%c0_21, %c0_22] : memref<168x168xbf16, #tpu.memory_space<vmem>>, vector<168x168xbf16>
    %cst_23 = arith.constant dense<0.000000e+00> : vector<224x168xf32>
    %74 = tpu.matmul %72, %73, %cst_23 {dimension_numbers = #tpu.dot_dimension_numbers<[1], [0], [0], [1], [0, 0, 1, 1], [], []>} : vector<224x168xbf16>, vector<168x168xbf16>, vector<224x168xf32> -> vector<224x168xf32>
    %75 = vector.extract_strided_slice %74 {offsets = [0, 0], sizes = [224, 84], strides = [1, 1]} : vector<224x168xf32> to vector<224x84xf32>
    %76 = vector.extract_strided_slice %74 {offsets = [0, 84], sizes = [224, 84], strides = [1, 1]} : vector<224x168xf32> to vector<224x84xf32>
    %77 = arith.maximumf %75, %76 : vector<224x84xf32>
    %78 = arith.truncf %77 : vector<224x84xf32> to vector<224x84xbf16>
    %c0_24 = arith.constant 0 : index
    %c0_25 = arith.constant 0 : index
    %79 = vector.load %arg5[%c0_24, %c0_25] : memref<28x28xbf16, #tpu.memory_space<vmem>>, vector<28x28xbf16>
    %80 = vector.extract_strided_slice %78 {offsets = [0, 0], sizes = [28, 84], strides = [1, 1]} : vector<224x84xbf16> to vector<28x84xbf16>
    %cst_26 = arith.constant dense<0.000000e+00> : vector<28x84xf32>
    %81 = tpu.matmul %79, %80, %cst_26 {dimension_numbers = #tpu.dot_dimension_numbers<[1], [0], [0], [1], [0, 0, 1, 1], [], []>} : vector<28x28xbf16>, vector<28x84xbf16>, vector<28x84xf32> -> vector<28x84xf32>
    %82 = vector.extract_strided_slice %81 {offsets = [0, 0], sizes = [14, 84], strides = [1, 1]} : vector<28x84xf32> to vector<14x84xf32>
    %83 = vector.extract_strided_slice %81 {offsets = [14, 0], sizes = [14, 84], strides = [1, 1]} : vector<28x84xf32> to vector<14x84xf32>
    %84 = arith.maximumf %82, %83 : vector<14x84xf32>
    %85 = arith.truncf %84 : vector<14x84xf32> to vector<14x84xbf16>
    %86 = vector.extract_strided_slice %85 {offsets = [0, 0], sizes = [10, 84], strides = [1, 1]} : vector<14x84xbf16> to vector<10x84xbf16>
    %87 = vector.extract_strided_slice %85 {offsets = [1, 0], sizes = [10, 84], strides = [1, 1]} : vector<14x84xbf16> to vector<10x84xbf16>
    %88 = vector.extract_strided_slice %85 {offsets = [2, 0], sizes = [10, 84], strides = [1, 1]} : vector<14x84xbf16> to vector<10x84xbf16>
    %89 = vector.extract_strided_slice %85 {offsets = [3, 0], sizes = [10, 84], strides = [1, 1]} : vector<14x84xbf16> to vector<10x84xbf16>
    %90 = vector.extract_strided_slice %85 {offsets = [4, 0], sizes = [10, 84], strides = [1, 1]} : vector<14x84xbf16> to vector<10x84xbf16>
    %91 = tpu.concatenate %86, %87, %88, %89, %90 in 1 : vector<10x84xbf16>, vector<10x84xbf16>, vector<10x84xbf16>, vector<10x84xbf16>, vector<10x84xbf16> -> vector<10x420xbf16>
    %c0_27 = arith.constant 0 : index
    %c0_28 = arith.constant 0 : index
    %92 = vector.load %arg5[%c0_27, %c0_28] : memref<28x28xbf16, #tpu.memory_space<vmem>>, vector<28x28xbf16>
    %93 = vector.extract_strided_slice %78 {offsets = [28, 0], sizes = [28, 84], strides = [1, 1]} : vector<224x84xbf16> to vector<28x84xbf16>
    %cst_29 = arith.constant dense<0.000000e+00> : vector<28x84xf32>
    %94 = tpu.matmul %92, %93, %cst_29 {dimension_numbers = #tpu.dot_dimension_numbers<[1], [0], [0], [1], [0, 0, 1, 1], [], []>} : vector<28x28xbf16>, vector<28x84xbf16>, vector<28x84xf32> -> vector<28x84xf32>
    %95 = vector.extract_strided_slice %94 {offsets = [0, 0], sizes = [14, 84], strides = [1, 1]} : vector<28x84xf32> to vector<14x84xf32>
    %96 = vector.extract_strided_slice %94 {offsets = [14, 0], sizes = [14, 84], strides = [1, 1]} : vector<28x84xf32> to vector<14x84xf32>
    %97 = arith.maximumf %95, %96 : vector<14x84xf32>
    %98 = arith.truncf %97 : vector<14x84xf32> to vector<14x84xbf16>
    %99 = vector.extract_strided_slice %98 {offsets = [0, 0], sizes = [10, 84], strides = [1, 1]} : vector<14x84xbf16> to vector<10x84xbf16>
    %100 = vector.extract_strided_slice %98 {offsets = [1, 0], sizes = [10, 84], strides = [1, 1]} : vector<14x84xbf16> to vector<10x84xbf16>
    %101 = vector.extract_strided_slice %98 {offsets = [2, 0], sizes = [10, 84], strides = [1, 1]} : vector<14x84xbf16> to vector<10x84xbf16>
    %102 = vector.extract_strided_slice %98 {offsets = [3, 0], sizes = [10, 84], strides = [1, 1]} : vector<14x84xbf16> to vector<10x84xbf16>
    %103 = vector.extract_strided_slice %98 {offsets = [4, 0], sizes = [10, 84], strides = [1, 1]} : vector<14x84xbf16> to vector<10x84xbf16>
    %104 = tpu.concatenate %99, %100, %101, %102, %103 in 1 : vector<10x84xbf16>, vector<10x84xbf16>, vector<10x84xbf16>, vector<10x84xbf16>, vector<10x84xbf16> -> vector<10x420xbf16>
    %c0_30 = arith.constant 0 : index
    %c0_31 = arith.constant 0 : index
    %105 = vector.load %arg5[%c0_30, %c0_31] : memref<28x28xbf16, #tpu.memory_space<vmem>>, vector<28x28xbf16>
    %106 = vector.extract_strided_slice %78 {offsets = [56, 0], sizes = [28, 84], strides = [1, 1]} : vector<224x84xbf16> to vector<28x84xbf16>
    %cst_32 = arith.constant dense<0.000000e+00> : vector<28x84xf32>
    %107 = tpu.matmul %105, %106, %cst_32 {dimension_numbers = #tpu.dot_dimension_numbers<[1], [0], [0], [1], [0, 0, 1, 1], [], []>} : vector<28x28xbf16>, vector<28x84xbf16>, vector<28x84xf32> -> vector<28x84xf32>
    %108 = vector.extract_strided_slice %107 {offsets = [0, 0], sizes = [14, 84], strides = [1, 1]} : vector<28x84xf32> to vector<14x84xf32>
    %109 = vector.extract_strided_slice %107 {offsets = [14, 0], sizes = [14, 84], strides = [1, 1]} : vector<28x84xf32> to vector<14x84xf32>
    %110 = arith.maximumf %108, %109 : vector<14x84xf32>
    %111 = arith.truncf %110 : vector<14x84xf32> to vector<14x84xbf16>
    %112 = vector.extract_strided_slice %111 {offsets = [0, 0], sizes = [10, 84], strides = [1, 1]} : vector<14x84xbf16> to vector<10x84xbf16>
    %113 = vector.extract_strided_slice %111 {offsets = [1, 0], sizes = [10, 84], strides = [1, 1]} : vector<14x84xbf16> to vector<10x84xbf16>
    %114 = vector.extract_strided_slice %111 {offsets = [2, 0], sizes = [10, 84], strides = [1, 1]} : vector<14x84xbf16> to vector<10x84xbf16>
    %115 = vector.extract_strided_slice %111 {offsets = [3, 0], sizes = [10, 84], strides = [1, 1]} : vector<14x84xbf16> to vector<10x84xbf16>
    %116 = vector.extract_strided_slice %111 {offsets = [4, 0], sizes = [10, 84], strides = [1, 1]} : vector<14x84xbf16> to vector<10x84xbf16>
    %117 = tpu.concatenate %112, %113, %114, %115, %116 in 1 : vector<10x84xbf16>, vector<10x84xbf16>, vector<10x84xbf16>, vector<10x84xbf16>, vector<10x84xbf16> -> vector<10x420xbf16>
    %c0_33 = arith.constant 0 : index
    %c0_34 = arith.constant 0 : index
    %118 = vector.load %arg5[%c0_33, %c0_34] : memref<28x28xbf16, #tpu.memory_space<vmem>>, vector<28x28xbf16>
    %119 = vector.extract_strided_slice %78 {offsets = [84, 0], sizes = [28, 84], strides = [1, 1]} : vector<224x84xbf16> to vector<28x84xbf16>
    %cst_35 = arith.constant dense<0.000000e+00> : vector<28x84xf32>
    %120 = tpu.matmul %118, %119, %cst_35 {dimension_numbers = #tpu.dot_dimension_numbers<[1], [0], [0], [1], [0, 0, 1, 1], [], []>} : vector<28x28xbf16>, vector<28x84xbf16>, vector<28x84xf32> -> vector<28x84xf32>
    %121 = vector.extract_strided_slice %120 {offsets = [0, 0], sizes = [14, 84], strides = [1, 1]} : vector<28x84xf32> to vector<14x84xf32>
    %122 = vector.extract_strided_slice %120 {offsets = [14, 0], sizes = [14, 84], strides = [1, 1]} : vector<28x84xf32> to vector<14x84xf32>
    %123 = arith.maximumf %121, %122 : vector<14x84xf32>
    %124 = arith.truncf %123 : vector<14x84xf32> to vector<14x84xbf16>
    %125 = vector.extract_strided_slice %124 {offsets = [0, 0], sizes = [10, 84], strides = [1, 1]} : vector<14x84xbf16> to vector<10x84xbf16>
    %126 = vector.extract_strided_slice %124 {offsets = [1, 0], sizes = [10, 84], strides = [1, 1]} : vector<14x84xbf16> to vector<10x84xbf16>
    %127 = vector.extract_strided_slice %124 {offsets = [2, 0], sizes = [10, 84], strides = [1, 1]} : vector<14x84xbf16> to vector<10x84xbf16>
    %128 = vector.extract_strided_slice %124 {offsets = [3, 0], sizes = [10, 84], strides = [1, 1]} : vector<14x84xbf16> to vector<10x84xbf16>
    %129 = vector.extract_strided_slice %124 {offsets = [4, 0], sizes = [10, 84], strides = [1, 1]} : vector<14x84xbf16> to vector<10x84xbf16>
    %130 = tpu.concatenate %125, %126, %127, %128, %129 in 1 : vector<10x84xbf16>, vector<10x84xbf16>, vector<10x84xbf16>, vector<10x84xbf16>, vector<10x84xbf16> -> vector<10x420xbf16>
    %c0_36 = arith.constant 0 : index
    %c0_37 = arith.constant 0 : index
    %131 = vector.load %arg5[%c0_36, %c0_37] : memref<28x28xbf16, #tpu.memory_space<vmem>>, vector<28x28xbf16>
    %132 = vector.extract_strided_slice %78 {offsets = [112, 0], sizes = [28, 84], strides = [1, 1]} : vector<224x84xbf16> to vector<28x84xbf16>
    %cst_38 = arith.constant dense<0.000000e+00> : vector<28x84xf32>
    %133 = tpu.matmul %131, %132, %cst_38 {dimension_numbers = #tpu.dot_dimension_numbers<[1], [0], [0], [1], [0, 0, 1, 1], [], []>} : vector<28x28xbf16>, vector<28x84xbf16>, vector<28x84xf32> -> vector<28x84xf32>
    %134 = vector.extract_strided_slice %133 {offsets = [0, 0], sizes = [14, 84], strides = [1, 1]} : vector<28x84xf32> to vector<14x84xf32>
    %135 = vector.extract_strided_slice %133 {offsets = [14, 0], sizes = [14, 84], strides = [1, 1]} : vector<28x84xf32> to vector<14x84xf32>
    %136 = arith.maximumf %134, %135 : vector<14x84xf32>
    %137 = arith.truncf %136 : vector<14x84xf32> to vector<14x84xbf16>
    %138 = vector.extract_strided_slice %137 {offsets = [0, 0], sizes = [10, 84], strides = [1, 1]} : vector<14x84xbf16> to vector<10x84xbf16>
    %139 = vector.extract_strided_slice %137 {offsets = [1, 0], sizes = [10, 84], strides = [1, 1]} : vector<14x84xbf16> to vector<10x84xbf16>
    %140 = vector.extract_strided_slice %137 {offsets = [2, 0], sizes = [10, 84], strides = [1, 1]} : vector<14x84xbf16> to vector<10x84xbf16>
    %141 = vector.extract_strided_slice %137 {offsets = [3, 0], sizes = [10, 84], strides = [1, 1]} : vector<14x84xbf16> to vector<10x84xbf16>
    %142 = vector.extract_strided_slice %137 {offsets = [4, 0], sizes = [10, 84], strides = [1, 1]} : vector<14x84xbf16> to vector<10x84xbf16>
    %143 = tpu.concatenate %138, %139, %140, %141, %142 in 1 : vector<10x84xbf16>, vector<10x84xbf16>, vector<10x84xbf16>, vector<10x84xbf16>, vector<10x84xbf16> -> vector<10x420xbf16>
    %c0_39 = arith.constant 0 : index
    %c0_40 = arith.constant 0 : index
    %144 = vector.load %arg5[%c0_39, %c0_40] : memref<28x28xbf16, #tpu.memory_space<vmem>>, vector<28x28xbf16>
    %145 = vector.extract_strided_slice %78 {offsets = [140, 0], sizes = [28, 84], strides = [1, 1]} : vector<224x84xbf16> to vector<28x84xbf16>
    %cst_41 = arith.constant dense<0.000000e+00> : vector<28x84xf32>
    %146 = tpu.matmul %144, %145, %cst_41 {dimension_numbers = #tpu.dot_dimension_numbers<[1], [0], [0], [1], [0, 0, 1, 1], [], []>} : vector<28x28xbf16>, vector<28x84xbf16>, vector<28x84xf32> -> vector<28x84xf32>
    %147 = vector.extract_strided_slice %146 {offsets = [0, 0], sizes = [14, 84], strides = [1, 1]} : vector<28x84xf32> to vector<14x84xf32>
    %148 = vector.extract_strided_slice %146 {offsets = [14, 0], sizes = [14, 84], strides = [1, 1]} : vector<28x84xf32> to vector<14x84xf32>
    %149 = arith.maximumf %147, %148 : vector<14x84xf32>
    %150 = arith.truncf %149 : vector<14x84xf32> to vector<14x84xbf16>
    %151 = vector.extract_strided_slice %150 {offsets = [0, 0], sizes = [10, 84], strides = [1, 1]} : vector<14x84xbf16> to vector<10x84xbf16>
    %152 = vector.extract_strided_slice %150 {offsets = [1, 0], sizes = [10, 84], strides = [1, 1]} : vector<14x84xbf16> to vector<10x84xbf16>
    %153 = vector.extract_strided_slice %150 {offsets = [2, 0], sizes = [10, 84], strides = [1, 1]} : vector<14x84xbf16> to vector<10x84xbf16>
    %154 = vector.extract_strided_slice %150 {offsets = [3, 0], sizes = [10, 84], strides = [1, 1]} : vector<14x84xbf16> to vector<10x84xbf16>
    %155 = vector.extract_strided_slice %150 {offsets = [4, 0], sizes = [10, 84], strides = [1, 1]} : vector<14x84xbf16> to vector<10x84xbf16>
    %156 = tpu.concatenate %151, %152, %153, %154, %155 in 1 : vector<10x84xbf16>, vector<10x84xbf16>, vector<10x84xbf16>, vector<10x84xbf16>, vector<10x84xbf16> -> vector<10x420xbf16>
    %c0_42 = arith.constant 0 : index
    %c0_43 = arith.constant 0 : index
    %157 = vector.load %arg5[%c0_42, %c0_43] : memref<28x28xbf16, #tpu.memory_space<vmem>>, vector<28x28xbf16>
    %158 = vector.extract_strided_slice %78 {offsets = [168, 0], sizes = [28, 84], strides = [1, 1]} : vector<224x84xbf16> to vector<28x84xbf16>
    %cst_44 = arith.constant dense<0.000000e+00> : vector<28x84xf32>
    %159 = tpu.matmul %157, %158, %cst_44 {dimension_numbers = #tpu.dot_dimension_numbers<[1], [0], [0], [1], [0, 0, 1, 1], [], []>} : vector<28x28xbf16>, vector<28x84xbf16>, vector<28x84xf32> -> vector<28x84xf32>
    %160 = vector.extract_strided_slice %159 {offsets = [0, 0], sizes = [14, 84], strides = [1, 1]} : vector<28x84xf32> to vector<14x84xf32>
    %161 = vector.extract_strided_slice %159 {offsets = [14, 0], sizes = [14, 84], strides = [1, 1]} : vector<28x84xf32> to vector<14x84xf32>
    %162 = arith.maximumf %160, %161 : vector<14x84xf32>
    %163 = arith.truncf %162 : vector<14x84xf32> to vector<14x84xbf16>
    %164 = vector.extract_strided_slice %163 {offsets = [0, 0], sizes = [10, 84], strides = [1, 1]} : vector<14x84xbf16> to vector<10x84xbf16>
    %165 = vector.extract_strided_slice %163 {offsets = [1, 0], sizes = [10, 84], strides = [1, 1]} : vector<14x84xbf16> to vector<10x84xbf16>
    %166 = vector.extract_strided_slice %163 {offsets = [2, 0], sizes = [10, 84], strides = [1, 1]} : vector<14x84xbf16> to vector<10x84xbf16>
    %167 = vector.extract_strided_slice %163 {offsets = [3, 0], sizes = [10, 84], strides = [1, 1]} : vector<14x84xbf16> to vector<10x84xbf16>
    %168 = vector.extract_strided_slice %163 {offsets = [4, 0], sizes = [10, 84], strides = [1, 1]} : vector<14x84xbf16> to vector<10x84xbf16>
    %169 = tpu.concatenate %164, %165, %166, %167, %168 in 1 : vector<10x84xbf16>, vector<10x84xbf16>, vector<10x84xbf16>, vector<10x84xbf16>, vector<10x84xbf16> -> vector<10x420xbf16>
    %c0_45 = arith.constant 0 : index
    %c0_46 = arith.constant 0 : index
    %170 = vector.load %arg5[%c0_45, %c0_46] : memref<28x28xbf16, #tpu.memory_space<vmem>>, vector<28x28xbf16>
    %171 = vector.extract_strided_slice %78 {offsets = [196, 0], sizes = [28, 84], strides = [1, 1]} : vector<224x84xbf16> to vector<28x84xbf16>
    %cst_47 = arith.constant dense<0.000000e+00> : vector<28x84xf32>
    %172 = tpu.matmul %170, %171, %cst_47 {dimension_numbers = #tpu.dot_dimension_numbers<[1], [0], [0], [1], [0, 0, 1, 1], [], []>} : vector<28x28xbf16>, vector<28x84xbf16>, vector<28x84xf32> -> vector<28x84xf32>
    %173 = vector.extract_strided_slice %172 {offsets = [0, 0], sizes = [14, 84], strides = [1, 1]} : vector<28x84xf32> to vector<14x84xf32>
    %174 = vector.extract_strided_slice %172 {offsets = [14, 0], sizes = [14, 84], strides = [1, 1]} : vector<28x84xf32> to vector<14x84xf32>
    %175 = arith.maximumf %173, %174 : vector<14x84xf32>
    %176 = arith.truncf %175 : vector<14x84xf32> to vector<14x84xbf16>
    %177 = vector.extract_strided_slice %176 {offsets = [0, 0], sizes = [10, 84], strides = [1, 1]} : vector<14x84xbf16> to vector<10x84xbf16>
    %178 = vector.extract_strided_slice %176 {offsets = [1, 0], sizes = [10, 84], strides = [1, 1]} : vector<14x84xbf16> to vector<10x84xbf16>
    %179 = vector.extract_strided_slice %176 {offsets = [2, 0], sizes = [10, 84], strides = [1, 1]} : vector<14x84xbf16> to vector<10x84xbf16>
    %180 = vector.extract_strided_slice %176 {offsets = [3, 0], sizes = [10, 84], strides = [1, 1]} : vector<14x84xbf16> to vector<10x84xbf16>
    %181 = vector.extract_strided_slice %176 {offsets = [4, 0], sizes = [10, 84], strides = [1, 1]} : vector<14x84xbf16> to vector<10x84xbf16>
    %182 = tpu.concatenate %177, %178, %179, %180, %181 in 1 : vector<10x84xbf16>, vector<10x84xbf16>, vector<10x84xbf16>, vector<10x84xbf16>, vector<10x84xbf16> -> vector<10x420xbf16>
    %183 = tpu.concatenate %91, %104, %117, %130, %143, %156, %169, %182 in 0 : vector<10x420xbf16>, vector<10x420xbf16>, vector<10x420xbf16>, vector<10x420xbf16>, vector<10x420xbf16>, vector<10x420xbf16>, vector<10x420xbf16>, vector<10x420xbf16> -> vector<80x420xbf16>
    %c0_48 = arith.constant 0 : index
    %c0_49 = arith.constant 0 : index
    %184 = vector.load %arg6[%c0_48, %c0_49] : memref<420x160xbf16, #tpu.memory_space<vmem>>, vector<420x160xbf16>
    %cst_50 = arith.constant dense<0.000000e+00> : vector<80x160xf32>
    %185 = tpu.matmul %183, %184, %cst_50 {dimension_numbers = #tpu.dot_dimension_numbers<[1], [0], [0], [1], [0, 0, 1, 1], [], []>} : vector<80x420xbf16>, vector<420x160xbf16>, vector<80x160xf32> -> vector<80x160xf32>
    %c0_51 = arith.constant 0 : index
    %c0_52 = arith.constant 0 : index
    %186 = vector.load %arg7[%c0_51, %c0_52] : memref<1x160xf32, #tpu.memory_space<vmem>>, vector<1x160xf32>
    %187 = vector.broadcast %186 : vector<1x160xf32> to vector<80x160xf32>
    %188 = arith.addf %185, %187 : vector<80x160xf32>
    %cst_53 = arith.constant 0.000000e+00 : f32
    %189 = vector.broadcast %cst_53 : f32 to vector<80x160xf32>
    %190 = arith.maximumf %188, %189 : vector<80x160xf32>
    %191 = arith.truncf %190 : vector<80x160xf32> to vector<80x160xbf16>
    %c0_54 = arith.constant 0 : index
    %c0_55 = arith.constant 0 : index
    %192 = vector.load %arg8[%c0_54, %c0_55] : memref<160x160xbf16, #tpu.memory_space<vmem>>, vector<160x160xbf16>
    %cst_56 = arith.constant dense<0.000000e+00> : vector<80x160xf32>
    %193 = tpu.matmul %191, %192, %cst_56 {dimension_numbers = #tpu.dot_dimension_numbers<[1], [0], [0], [1], [0, 0, 1, 1], [], []>} : vector<80x160xbf16>, vector<160x160xbf16>, vector<80x160xf32> -> vector<80x160xf32>
    %194 = vector.extract_strided_slice %193 {offsets = [0, 0], sizes = [80, 80], strides = [1, 1]} : vector<80x160xf32> to vector<80x80xf32>
    %195 = vector.extract_strided_slice %193 {offsets = [0, 80], sizes = [80, 80], strides = [1, 1]} : vector<80x160xf32> to vector<80x80xf32>
    %196 = arith.maximumf %194, %195 : vector<80x80xf32>
    %197 = arith.truncf %196 : vector<80x80xf32> to vector<80x80xbf16>
    %c0_57 = arith.constant 0 : index
    %c0_58 = arith.constant 0 : index
    %198 = vector.load %arg9[%c0_57, %c0_58] : memref<10x10xbf16, #tpu.memory_space<vmem>>, vector<10x10xbf16>
    %199 = vector.extract_strided_slice %197 {offsets = [0, 0], sizes = [10, 80], strides = [1, 1]} : vector<80x80xbf16> to vector<10x80xbf16>
    %cst_59 = arith.constant dense<0.000000e+00> : vector<10x80xf32>
    %200 = tpu.matmul %198, %199, %cst_59 {dimension_numbers = #tpu.dot_dimension_numbers<[1], [0], [0], [1], [0, 0, 1, 1], [], []>} : vector<10x10xbf16>, vector<10x80xbf16>, vector<10x80xf32> -> vector<10x80xf32>
    %201 = vector.extract_strided_slice %200 {offsets = [0, 0], sizes = [5, 80], strides = [1, 1]} : vector<10x80xf32> to vector<5x80xf32>
    %202 = vector.extract_strided_slice %200 {offsets = [5, 0], sizes = [5, 80], strides = [1, 1]} : vector<10x80xf32> to vector<5x80xf32>
    %203 = arith.maximumf %201, %202 : vector<5x80xf32>
    %204 = arith.truncf %203 : vector<5x80xf32> to vector<5x80xbf16>
    %205 = vector.extract_strided_slice %204 {offsets = [0, 0], sizes = [1, 80], strides = [1, 1]} : vector<5x80xbf16> to vector<1x80xbf16>
    %206 = vector.extract_strided_slice %204 {offsets = [1, 0], sizes = [1, 80], strides = [1, 1]} : vector<5x80xbf16> to vector<1x80xbf16>
    %207 = vector.extract_strided_slice %204 {offsets = [2, 0], sizes = [1, 80], strides = [1, 1]} : vector<5x80xbf16> to vector<1x80xbf16>
    %208 = vector.extract_strided_slice %204 {offsets = [3, 0], sizes = [1, 80], strides = [1, 1]} : vector<5x80xbf16> to vector<1x80xbf16>
    %209 = vector.extract_strided_slice %204 {offsets = [4, 0], sizes = [1, 80], strides = [1, 1]} : vector<5x80xbf16> to vector<1x80xbf16>
    %210 = tpu.concatenate %205, %206, %207, %208, %209 in 1 : vector<1x80xbf16>, vector<1x80xbf16>, vector<1x80xbf16>, vector<1x80xbf16>, vector<1x80xbf16> -> vector<1x400xbf16>
    %c0_60 = arith.constant 0 : index
    %c0_61 = arith.constant 0 : index
    %211 = vector.load %arg9[%c0_60, %c0_61] : memref<10x10xbf16, #tpu.memory_space<vmem>>, vector<10x10xbf16>
    %212 = vector.extract_strided_slice %197 {offsets = [10, 0], sizes = [10, 80], strides = [1, 1]} : vector<80x80xbf16> to vector<10x80xbf16>
    %cst_62 = arith.constant dense<0.000000e+00> : vector<10x80xf32>
    %213 = tpu.matmul %211, %212, %cst_62 {dimension_numbers = #tpu.dot_dimension_numbers<[1], [0], [0], [1], [0, 0, 1, 1], [], []>} : vector<10x10xbf16>, vector<10x80xbf16>, vector<10x80xf32> -> vector<10x80xf32>
    %214 = vector.extract_strided_slice %213 {offsets = [0, 0], sizes = [5, 80], strides = [1, 1]} : vector<10x80xf32> to vector<5x80xf32>
    %215 = vector.extract_strided_slice %213 {offsets = [5, 0], sizes = [5, 80], strides = [1, 1]} : vector<10x80xf32> to vector<5x80xf32>
    %216 = arith.maximumf %214, %215 : vector<5x80xf32>
    %217 = arith.truncf %216 : vector<5x80xf32> to vector<5x80xbf16>
    %218 = vector.extract_strided_slice %217 {offsets = [0, 0], sizes = [1, 80], strides = [1, 1]} : vector<5x80xbf16> to vector<1x80xbf16>
    %219 = vector.extract_strided_slice %217 {offsets = [1, 0], sizes = [1, 80], strides = [1, 1]} : vector<5x80xbf16> to vector<1x80xbf16>
    %220 = vector.extract_strided_slice %217 {offsets = [2, 0], sizes = [1, 80], strides = [1, 1]} : vector<5x80xbf16> to vector<1x80xbf16>
    %221 = vector.extract_strided_slice %217 {offsets = [3, 0], sizes = [1, 80], strides = [1, 1]} : vector<5x80xbf16> to vector<1x80xbf16>
    %222 = vector.extract_strided_slice %217 {offsets = [4, 0], sizes = [1, 80], strides = [1, 1]} : vector<5x80xbf16> to vector<1x80xbf16>
    %223 = tpu.concatenate %218, %219, %220, %221, %222 in 1 : vector<1x80xbf16>, vector<1x80xbf16>, vector<1x80xbf16>, vector<1x80xbf16>, vector<1x80xbf16> -> vector<1x400xbf16>
    %c0_63 = arith.constant 0 : index
    %c0_64 = arith.constant 0 : index
    %224 = vector.load %arg9[%c0_63, %c0_64] : memref<10x10xbf16, #tpu.memory_space<vmem>>, vector<10x10xbf16>
    %225 = vector.extract_strided_slice %197 {offsets = [20, 0], sizes = [10, 80], strides = [1, 1]} : vector<80x80xbf16> to vector<10x80xbf16>
    %cst_65 = arith.constant dense<0.000000e+00> : vector<10x80xf32>
    %226 = tpu.matmul %224, %225, %cst_65 {dimension_numbers = #tpu.dot_dimension_numbers<[1], [0], [0], [1], [0, 0, 1, 1], [], []>} : vector<10x10xbf16>, vector<10x80xbf16>, vector<10x80xf32> -> vector<10x80xf32>
    %227 = vector.extract_strided_slice %226 {offsets = [0, 0], sizes = [5, 80], strides = [1, 1]} : vector<10x80xf32> to vector<5x80xf32>
    %228 = vector.extract_strided_slice %226 {offsets = [5, 0], sizes = [5, 80], strides = [1, 1]} : vector<10x80xf32> to vector<5x80xf32>
    %229 = arith.maximumf %227, %228 : vector<5x80xf32>
    %230 = arith.truncf %229 : vector<5x80xf32> to vector<5x80xbf16>
    %231 = vector.extract_strided_slice %230 {offsets = [0, 0], sizes = [1, 80], strides = [1, 1]} : vector<5x80xbf16> to vector<1x80xbf16>
    %232 = vector.extract_strided_slice %230 {offsets = [1, 0], sizes = [1, 80], strides = [1, 1]} : vector<5x80xbf16> to vector<1x80xbf16>
    %233 = vector.extract_strided_slice %230 {offsets = [2, 0], sizes = [1, 80], strides = [1, 1]} : vector<5x80xbf16> to vector<1x80xbf16>
    %234 = vector.extract_strided_slice %230 {offsets = [3, 0], sizes = [1, 80], strides = [1, 1]} : vector<5x80xbf16> to vector<1x80xbf16>
    %235 = vector.extract_strided_slice %230 {offsets = [4, 0], sizes = [1, 80], strides = [1, 1]} : vector<5x80xbf16> to vector<1x80xbf16>
    %236 = tpu.concatenate %231, %232, %233, %234, %235 in 1 : vector<1x80xbf16>, vector<1x80xbf16>, vector<1x80xbf16>, vector<1x80xbf16>, vector<1x80xbf16> -> vector<1x400xbf16>
    %c0_66 = arith.constant 0 : index
    %c0_67 = arith.constant 0 : index
    %237 = vector.load %arg9[%c0_66, %c0_67] : memref<10x10xbf16, #tpu.memory_space<vmem>>, vector<10x10xbf16>
    %238 = vector.extract_strided_slice %197 {offsets = [30, 0], sizes = [10, 80], strides = [1, 1]} : vector<80x80xbf16> to vector<10x80xbf16>
    %cst_68 = arith.constant dense<0.000000e+00> : vector<10x80xf32>
    %239 = tpu.matmul %237, %238, %cst_68 {dimension_numbers = #tpu.dot_dimension_numbers<[1], [0], [0], [1], [0, 0, 1, 1], [], []>} : vector<10x10xbf16>, vector<10x80xbf16>, vector<10x80xf32> -> vector<10x80xf32>
    %240 = vector.extract_strided_slice %239 {offsets = [0, 0], sizes = [5, 80], strides = [1, 1]} : vector<10x80xf32> to vector<5x80xf32>
    %241 = vector.extract_strided_slice %239 {offsets = [5, 0], sizes = [5, 80], strides = [1, 1]} : vector<10x80xf32> to vector<5x80xf32>
    %242 = arith.maximumf %240, %241 : vector<5x80xf32>
    %243 = arith.truncf %242 : vector<5x80xf32> to vector<5x80xbf16>
    %244 = vector.extract_strided_slice %243 {offsets = [0, 0], sizes = [1, 80], strides = [1, 1]} : vector<5x80xbf16> to vector<1x80xbf16>
    %245 = vector.extract_strided_slice %243 {offsets = [1, 0], sizes = [1, 80], strides = [1, 1]} : vector<5x80xbf16> to vector<1x80xbf16>
    %246 = vector.extract_strided_slice %243 {offsets = [2, 0], sizes = [1, 80], strides = [1, 1]} : vector<5x80xbf16> to vector<1x80xbf16>
    %247 = vector.extract_strided_slice %243 {offsets = [3, 0], sizes = [1, 80], strides = [1, 1]} : vector<5x80xbf16> to vector<1x80xbf16>
    %248 = vector.extract_strided_slice %243 {offsets = [4, 0], sizes = [1, 80], strides = [1, 1]} : vector<5x80xbf16> to vector<1x80xbf16>
    %249 = tpu.concatenate %244, %245, %246, %247, %248 in 1 : vector<1x80xbf16>, vector<1x80xbf16>, vector<1x80xbf16>, vector<1x80xbf16>, vector<1x80xbf16> -> vector<1x400xbf16>
    %c0_69 = arith.constant 0 : index
    %c0_70 = arith.constant 0 : index
    %250 = vector.load %arg9[%c0_69, %c0_70] : memref<10x10xbf16, #tpu.memory_space<vmem>>, vector<10x10xbf16>
    %251 = vector.extract_strided_slice %197 {offsets = [40, 0], sizes = [10, 80], strides = [1, 1]} : vector<80x80xbf16> to vector<10x80xbf16>
    %cst_71 = arith.constant dense<0.000000e+00> : vector<10x80xf32>
    %252 = tpu.matmul %250, %251, %cst_71 {dimension_numbers = #tpu.dot_dimension_numbers<[1], [0], [0], [1], [0, 0, 1, 1], [], []>} : vector<10x10xbf16>, vector<10x80xbf16>, vector<10x80xf32> -> vector<10x80xf32>
    %253 = vector.extract_strided_slice %252 {offsets = [0, 0], sizes = [5, 80], strides = [1, 1]} : vector<10x80xf32> to vector<5x80xf32>
    %254 = vector.extract_strided_slice %252 {offsets = [5, 0], sizes = [5, 80], strides = [1, 1]} : vector<10x80xf32> to vector<5x80xf32>
    %255 = arith.maximumf %253, %254 : vector<5x80xf32>
    %256 = arith.truncf %255 : vector<5x80xf32> to vector<5x80xbf16>
    %257 = vector.extract_strided_slice %256 {offsets = [0, 0], sizes = [1, 80], strides = [1, 1]} : vector<5x80xbf16> to vector<1x80xbf16>
    %258 = vector.extract_strided_slice %256 {offsets = [1, 0], sizes = [1, 80], strides = [1, 1]} : vector<5x80xbf16> to vector<1x80xbf16>
    %259 = vector.extract_strided_slice %256 {offsets = [2, 0], sizes = [1, 80], strides = [1, 1]} : vector<5x80xbf16> to vector<1x80xbf16>
    %260 = vector.extract_strided_slice %256 {offsets = [3, 0], sizes = [1, 80], strides = [1, 1]} : vector<5x80xbf16> to vector<1x80xbf16>
    %261 = vector.extract_strided_slice %256 {offsets = [4, 0], sizes = [1, 80], strides = [1, 1]} : vector<5x80xbf16> to vector<1x80xbf16>
    %262 = tpu.concatenate %257, %258, %259, %260, %261 in 1 : vector<1x80xbf16>, vector<1x80xbf16>, vector<1x80xbf16>, vector<1x80xbf16>, vector<1x80xbf16> -> vector<1x400xbf16>
    %c0_72 = arith.constant 0 : index
    %c0_73 = arith.constant 0 : index
    %263 = vector.load %arg9[%c0_72, %c0_73] : memref<10x10xbf16, #tpu.memory_space<vmem>>, vector<10x10xbf16>
    %264 = vector.extract_strided_slice %197 {offsets = [50, 0], sizes = [10, 80], strides = [1, 1]} : vector<80x80xbf16> to vector<10x80xbf16>
    %cst_74 = arith.constant dense<0.000000e+00> : vector<10x80xf32>
    %265 = tpu.matmul %263, %264, %cst_74 {dimension_numbers = #tpu.dot_dimension_numbers<[1], [0], [0], [1], [0, 0, 1, 1], [], []>} : vector<10x10xbf16>, vector<10x80xbf16>, vector<10x80xf32> -> vector<10x80xf32>
    %266 = vector.extract_strided_slice %265 {offsets = [0, 0], sizes = [5, 80], strides = [1, 1]} : vector<10x80xf32> to vector<5x80xf32>
    %267 = vector.extract_strided_slice %265 {offsets = [5, 0], sizes = [5, 80], strides = [1, 1]} : vector<10x80xf32> to vector<5x80xf32>
    %268 = arith.maximumf %266, %267 : vector<5x80xf32>
    %269 = arith.truncf %268 : vector<5x80xf32> to vector<5x80xbf16>
    %270 = vector.extract_strided_slice %269 {offsets = [0, 0], sizes = [1, 80], strides = [1, 1]} : vector<5x80xbf16> to vector<1x80xbf16>
    %271 = vector.extract_strided_slice %269 {offsets = [1, 0], sizes = [1, 80], strides = [1, 1]} : vector<5x80xbf16> to vector<1x80xbf16>
    %272 = vector.extract_strided_slice %269 {offsets = [2, 0], sizes = [1, 80], strides = [1, 1]} : vector<5x80xbf16> to vector<1x80xbf16>
    %273 = vector.extract_strided_slice %269 {offsets = [3, 0], sizes = [1, 80], strides = [1, 1]} : vector<5x80xbf16> to vector<1x80xbf16>
    %274 = vector.extract_strided_slice %269 {offsets = [4, 0], sizes = [1, 80], strides = [1, 1]} : vector<5x80xbf16> to vector<1x80xbf16>
    %275 = tpu.concatenate %270, %271, %272, %273, %274 in 1 : vector<1x80xbf16>, vector<1x80xbf16>, vector<1x80xbf16>, vector<1x80xbf16>, vector<1x80xbf16> -> vector<1x400xbf16>
    %c0_75 = arith.constant 0 : index
    %c0_76 = arith.constant 0 : index
    %276 = vector.load %arg9[%c0_75, %c0_76] : memref<10x10xbf16, #tpu.memory_space<vmem>>, vector<10x10xbf16>
    %277 = vector.extract_strided_slice %197 {offsets = [60, 0], sizes = [10, 80], strides = [1, 1]} : vector<80x80xbf16> to vector<10x80xbf16>
    %cst_77 = arith.constant dense<0.000000e+00> : vector<10x80xf32>
    %278 = tpu.matmul %276, %277, %cst_77 {dimension_numbers = #tpu.dot_dimension_numbers<[1], [0], [0], [1], [0, 0, 1, 1], [], []>} : vector<10x10xbf16>, vector<10x80xbf16>, vector<10x80xf32> -> vector<10x80xf32>
    %279 = vector.extract_strided_slice %278 {offsets = [0, 0], sizes = [5, 80], strides = [1, 1]} : vector<10x80xf32> to vector<5x80xf32>
    %280 = vector.extract_strided_slice %278 {offsets = [5, 0], sizes = [5, 80], strides = [1, 1]} : vector<10x80xf32> to vector<5x80xf32>
    %281 = arith.maximumf %279, %280 : vector<5x80xf32>
    %282 = arith.truncf %281 : vector<5x80xf32> to vector<5x80xbf16>
    %283 = vector.extract_strided_slice %282 {offsets = [0, 0], sizes = [1, 80], strides = [1, 1]} : vector<5x80xbf16> to vector<1x80xbf16>
    %284 = vector.extract_strided_slice %282 {offsets = [1, 0], sizes = [1, 80], strides = [1, 1]} : vector<5x80xbf16> to vector<1x80xbf16>
    %285 = vector.extract_strided_slice %282 {offsets = [2, 0], sizes = [1, 80], strides = [1, 1]} : vector<5x80xbf16> to vector<1x80xbf16>
    %286 = vector.extract_strided_slice %282 {offsets = [3, 0], sizes = [1, 80], strides = [1, 1]} : vector<5x80xbf16> to vector<1x80xbf16>
    %287 = vector.extract_strided_slice %282 {offsets = [4, 0], sizes = [1, 80], strides = [1, 1]} : vector<5x80xbf16> to vector<1x80xbf16>
    %288 = tpu.concatenate %283, %284, %285, %286, %287 in 1 : vector<1x80xbf16>, vector<1x80xbf16>, vector<1x80xbf16>, vector<1x80xbf16>, vector<1x80xbf16> -> vector<1x400xbf16>
    %c0_78 = arith.constant 0 : index
    %c0_79 = arith.constant 0 : index
    %289 = vector.load %arg9[%c0_78, %c0_79] : memref<10x10xbf16, #tpu.memory_space<vmem>>, vector<10x10xbf16>
    %290 = vector.extract_strided_slice %197 {offsets = [70, 0], sizes = [10, 80], strides = [1, 1]} : vector<80x80xbf16> to vector<10x80xbf16>
    %cst_80 = arith.constant dense<0.000000e+00> : vector<10x80xf32>
    %291 = tpu.matmul %289, %290, %cst_80 {dimension_numbers = #tpu.dot_dimension_numbers<[1], [0], [0], [1], [0, 0, 1, 1], [], []>} : vector<10x10xbf16>, vector<10x80xbf16>, vector<10x80xf32> -> vector<10x80xf32>
    %292 = vector.extract_strided_slice %291 {offsets = [0, 0], sizes = [5, 80], strides = [1, 1]} : vector<10x80xf32> to vector<5x80xf32>
    %293 = vector.extract_strided_slice %291 {offsets = [5, 0], sizes = [5, 80], strides = [1, 1]} : vector<10x80xf32> to vector<5x80xf32>
    %294 = arith.maximumf %292, %293 : vector<5x80xf32>
    %295 = arith.truncf %294 : vector<5x80xf32> to vector<5x80xbf16>
    %296 = vector.extract_strided_slice %295 {offsets = [0, 0], sizes = [1, 80], strides = [1, 1]} : vector<5x80xbf16> to vector<1x80xbf16>
    %297 = vector.extract_strided_slice %295 {offsets = [1, 0], sizes = [1, 80], strides = [1, 1]} : vector<5x80xbf16> to vector<1x80xbf16>
    %298 = vector.extract_strided_slice %295 {offsets = [2, 0], sizes = [1, 80], strides = [1, 1]} : vector<5x80xbf16> to vector<1x80xbf16>
    %299 = vector.extract_strided_slice %295 {offsets = [3, 0], sizes = [1, 80], strides = [1, 1]} : vector<5x80xbf16> to vector<1x80xbf16>
    %300 = vector.extract_strided_slice %295 {offsets = [4, 0], sizes = [1, 80], strides = [1, 1]} : vector<5x80xbf16> to vector<1x80xbf16>
    %301 = tpu.concatenate %296, %297, %298, %299, %300 in 1 : vector<1x80xbf16>, vector<1x80xbf16>, vector<1x80xbf16>, vector<1x80xbf16>, vector<1x80xbf16> -> vector<1x400xbf16>
    %302 = tpu.concatenate %210, %223, %236, %249, %262, %275, %288, %301 in 0 : vector<1x400xbf16>, vector<1x400xbf16>, vector<1x400xbf16>, vector<1x400xbf16>, vector<1x400xbf16>, vector<1x400xbf16>, vector<1x400xbf16>, vector<1x400xbf16> -> vector<8x400xbf16>
    %c0_81 = arith.constant 0 : index
    %c0_82 = arith.constant 0 : index
    %303 = vector.load %arg10[%c0_81, %c0_82] : memref<400x120xbf16, #tpu.memory_space<vmem>>, vector<400x120xbf16>
    %cst_83 = arith.constant dense<0.000000e+00> : vector<8x120xf32>
    %304 = tpu.matmul %302, %303, %cst_83 {dimension_numbers = #tpu.dot_dimension_numbers<[1], [0], [0], [1], [0, 0, 1, 1], [], []>} : vector<8x400xbf16>, vector<400x120xbf16>, vector<8x120xf32> -> vector<8x120xf32>
    %c0_84 = arith.constant 0 : index
    %c0_85 = arith.constant 0 : index
    %305 = vector.load %arg11[%c0_84, %c0_85] : memref<1x120xf32, #tpu.memory_space<vmem>>, vector<1x120xf32>
    %306 = vector.broadcast %305 : vector<1x120xf32> to vector<8x120xf32>
    %307 = arith.addf %304, %306 : vector<8x120xf32>
    %cst_86 = arith.constant 0.000000e+00 : f32
    %308 = vector.broadcast %cst_86 : f32 to vector<8x120xf32>
    %309 = arith.maximumf %307, %308 : vector<8x120xf32>
    %310 = arith.truncf %309 : vector<8x120xf32> to vector<8x120xbf16>
    %c0_87 = arith.constant 0 : index
    %c0_88 = arith.constant 0 : index
    %311 = vector.load %arg12[%c0_87, %c0_88] : memref<120x84xbf16, #tpu.memory_space<vmem>>, vector<120x84xbf16>
    %cst_89 = arith.constant dense<0.000000e+00> : vector<8x84xf32>
    %312 = tpu.matmul %310, %311, %cst_89 {dimension_numbers = #tpu.dot_dimension_numbers<[1], [0], [0], [1], [0, 0, 1, 1], [], []>} : vector<8x120xbf16>, vector<120x84xbf16>, vector<8x84xf32> -> vector<8x84xf32>
    %c0_90 = arith.constant 0 : index
    %c0_91 = arith.constant 0 : index
    %313 = vector.load %arg13[%c0_90, %c0_91] : memref<1x84xf32, #tpu.memory_space<vmem>>, vector<1x84xf32>
    %314 = vector.broadcast %313 : vector<1x84xf32> to vector<8x84xf32>
    %315 = arith.addf %312, %314 : vector<8x84xf32>
    %cst_92 = arith.constant 0.000000e+00 : f32
    %316 = vector.broadcast %cst_92 : f32 to vector<8x84xf32>
    %317 = arith.maximumf %315, %316 : vector<8x84xf32>
    %318 = arith.truncf %317 : vector<8x84xf32> to vector<8x84xbf16>
    %c0_93 = arith.constant 0 : index
    %c0_94 = arith.constant 0 : index
    %319 = vector.load %arg14[%c0_93, %c0_94] : memref<84x128xbf16, #tpu.memory_space<vmem>>, vector<84x128xbf16>
    %cst_95 = arith.constant dense<0.000000e+00> : vector<8x128xf32>
    %320 = tpu.matmul %318, %319, %cst_95 {dimension_numbers = #tpu.dot_dimension_numbers<[1], [0], [0], [1], [0, 0, 1, 1], [], []>} : vector<8x84xbf16>, vector<84x128xbf16>, vector<8x128xf32> -> vector<8x128xf32>
    %c0_96 = arith.constant 0 : index
    %c0_97 = arith.constant 0 : index
    %321 = vector.load %arg15[%c0_96, %c0_97] : memref<1x128xf32, #tpu.memory_space<vmem>>, vector<1x128xf32>
    %322 = vector.broadcast %321 : vector<1x128xf32> to vector<8x128xf32>
    %323 = arith.addf %320, %322 : vector<8x128xf32>
    %c0_98 = arith.constant 0 : index
    %c0_99 = arith.constant 0 : index
    %324 = vector.load %arg16[%c0_98, %c0_99] : memref<8x128xf32, #tpu.memory_space<vmem>>, vector<8x128xf32>
    tpu.vector_store %arg16[%c0_98, %c0_99], %323 {strides = array<i32>} : memref<8x128xf32, #tpu.memory_space<vmem>>, vector<8x128xf32>,
    return
  }
  func.func @transform_0(%arg0: i32) -> (i32, i32, i32) {
    %c0_i32 = arith.constant 0 : i32
    %c0_i32_0 = arith.constant 0 : i32
    %c0_i32_1 = arith.constant 0 : i32
    return %arg0, %c0_i32, %c0_i32_0 : i32, i32, i32
  }
  func.func @transform_1(%arg0: i32) -> (i32, i32) {
    %c0_i32 = arith.constant 0 : i32
    %c0_i32_0 = arith.constant 0 : i32
    %c0_i32_1 = arith.constant 0 : i32
    return %c0_i32, %c0_i32_0 : i32, i32
  }
  func.func @transform_2(%arg0: i32) -> (i32, i32) {
    %c0_i32 = arith.constant 0 : i32
    %c0_i32_0 = arith.constant 0 : i32
    %c0_i32_1 = arith.constant 0 : i32
    return %c0_i32, %c0_i32_0 : i32, i32
  }
  func.func @transform_3(%arg0: i32) -> (i32, i32) {
    %c0_i32 = arith.constant 0 : i32
    %c0_i32_0 = arith.constant 0 : i32
    %c0_i32_1 = arith.constant 0 : i32
    return %c0_i32, %c0_i32_0 : i32, i32
  }
  func.func @transform_4(%arg0: i32) -> (i32, i32) {
    %c0_i32 = arith.constant 0 : i32
    %c0_i32_0 = arith.constant 0 : i32
    %c0_i32_1 = arith.constant 0 : i32
    return %c0_i32, %c0_i32_0 : i32, i32
  }
  func.func @transform_5(%arg0: i32) -> (i32, i32) {
    %c0_i32 = arith.constant 0 : i32
    %c0_i32_0 = arith.constant 0 : i32
    %c0_i32_1 = arith.constant 0 : i32
    return %c0_i32, %c0_i32_0 : i32, i32
  }
  func.func @transform_6(%arg0: i32) -> (i32, i32) {
    %c0_i32 = arith.constant 0 : i32
    %c0_i32_0 = arith.constant 0 : i32
    %c0_i32_1 = arith.constant 0 : i32
    return %c0_i32, %c0_i32_0 : i32, i32
  }
  func.func @transform_7(%arg0: i32) -> (i32, i32) {
    %c0_i32 = arith.constant 0 : i32
    %c0_i32_0 = arith.constant 0 : i32
    %c0_i32_1 = arith.constant 0 : i32
    return %c0_i32, %c0_i32_0 : i32, i32
  }
  func.func @transform_8(%arg0: i32) -> (i32, i32) {
    %c0_i32 = arith.constant 0 : i32
    %c0_i32_0 = arith.constant 0 : i32
    %c0_i32_1 = arith.constant 0 : i32
    return %c0_i32, %c0_i32_0 : i32, i32
  }
  func.func @transform_9(%arg0: i32) -> (i32, i32) {
    %c0_i32 = arith.constant 0 : i32
    %c0_i32_0 = arith.constant 0 : i32
    %c0_i32_1 = arith.constant 0 : i32
    return %c0_i32, %c0_i32_0 : i32, i32
  }
  func.func @transform_10(%arg0: i32) -> (i32, i32) {
    %c0_i32 = arith.constant 0 : i32
    %c0_i32_0 = arith.constant 0 : i32
    %c0_i32_1 = arith.constant 0 : i32
    return %c0_i32, %c0_i32_0 : i32, i32
  }
  func.func @transform_11(%arg0: i32) -> (i32, i32) {
    %c0_i32 = arith.constant 0 : i32
    %c0_i32_0 = arith.constant 0 : i32
    %c0_i32_1 = arith.constant 0 : i32
    return %c0_i32, %c0_i32_0 : i32, i32
  }
  func.func @transform_12(%arg0: i32) -> (i32, i32) {
    %c0_i32 = arith.constant 0 : i32
    %c0_i32_0 = arith.constant 0 : i32
    %c0_i32_1 = arith.constant 0 : i32
    return %c0_i32, %c0_i32_0 : i32, i32
  }
  func.func @transform_13(%arg0: i32) -> (i32, i32) {
    %c0_i32 = arith.constant 0 : i32
    %c0_i32_0 = arith.constant 0 : i32
    %c0_i32_1 = arith.constant 0 : i32
    return %c0_i32, %c0_i32_0 : i32, i32
  }
  func.func @transform_14(%arg0: i32) -> (i32, i32) {
    %c0_i32 = arith.constant 0 : i32
    %c0_i32_0 = arith.constant 0 : i32
    %c0_i32_1 = arith.constant 0 : i32
    return %c0_i32, %c0_i32_0 : i32, i32
  }
  func.func @transform_15(%arg0: i32) -> (i32, i32) {
    %c0_i32 = arith.constant 0 : i32
    %c0_i32_0 = arith.constant 0 : i32
    return %arg0, %c0_i32 : i32, i32
  }
}

</mosaic_0001>

<llo_original>
// kernel: lenet_forward.1
$region0: #{lenet_forward.1}
  #allocation0 [shape = 'u32[]', space=smem, size = 0x4, offset = 0x4, fixed_abs, tag = 'smem constant byte address 0x4 - core index']
  #allocation1 [shape = 'u32[144,128]{1,0:T(1,128)}', space=vmem, size = 0x12000, scoped, tag = 'internal scratch']
  %s0 = inlined_call_operand.vmem [shape: bf16[16,32,96], index: 0, kind: input, shape index: {}]
  %s1 = inlined_call_operand.vmem [shape: bf16[480,168], index: 1, kind: input, shape index: {}]
  %s2 = inlined_call_operand.vmem [shape: f32[1,168], index: 2, kind: input, shape index: {}]
  %s3 = inlined_call_operand.vmem [shape: bf16[168,168], index: 3, kind: input, shape index: {}]
  %s4 = inlined_call_operand.vmem [shape: bf16[28,28], index: 4, kind: input, shape index: {}]
  %s5 = inlined_call_operand.vmem [shape: bf16[420,160], index: 5, kind: input, shape index: {}]
  %s6 = inlined_call_operand.vmem [shape: f32[1,160], index: 6, kind: input, shape index: {}]
  %s7 = inlined_call_operand.vmem [shape: bf16[160,160], index: 7, kind: input, shape index: {}]
  %s8 = inlined_call_operand.vmem [shape: bf16[10,10], index: 8, kind: input, shape index: {}]
  %s9 = inlined_call_operand.vmem [shape: bf16[400,120], index: 9, kind: input, shape index: {}]
  %s10 = inlined_call_operand.vmem [shape: f32[1,120], index: 10, kind: input, shape index: {}]
  %s11 = inlined_call_operand.vmem [shape: bf16[120,84], index: 11, kind: input, shape index: {}]
  %s12 = inlined_call_operand.vmem [shape: f32[1,84], index: 12, kind: input, shape index: {}]
  %s13 = inlined_call_operand.vmem [shape: bf16[84,128], index: 13, kind: input, shape index: {}]
  %s14 = inlined_call_operand.vmem [shape: f32[1,128], index: 14, kind: input, shape index: {}]
  %s15 = inlined_call_operand.hbm [shape: f32[16,128], index: 15, kind: output, shape index: {}]
  %s16 = sld [smem:[#allocation0]]
  $region93: #{lenet_forward.1} parent=0
    _
  %s18 = ssub.s32 1, %s16
  %s19 = scalar_select 0, %s18, %s16
  $region1: #{lenet_forward.1} parent=0
    #allocation2 [shape = 'u8[8192]{0}', space=vmem, size = 0x2000, scoped, tag = 'output window, operand 0']
    #allocation3 [shape = 's32[2]{0}', space=sflag, size = 0x8, scoped, tag = 'scoped memory for lenet_forward.1']
    %20 = vsyncpa [#allocation3], 0
    %s21 = scalar_lea.sflag [#allocation3], 1
    %22 = vsyncpa %s21, 0
    loop: start=0, step=1, limit=4
    $region2: #{lenet_forward.1} parent=1 // loop_pre_header
      _
    $region3: #{lenet_forward.1} parent=1 // loop_header
      %s24 = sphi 0, %s28
      %p25 = scmp.ge.s32.totalorder %s24, 4
      %s34 = sphi 0, %s36
      %s37 = sphi 0, %s34
      %s38 = sphi 0, %s37
      %s54 = sphi 0, %s38
      %s58 = sphi 0, %s58
      %s60 = sphi 0, %s58
      %s61 = sphi 0, %s60
      %s75 = sphi 0, %s61
      %s79 = sphi 0, %s79
      %s81 = sphi 0, %s79
      %s82 = sphi 0, %s81
      %s96 = sphi 0, %s82
      %s100 = sphi 0, %s100
      %s102 = sphi 0, %s100
      %s103 = sphi 0, %s102
      %s117 = sphi 0, %s103
      %s121 = sphi 0, %s121
      %s123 = sphi 0, %s121
      %s124 = sphi 0, %s123
      %s138 = sphi 0, %s124
      %s142 = sphi 0, %s142
      %s144 = sphi 0, %s142
      %s145 = sphi 0, %s144
      %s159 = sphi 0, %s145
      %s163 = sphi 0, %s163
      %s165 = sphi 0, %s163
      %s166 = sphi 0, %s165
      %s180 = sphi 0, %s166
      %s184 = sphi 0, %s184
      %s186 = sphi 0, %s184
      %s187 = sphi 0, %s186
      %s201 = sphi 0, %s187
      %s205 = sphi 0, %s205
      %s207 = sphi 0, %s205
      %s208 = sphi 0, %s207
      %s222 = sphi 0, %s208
      %s226 = sphi 0, %s226
      %s228 = sphi 0, %s226
      %s229 = sphi 0, %s228
      %s243 = sphi 0, %s229
      %s247 = sphi 0, %s247
      %s249 = sphi 0, %s247
      %s250 = sphi 0, %s249
      %s264 = sphi 0, %s250
      %s268 = sphi 0, %s268
      %s270 = sphi 0, %s268
      %s271 = sphi 0, %s270
      %s285 = sphi 0, %s271
      %s289 = sphi 0, %s289
      %s291 = sphi 0, %s289
      %s292 = sphi 0, %s291
      %s306 = sphi 0, %s292
      %s310 = sphi 0, %s310
      %s312 = sphi 0, %s310
      %s313 = sphi 0, %s312
      %s327 = sphi 0, %s313
      %s331 = sphi 0, %s331
      %s333 = sphi 0, %s331
      %s334 = sphi 0, %s333
      %s348 = sphi 0, %s334
      %s354 = sphi 0, %s356
      %s357 = sphi 0, %s354
      %s358 = sphi 0, %s357
      %s374 = sphi 0, %s358
    $region4: #{lenet_forward.1} parent=1 // loop_header_branch
      %27 = sbr.rel (%p25) target = $region8
    $region5: #{lenet_forward.1} parent=1 // loop_body
      %s29 = ssub.s32 %s24, 1
      %s30 = ssub.s32 %s24, 2
      %s31 = sadd.s32 %s24, 1
      %s32 = ssub.s32 %s24, %s31
      %p33 = scmp.eq.s32.totalorder %s32, 0
      %s35 = sadd.s32 %s34, 1
      %s36 = scalar_select %p33, %s34, %s35
      %p39 = pneg %p33
      %p40 = scmp.eq.s32.totalorder %s24, 1
      %p41 = por %p39, %p40
      %p42 = scmp.ne.s32.totalorder %s34, %s37
      %p43 = scmp.eq.s32.totalorder %s24, 0
      %p44 = por %p42, %p43
      %p45 = scmp.ne.s32.totalorder %s34, %s37
      %p46 = scmp.eq.s32.totalorder %s29, 1
      %p47 = por %p45, %p46
      %p48 = scmp.ne.s32.totalorder %s37, %s38
      %p49 = scmp.eq.s32.totalorder %s29, 0
      %p50 = por %p48, %p49
      %p51 = scmp.ne.s32.totalorder %s37, %s38
      %p52 = scmp.eq.s32.totalorder %s30, 1
      %p53 = por %p51, %p52
      %p55 = scmp.ne.s32.totalorder %s38, %s54
      %p56 = scmp.eq.s32.totalorder %s30, 0
      %p57 = por %p55, %p56
      %s59 = sadd.s32 %s58, 1
      %p62 = scmp.eq.s32.totalorder %s24, 1
      %p63 = scmp.ne.s32.totalorder %s58, %s60
      %p64 = scmp.eq.s32.totalorder %s24, 0
      %p65 = por %p63, %p64
      %p66 = scmp.ne.s32.totalorder %s58, %s60
      %p67 = scmp.eq.s32.totalorder %s29, 1
      %p68 = por %p66, %p67
      %p69 = scmp.ne.s32.totalorder %s60, %s61
      %p70 = scmp.eq.s32.totalorder %s29, 0
      %p71 = por %p69, %p70
      %p72 = scmp.ne.s32.totalorder %s60, %s61
      %p73 = scmp.eq.s32.totalorder %s30, 1
      %p74 = por %p72, %p73
      %p76 = scmp.ne.s32.totalorder %s61, %s75
      %p77 = scmp.eq.s32.totalorder %s30, 0
      %p78 = por %p76, %p77
      %s80 = sadd.s32 %s79, 1
      %p83 = scmp.eq.s32.totalorder %s24, 1
      %p84 = scmp.ne.s32.totalorder %s79, %s81
      %p85 = scmp.eq.s32.totalorder %s24, 0
      %p86 = por %p84, %p85
      %p87 = scmp.ne.s32.totalorder %s79, %s81
      %p88 = scmp.eq.s32.totalorder %s29, 1
      %p89 = por %p87, %p88
      %p90 = scmp.ne.s32.totalorder %s81, %s82
      %p91 = scmp.eq.s32.totalorder %s29, 0
      %p92 = por %p90, %p91
      %p93 = scmp.ne.s32.totalorder %s81, %s82
      %p94 = scmp.eq.s32.totalorder %s30, 1
      %p95 = por %p93, %p94
      %p97 = scmp.ne.s32.totalorder %s82, %s96
      %p98 = scmp.eq.s32.totalorder %s30, 0
      %p99 = por %p97, %p98
      %s101 = sadd.s32 %s100, 1
      %p104 = scmp.eq.s32.totalorder %s24, 1
      %p105 = scmp.ne.s32.totalorder %s100, %s102
      %p106 = scmp.eq.s32.totalorder %s24, 0
      %p107 = por %p105, %p106
      %p108 = scmp.ne.s32.totalorder %s100, %s102
      %p109 = scmp.eq.s32.totalorder %s29, 1
      %p110 = por %p108, %p109
      %p111 = scmp.ne.s32.totalorder %s102, %s103
      %p112 = scmp.eq.s32.totalorder %s29, 0
      %p113 = por %p111, %p112
      %p114 = scmp.ne.s32.totalorder %s102, %s103
      %p115 = scmp.eq.s32.totalorder %s30, 1
      %p116 = por %p114, %p115
      %p118 = scmp.ne.s32.totalorder %s103, %s117
      %p119 = scmp.eq.s32.totalorder %s30, 0
      %p120 = por %p118, %p119
      %s122 = sadd.s32 %s121, 1
      %p125 = scmp.eq.s32.totalorder %s24, 1
      %p126 = scmp.ne.s32.totalorder %s121, %s123
      %p127 = scmp.eq.s32.totalorder %s24, 0
      %p128 = por %p126, %p127
      %p129 = scmp.ne.s32.totalorder %s121, %s123
      %p130 = scmp.eq.s32.totalorder %s29, 1
      %p131 = por %p129, %p130
      %p132 = scmp.ne.s32.totalorder %s123, %s124
      %p133 = scmp.eq.s32.totalorder %s29, 0
      %p134 = por %p132, %p133
      %p135 = scmp.ne.s32.totalorder %s123, %s124
      %p136 = scmp.eq.s32.totalorder %s30, 1
      %p137 = por %p135, %p136
      %p139 = scmp.ne.s32.totalorder %s124, %s138
      %p140 = scmp.eq.s32.totalorder %s30, 0
      %p141 = por %p139, %p140
      %s143 = sadd.s32 %s142, 1
      %p146 = scmp.eq.s32.totalorder %s24, 1
      %p147 = scmp.ne.s32.totalorder %s142, %s144
      %p148 = scmp.eq.s32.totalorder %s24, 0
      %p149 = por %p147, %p148
      %p150 = scmp.ne.s32.totalorder %s142, %s144
      %p151 = scmp.eq.s32.totalorder %s29, 1
      %p152 = por %p150, %p151
      %p153 = scmp.ne.s32.totalorder %s144, %s145
      %p154 = scmp.eq.s32.totalorder %s29, 0
      %p155 = por %p153, %p154
      %p156 = scmp.ne.s32.totalorder %s144, %s145
      %p157 = scmp.eq.s32.totalorder %s30, 1
      %p158 = por %p156, %p157
      %p160 = scmp.ne.s32.totalorder %s145, %s159
      %p161 = scmp.eq.s32.totalorder %s30, 0
      %p162 = por %p160, %p161
      %s164 = sadd.s32 %s163, 1
      %p167 = scmp.eq.s32.totalorder %s24, 1
      %p168 = scmp.ne.s32.totalorder %s163, %s165
      %p169 = scmp.eq.s32.totalorder %s24, 0
      %p170 = por %p168, %p169
      %p171 = scmp.ne.s32.totalorder %s163, %s165
      %p172 = scmp.eq.s32.totalorder %s29, 1
      %p173 = por %p171, %p172
      %p174 = scmp.ne.s32.totalorder %s165, %s166
      %p175 = scmp.eq.s32.totalorder %s29, 0
      %p176 = por %p174, %p175
      %p177 = scmp.ne.s32.totalorder %s165, %s166
      %p178 = scmp.eq.s32.totalorder %s30, 1
      %p179 = por %p177, %p178
      %p181 = scmp.ne.s32.totalorder %s166, %s180
      %p182 = scmp.eq.s32.totalorder %s30, 0
      %p183 = por %p181, %p182
      %s185 = sadd.s32 %s184, 1
      %p188 = scmp.eq.s32.totalorder %s24, 1
      %p189 = scmp.ne.s32.totalorder %s184, %s186
      %p190 = scmp.eq.s32.totalorder %s24, 0
      %p191 = por %p189, %p190
      %p192 = scmp.ne.s32.totalorder %s184, %s186
      %p193 = scmp.eq.s32.totalorder %s29, 1
      %p194 = por %p192, %p193
      %p195 = scmp.ne.s32.totalorder %s186, %s187
      %p196 = scmp.eq.s32.totalorder %s29, 0
      %p197 = por %p195, %p196
      %p198 = scmp.ne.s32.totalorder %s186, %s187
      %p199 = scmp.eq.s32.totalorder %s30, 1
      %p200 = por %p198, %p199
      %p202 = scmp.ne.s32.totalorder %s187, %s201
      %p203 = scmp.eq.s32.totalorder %s30, 0
      %p204 = por %p202, %p203
      %s206 = sadd.s32 %s205, 1
      %p209 = scmp.eq.s32.totalorder %s24, 1
      %p210 = scmp.ne.s32.totalorder %s205, %s207
      %p211 = scmp.eq.s32.totalorder %s24, 0
      %p212 = por %p210, %p211
      %p213 = scmp.ne.s32.totalorder %s205, %s207
      %p214 = scmp.eq.s32.totalorder %s29, 1
      %p215 = por %p213, %p214
      %p216 = scmp.ne.s32.totalorder %s207, %s208
      %p217 = scmp.eq.s32.totalorder %s29, 0
      %p218 = por %p216, %p217
      %p219 = scmp.ne.s32.totalorder %s207, %s208
      %p220 = scmp.eq.s32.totalorder %s30, 1
      %p221 = por %p219, %p220
      %p223 = scmp.ne.s32.totalorder %s208, %s222
      %p224 = scmp.eq.s32.totalorder %s30, 0
      %p225 = por %p223, %p224
      %s227 = sadd.s32 %s226, 1
      %p230 = scmp.eq.s32.totalorder %s24, 1
      %p231 = scmp.ne.s32.totalorder %s226, %s228
      %p232 = scmp.eq.s32.totalorder %s24, 0
      %p233 = por %p231, %p232
      %p234 = scmp.ne.s32.totalorder %s226, %s228
      %p235 = scmp.eq.s32.totalorder %s29, 1
      %p236 = por %p234, %p235
      %p237 = scmp.ne.s32.totalorder %s228, %s229
      %p238 = scmp.eq.s32.totalorder %s29, 0
      %p239 = por %p237, %p238
      %p240 = scmp.ne.s32.totalorder %s228, %s229
      %p241 = scmp.eq.s32.totalorder %s30, 1
      %p242 = por %p240, %p241
      %p244 = scmp.ne.s32.totalorder %s229, %s243
      %p245 = scmp.eq.s32.totalorder %s30, 0
      %p246 = por %p244, %p245
      %s248 = sadd.s32 %s247, 1
      %p251 = scmp.eq.s32.totalorder %s24, 1
      %p252 = scmp.ne.s32.totalorder %s247, %s249
      %p253 = scmp.eq.s32.totalorder %s24, 0
      %p254 = por %p252, %p253
      %p255 = scmp.ne.s32.totalorder %s247, %s249
      %p256 = scmp.eq.s32.totalorder %s29, 1
      %p257 = por %p255, %p256
      %p258 = scmp.ne.s32.totalorder %s249, %s250
      %p259 = scmp.eq.s32.totalorder %s29, 0
      %p260 = por %p258, %p259
      %p261 = scmp.ne.s32.totalorder %s249, %s250
      %p262 = scmp.eq.s32.totalorder %s30, 1
      %p263 = por %p261, %p262
      %p265 = scmp.ne.s32.totalorder %s250, %s264
      %p266 = scmp.eq.s32.totalorder %s30, 0
      %p267 = por %p265, %p266
      %s269 = sadd.s32 %s268, 1
      %p272 = scmp.eq.s32.totalorder %s24, 1
      %p273 = scmp.ne.s32.totalorder %s268, %s270
      %p274 = scmp.eq.s32.totalorder %s24, 0
      %p275 = por %p273, %p274
      %p276 = scmp.ne.s32.totalorder %s268, %s270
      %p277 = scmp.eq.s32.totalorder %s29, 1
      %p278 = por %p276, %p277
      %p279 = scmp.ne.s32.totalorder %s270, %s271
      %p280 = scmp.eq.s32.totalorder %s29, 0
      %p281 = por %p279, %p280
      %p282 = scmp.ne.s32.totalorder %s270, %s271
      %p283 = scmp.eq.s32.totalorder %s30, 1
      %p284 = por %p282, %p283
      %p286 = scmp.ne.s32.totalorder %s271, %s285
      %p287 = scmp.eq.s32.totalorder %s30, 0
      %p288 = por %p286, %p287
      %s290 = sadd.s32 %s289, 1
      %p293 = scmp.eq.s32.totalorder %s24, 1
      %p294 = scmp.ne.s32.totalorder %s289, %s291
      %p295 = scmp.eq.s32.totalorder %s24, 0
      %p296 = por %p294, %p295
      %p297 = scmp.ne.s32.totalorder %s289, %s291
      %p298 = scmp.eq.s32.totalorder %s29, 1
      %p299 = por %p297, %p298
      %p300 = scmp.ne.s32.totalorder %s291, %s292
      %p301 = scmp.eq.s32.totalorder %s29, 0
      %p302 = por %p300, %p301
      %p303 = scmp.ne.s32.totalorder %s291, %s292
      %p304 = scmp.eq.s32.totalorder %s30, 1
      %p305 = por %p303, %p304
      %p307 = scmp.ne.s32.totalorder %s292, %s306
      %p308 = scmp.eq.s32.totalorder %s30, 0
      %p309 = por %p307, %p308
      %s311 = sadd.s32 %s310, 1
      %p314 = scmp.eq.s32.totalorder %s24, 1
      %p315 = scmp.ne.s32.totalorder %s310, %s312
      %p316 = scmp.eq.s32.totalorder %s24, 0
      %p317 = por %p315, %p316
      %p318 = scmp.ne.s32.totalorder %s310, %s312
      %p319 = scmp.eq.s32.totalorder %s29, 1
      %p320 = por %p318, %p319
      %p321 = scmp.ne.s32.totalorder %s312, %s313
      %p322 = scmp.eq.s32.totalorder %s29, 0
      %p323 = por %p321, %p322
      %p324 = scmp.ne.s32.totalorder %s312, %s313
      %p325 = scmp.eq.s32.totalorder %s30, 1
      %p326 = por %p324, %p325
      %p328 = scmp.ne.s32.totalorder %s313, %s327
      %p329 = scmp.eq.s32.totalorder %s30, 0
      %p330 = por %p328, %p329
      %s332 = sadd.s32 %s331, 1
      %p335 = scmp.eq.s32.totalorder %s24, 1
      %p336 = scmp.ne.s32.totalorder %s331, %s333
      %p337 = scmp.eq.s32.totalorder %s24, 0
      %p338 = por %p336, %p337
      %p339 = scmp.ne.s32.totalorder %s331, %s333
      %p340 = scmp.eq.s32.totalorder %s29, 1
      %p341 = por %p339, %p340
      %p342 = scmp.ne.s32.totalorder %s333, %s334
      %p343 = scmp.eq.s32.totalorder %s29, 0
      %p344 = por %p342, %p343
      %p345 = scmp.ne.s32.totalorder %s333, %s334
      %p346 = scmp.eq.s32.totalorder %s30, 1
      %p347 = por %p345, %p346
      %p349 = scmp.ne.s32.totalorder %s334, %s348
      %p350 = scmp.eq.s32.totalorder %s30, 0
      %p351 = por %p349, %p350
      %s352 = ssub.s32 %s24, %s31
      %p353 = scmp.eq.s32.totalorder %s352, 0
      %s355 = sadd.s32 %s354, 1
      %s356 = scalar_select %p353, %s354, %s355
      %p359 = pneg %p353
      %p360 = scmp.eq.s32.totalorder %s24, 1
      %p361 = por %p359, %p360
      %p362 = scmp.ne.s32.totalorder %s354, %s357
      %p363 = scmp.eq.s32.totalorder %s24, 0
      %p364 = por %p362, %p363
      %p365 = scmp.ne.s32.totalorder %s354, %s357
      %p366 = scmp.eq.s32.totalorder %s29, 1
      %p367 = por %p365, %p366
      %p368 = scmp.ne.s32.totalorder %s357, %s358
      %p369 = scmp.eq.s32.totalorder %s29, 0
      %p370 = por %p368, %p369
      %p371 = scmp.ne.s32.totalorder %s357, %s358
      %p372 = scmp.eq.s32.totalorder %s30, 1
      %p373 = por %p371, %p372
      %p375 = scmp.ne.s32.totalorder %s358, %s374
      %p376 = scmp.eq.s32.totalorder %s30, 0
      %p377 = por %p375, %p376
      %p378 = scmp.le.s32.totalorder 1, %s24
      %p379 = scmp.lt.s32.totalorder %s24, 3
      %p380 = pnand %p378, %p379
      %p381 = pneg %p380
      // Predicated region
      $region9: #{lenet_forward.1} parent=5 // pred_check
        _
      $region10: #{lenet_forward.1} parent=5 // pred_check_branch
        %383 = sbr.rel (%p380) target = $region12
      $region11: #{lenet_forward.1} parent=5 // pred_region
        %s384 = ssub.s32 %s24, 1
        // Predicated region
        $region13: #{lenet_forward.1} parent=11 // pred_check
          %p385 = pneg %p71
        $region14: #{lenet_forward.1} parent=11 // pred_check_branch
          %387 = sbr.rel (%p385) target = $region16
        $region15: #{lenet_forward.1} parent=11 // pred_region
          _
        $region16: #{lenet_forward.1} parent=11 // pred_fallthru
          _
        // Predicated region
        $region17: #{lenet_forward.1} parent=11 // pred_check
          %p388 = pneg %p92
        $region18: #{lenet_forward.1} parent=11 // pred_check_branch
          %390 = sbr.rel (%p388) target = $region20
        $region19: #{lenet_forward.1} parent=11 // pred_region
          _
        $region20: #{lenet_forward.1} parent=11 // pred_fallthru
          _
        // Predicated region
        $region21: #{lenet_forward.1} parent=11 // pred_check
          %p391 = pneg %p113
        $region22: #{lenet_forward.1} parent=11 // pred_check_branch
          %393 = sbr.rel (%p391) target = $region24
        $region23: #{lenet_forward.1} parent=11 // pred_region
          _
        $region24: #{lenet_forward.1} parent=11 // pred_fallthru
          _
        // Predicated region
        $region25: #{lenet_forward.1} parent=11 // pred_check
          %p394 = pneg %p134
        $region26: #{lenet_forward.1} parent=11 // pred_check_branch
          %396 = sbr.rel (%p394) target = $region28
        $region27: #{lenet_forward.1} parent=11 // pred_region
          _
        $region28: #{lenet_forward.1} parent=11 // pred_fallthru
          _
        // Predicated region
        $region29: #{lenet_forward.1} parent=11 // pred_check
          %p397 = pneg %p155
        $region30: #{lenet_forward.1} parent=11 // pred_check_branch
          %399 = sbr.rel (%p397) target = $region32
        $region31: #{lenet_forward.1} parent=11 // pred_region
          _
        $region32: #{lenet_forward.1} parent=11 // pred_fallthru
          _
        // Predicated region
        $region33: #{lenet_forward.1} parent=11 // pred_check
          %p400 = pneg %p176
        $region34: #{lenet_forward.1} parent=11 // pred_check_branch
          %402 = sbr.rel (%p400) target = $region36
        $region35: #{lenet_forward.1} parent=11 // pred_region
          _
        $region36: #{lenet_forward.1} parent=11 // pred_fallthru
          _
        // Predicated region
        $region37: #{lenet_forward.1} parent=11 // pred_check
          %p403 = pneg %p197
        $region38: #{lenet_forward.1} parent=11 // pred_check_branch
          %405 = sbr.rel (%p403) target = $region40
        $region39: #{lenet_forward.1} parent=11 // pred_region
          _
        $region40: #{lenet_forward.1} parent=11 // pred_fallthru
          _
        // Predicated region
        $region41: #{lenet_forward.1} parent=11 // pred_check
          %p406 = pneg %p218
        $region42: #{lenet_forward.1} parent=11 // pred_check_branch
          %408 = sbr.rel (%p406) target = $region44
        $region43: #{lenet_forward.1} parent=11 // pred_region
          _
        $region44: #{lenet_forward.1} parent=11 // pred_fallthru
          _
        // Predicated region
        $region45: #{lenet_forward.1} parent=11 // pred_check
          %p409 = pneg %p239
        $region46: #{lenet_forward.1} parent=11 // pred_check_branch
          %411 = sbr.rel (%p409) target = $region48
        $region47: #{lenet_forward.1} parent=11 // pred_region
          _
        $region48: #{lenet_forward.1} parent=11 // pred_fallthru
          _
        // Predicated region
        $region49: #{lenet_forward.1} parent=11 // pred_check
          %p412 = pneg %p260
        $region50: #{lenet_forward.1} parent=11 // pred_check_branch
          %414 = sbr.rel (%p412) target = $region52
        $region51: #{lenet_forward.1} parent=11 // pred_region
          _
        $region52: #{lenet_forward.1} parent=11 // pred_fallthru
          _
        // Predicated region
        $region53: #{lenet_forward.1} parent=11 // pred_check
          %p415 = pneg %p281
        $region54: #{lenet_forward.1} parent=11 // pred_check_branch
          %417 = sbr.rel (%p415) target = $region56
        $region55: #{lenet_forward.1} parent=11 // pred_region
          _
        $region56: #{lenet_forward.1} parent=11 // pred_fallthru
          _
        // Predicated region
        $region57: #{lenet_forward.1} parent=11 // pred_check
          %p418 = pneg %p302
        $region58: #{lenet_forward.1} parent=11 // pred_check_branch
          %420 = sbr.rel (%p418) target = $region60
        $region59: #{lenet_forward.1} parent=11 // pred_region
          _
        $region60: #{lenet_forward.1} parent=11 // pred_fallthru
          _
        // Predicated region
        $region61: #{lenet_forward.1} parent=11 // pred_check
          %p421 = pneg %p323
        $region62: #{lenet_forward.1} parent=11 // pred_check_branch
          %423 = sbr.rel (%p421) target = $region64
        $region63: #{lenet_forward.1} parent=11 // pred_region
          _
        $region64: #{lenet_forward.1} parent=11 // pred_fallthru
          _
        // Predicated region
        $region65: #{lenet_forward.1} parent=11 // pred_check
          %p424 = pneg %p344
        $region66: #{lenet_forward.1} parent=11 // pred_check_branch
          %426 = sbr.rel (%p424) target = $region68
        $region67: #{lenet_forward.1} parent=11 // pred_region
          _
        $region68: #{lenet_forward.1} parent=11 // pred_fallthru
          _
      $region12: #{lenet_forward.1} parent=5 // pred_fallthru
        _
      %p427 = scmp.lt.s32.totalorder %s24, 2
      // Predicated region
      $region69: #{lenet_forward.1} parent=5 // pred_check
        %p428 = pneg %p427
      $region70: #{lenet_forward.1} parent=5 // pred_check_branch
        %430 = sbr.rel (%p428) target = $region72
      $region71: #{lenet_forward.1} parent=5 // pred_region
        // Predicated region
        $region73: #{lenet_forward.1} parent=71 // pred_check
          %p431 = pneg %p44
        $region74: #{lenet_forward.1} parent=71 // pred_check_branch
          %433 = sbr.rel (%p431) target = $region76
        $region75: #{lenet_forward.1} parent=71 // pred_region
          %s434 = smul.u32 8, %s24
          %p435 = scmp.lt.s32.totalorder %s434, 15
          %s436 = scalar_select %p435, %s434, 15
          %s437 = smul.addr %s436, 4
          %s438 = smul.addr %s437, 4
          %s439 = scalar_lea.vmem %s0, %s438
          %s440 = smul.u32 8, %s24
        $region76: #{lenet_forward.1} parent=71 // pred_fallthru
          _
      $region72: #{lenet_forward.1} parent=5 // pred_fallthru
        _
      %p441 = scmp.le.s32.totalorder 1, %s24
      %p442 = scmp.lt.s32.totalorder %s24, 3
      %p443 = pnand %p441, %p442
      %p444 = pneg %p443
      // Predicated region
      $region77: #{lenet_forward.1} parent=5 // pred_check
        _
      $region78: #{lenet_forward.1} parent=5 // pred_check_branch
        %446 = sbr.rel (%p443) target = $region80
      $region79: #{lenet_forward.1} parent=5 // pred_region
        %s447 = ssub.s32 %s24, 1
        %s448 = smul.u32 8, %s29
        %p449 = scmp.lt.s32.totalorder %s448, 15
        %s450 = scalar_select %p449, %s448, 15
        %s451 = smul.addr %s450, 4
        %s452 = smul.addr %s451, 4
        %s453 = scalar_lea.vmem %s0, %s452
        %p454 = pneg %p50
        %p455 = pneg %p47
        %p456 = pneg %p71
        %p457 = pneg %p68
        %p458 = pneg %p92
        %p459 = pneg %p89
        %p460 = pneg %p113
        %p461 = pneg %p110
        %p462 = pneg %p134
        %p463 = pneg %p131
        %p464 = pneg %p155
        %p465 = pneg %p152
        %p466 = pneg %p176
        %p467 = pneg %p173
        %p468 = pneg %p197
        %p469 = pneg %p194
        %p470 = pneg %p218
        %p471 = pneg %p215
        %p472 = pneg %p239
        %p473 = pneg %p236
        %p474 = pneg %p260
        %p475 = pneg %p257
        %p476 = pneg %p281
        %p477 = pneg %p278
        %p478 = pneg %p302
        %p479 = pneg %p299
        %p480 = pneg %p323
        %p481 = pneg %p320
        %p482 = pneg %p344
        %p483 = pneg %p341
        %p484 = pneg %p370
        %p485 = pneg %p367
        %s486 = sand.u32 %s357, 1
        %s487 = scalar_lea.sflag [#allocation3], %s486
        %s488 = sand.u32 %s357, 1
        %s489 = smul.addr %s488, 8
        %s490 = scalar_lea.vmem [#allocation2], %s489
        %s491 = smul.u32 8, %s29
        %p492 = scmp.lt.s32.totalorder %s491, 15
        %s493 = scalar_select %p492, %s491, 15
        %s494 = smul.addr %s493, 4
        %s495 = smul.addr %s494, 4
        %s496 = scalar_lea.vmem %s0, %s495
        %s497 = smul.u32 8, %s29
        %v499 = vld [vmem:[%s496] sm:$0xf]
        %v500 = vld [vmem:[%s496 + $0x4] sm:$0xf]
        %v501 = vld [vmem:[%s496 + $0x8] sm:$0xf]
        %v502 = vld [vmem:[%s496 + $0xc] sm:$0xf]
        %v507 = vunpack.c.l.b16 %v499
        %v508 = vunpack.c.l.b16 %v500
        %v509 = vunpack.c.l.b16 %v501
        %v510 = vunpack.c.l.b16 %v502
        %v511 = vpack.c.b16 %v508, %v507
        %v512 = vpack.c.b16 %v510, %v509
        %vm513 = vsmask.f32 7424
        %v515 = vshrl.u32 %v511, 16
        %v517 = vshll.u32 %v511, 16
        %v519 = vrot.slane %v517, 1
        %v520 = vor.u32 %v515, %v519
        %v522 = vshll.u32 %v512, 16
        %v524 = vrot.slane %v522, 1
        %v525 = vsel %vm513, %v520, %v524
        %v526 = vshrl.u32 %v512, 16
        %v528 = vor.u32 %v526, %v524
        %529 = vrot.lane.b32.xlu0 %v525, 96
        %v530 = vpop.permute.xlu0 %529
        %531 = vrot.lane.b32.xlu0 %v528, 96
        %v532 = vpop.permute.xlu0 %531
        %vm533 = vcmask 1046528
        %v534 = vrot.slane %v511, 1
        %v535 = vrot.slane %v512, 1
        %v536 = vsel %vm533, %v534, %v535
        %537 = vrot.lane.b32.xlu0 %v536, 64
        %v538 = vpop.permute.xlu0 %537
        %539 = vrot.lane.b32.xlu0 %v535, 64
        %v540 = vpop.permute.xlu0 %539
        %vm541 = vsmask.f32 6400
        %v542 = vrot.slane %v515, 1
        %v543 = vrot.slane %v517, 2
        %v544 = vor.u32 %v542, %v543
        %v545 = vrot.slane %v526, 1
        %v546 = vrot.slane %v522, 2
        %v547 = vor.u32 %v545, %v546
        %v548 = vsel %vm541, %v544, %v547
        %549 = vrot.lane.b32.xlu0 %v548, 32
        %v550 = vpop.permute.xlu0 %549
        %551 = vrot.lane.b32.xlu0 %v547, 32
        %v552 = vpop.permute.xlu0 %551
        %vm553 = vcmask 1045504
        %v554 = vrot.slane %v511, 2
        %v555 = vrot.slane %v512, 2
        %v556 = vsel %vm553, %v554, %v555
        %vm557 = vcmask 785408
        %v559 = vsel %vm557, %v511, %v530
        %v562 = vsel %vm557, %v512, %v532
        %vm563 = vcmask 523264
        %v565 = vsel %vm563, %v530, %v538
        %v568 = vsel %vm563, %v532, %v540
        %vm569 = vcmask 261120
        %v571 = vsel %vm569, %v538, %v550
        %v574 = vsel %vm569, %v540, %v552
        %s575 = scalar_lea.vmem %s496, 16
        %v576 = vld [vmem:[%s575] sm:$0xf]
        %v577 = vld [vmem:[%s575 + $0x4] sm:$0xf]
        %v578 = vld [vmem:[%s575 + $0x8] sm:$0xf]
        %v579 = vld [vmem:[%s575 + $0xc] sm:$0xf]
        %v584 = vunpack.c.l.b16 %v576
        %v585 = vunpack.c.l.b16 %v577
        %v586 = vunpack.c.l.b16 %v578
        %v587 = vunpack.c.l.b16 %v579
        %v588 = vpack.c.b16 %v585, %v584
        %v589 = vpack.c.b16 %v587, %v586
        %v591 = vshrl.u32 %v588, 16
        %v593 = vshll.u32 %v588, 16
        %v595 = vrot.slane %v593, 1
        %v596 = vor.u32 %v591, %v595
        %v598 = vshll.u32 %v589, 16
        %v600 = vrot.slane %v598, 1
        %v601 = vsel %vm513, %v596, %v600
        %v602 = vshrl.u32 %v589, 16
        %v604 = vor.u32 %v602, %v600
        %605 = vrot.lane.b32.xlu0 %v601, 96
        %v606 = vpop.permute.xlu0 %605
        %607 = vrot.lane.b32.xlu0 %v604, 96
        %v608 = vpop.permute.xlu0 %607
        %v609 = vrot.slane %v588, 1
        %v610 = vrot.slane %v589, 1
        %v611 = vsel %vm533, %v609, %v610
        %612 = vrot.lane.b32.xlu0 %v611, 64
        %v613 = vpop.permute.xlu0 %612
        %614 = vrot.lane.b32.xlu0 %v610, 64
        %v615 = vpop.permute.xlu0 %614
        %v616 = vrot.slane %v591, 1
        %v617 = vrot.slane %v593, 2
        %v618 = vor.u32 %v616, %v617
        %v619 = vrot.slane %v602, 1
        %v620 = vrot.slane %v598, 2
        %v621 = vor.u32 %v619, %v620
        %v622 = vsel %vm541, %v618, %v621
        %623 = vrot.lane.b32.xlu0 %v622, 32
        %v624 = vpop.permute.xlu0 %623
        %625 = vrot.lane.b32.xlu0 %v621, 32
        %v626 = vpop.permute.xlu0 %625
        %v627 = vrot.slane %v588, 2
        %v628 = vrot.slane %v589, 2
        %v629 = vsel %vm553, %v627, %v628
        %v631 = vsel %vm557, %v588, %v606
        %v633 = vsel %vm557, %v589, %v608
        %v635 = vsel %vm563, %v606, %v613
        %v637 = vsel %vm563, %v608, %v615
        %v639 = vsel %vm569, %v613, %v624
        %v641 = vsel %vm569, %v615, %v626
        %s642 = scalar_lea.vmem %s496, 32
        %v643 = vld [vmem:[%s642] sm:$0xf]
        %v644 = vld [vmem:[%s642 + $0x4] sm:$0xf]
        %v645 = vld [vmem:[%s642 + $0x8] sm:$0xf]
        %v646 = vld [vmem:[%s642 + $0xc] sm:$0xf]
        %v651 = vunpack.c.l.b16 %v643
        %v652 = vunpack.c.l.b16 %v644
        %v653 = vunpack.c.l.b16 %v645
        %v654 = vunpack.c.l.b16 %v646
        %v655 = vpack.c.b16 %v652, %v651
        %v656 = vpack.c.b16 %v654, %v653
        %v658 = vshrl.u32 %v655, 16
        %v660 = vshll.u32 %v655, 16
        %v662 = vrot.slane %v660, 1
        %v663 = vor.u32 %v658, %v662
        %v665 = vshll.u32 %v656, 16
        %v667 = vrot.slane %v665, 1
        %v668 = vsel %vm513, %v663, %v667
        %v669 = vshrl.u32 %v656, 16
        %v671 = vor.u32 %v669, %v667
        %672 = vrot.lane.b32.xlu0 %v668, 96
        %v673 = vpop.permute.xlu0 %672
        %674 = vrot.lane.b32.xlu0 %v671, 96
        %v675 = vpop.permute.xlu0 %674
        %v676 = vrot.slane %v655, 1
        %v677 = vrot.slane %v656, 1
        %v678 = vsel %vm533, %v676, %v677
        %679 = vrot.lane.b32.xlu0 %v678, 64
        %v680 = vpop.permute.xlu0 %679
        %681 = vrot.lane.b32.xlu0 %v677, 64
        %v682 = vpop.permute.xlu0 %681
        %v683 = vrot.slane %v658, 1
        %v684 = vrot.slane %v660, 2
        %v685 = vor.u32 %v683, %v684
        %v686 = vrot.slane %v669, 1
        %v687 = vrot.slane %v665, 2
        %v688 = vor.u32 %v686, %v687
        %v689 = vsel %vm541, %v685, %v688
        %690 = vrot.lane.b32.xlu0 %v689, 32
        %v691 = vpop.permute.xlu0 %690
        %692 = vrot.lane.b32.xlu0 %v688, 32
        %v693 = vpop.permute.xlu0 %692
        %v694 = vrot.slane %v655, 2
        %v695 = vrot.slane %v656, 2
        %v696 = vsel %vm553, %v694, %v695
        %v698 = vsel %vm557, %v655, %v673
        %v700 = vsel %vm557, %v656, %v675
        %v702 = vsel %vm563, %v673, %v680
        %v704 = vsel %vm563, %v675, %v682
        %v706 = vsel %vm569, %v680, %v691
        %v708 = vsel %vm569, %v682, %v693
        %s709 = scalar_lea.vmem %s496, 48
        %v710 = vld [vmem:[%s709] sm:$0xf]
        %v711 = vld [vmem:[%s709 + $0x4] sm:$0xf]
        %v712 = vld [vmem:[%s709 + $0x8] sm:$0xf]
        %v713 = vld [vmem:[%s709 + $0xc] sm:$0xf]
        %v718 = vunpack.c.l.b16 %v710
        %v719 = vunpack.c.l.b16 %v711
        %v720 = vunpack.c.l.b16 %v712
        %v721 = vunpack.c.l.b16 %v713
        %v722 = vpack.c.b16 %v719, %v718
        %v723 = vpack.c.b16 %v721, %v720
        %v725 = vshrl.u32 %v722, 16
        %v727 = vshll.u32 %v722, 16
        %v729 = vrot.slane %v727, 1
        %v730 = vor.u32 %v725, %v729
        %v732 = vshll.u32 %v723, 16
        %v734 = vrot.slane %v732, 1
        %v735 = vsel %vm513, %v730, %v734
        %v736 = vshrl.u32 %v723, 16
        %v738 = vor.u32 %v736, %v734
        %739 = vrot.lane.b32.xlu0 %v735, 96
        %v740 = vpop.permute.xlu0 %739
        %741 = vrot.lane.b32.xlu0 %v738, 96
        %v742 = vpop.permute.xlu0 %741
        %v743 = vrot.slane %v722, 1
        %v744 = vrot.slane %v723, 1
        %v745 = vsel %vm533, %v743, %v744
        %746 = vrot.lane.b32.xlu0 %v745, 64
        %v747 = vpop.permute.xlu0 %746
        %748 = vrot.lane.b32.xlu0 %v744, 64
        %v749 = vpop.permute.xlu0 %748
        %v750 = vrot.slane %v725, 1
        %v751 = vrot.slane %v727, 2
        %v752 = vor.u32 %v750, %v751
        %v753 = vrot.slane %v736, 1
        %v754 = vrot.slane %v732, 2
        %v755 = vor.u32 %v753, %v754
        %v756 = vsel %vm541, %v752, %v755
        %757 = vrot.lane.b32.xlu0 %v756, 32
        %v758 = vpop.permute.xlu0 %757
        %759 = vrot.lane.b32.xlu0 %v755, 32
        %v760 = vpop.permute.xlu0 %759
        %v761 = vrot.slane %v722, 2
        %v762 = vrot.slane %v723, 2
        %v763 = vsel %vm553, %v761, %v762
        %v765 = vsel %vm557, %v722, %v740
        %v767 = vsel %vm557, %v723, %v742
        %v769 = vsel %vm563, %v740, %v747
        %v771 = vsel %vm563, %v742, %v749
        %v773 = vsel %vm569, %v747, %v758
        %v775 = vsel %vm569, %v749, %v760
        %s776 = scalar_lea.vmem %s496, 64
        %v777 = vld [vmem:[%s776] sm:$0xf]
        %v778 = vld [vmem:[%s776 + $0x4] sm:$0xf]
        %v779 = vld [vmem:[%s776 + $0x8] sm:$0xf]
        %v780 = vld [vmem:[%s776 + $0xc] sm:$0xf]
        %v785 = vunpack.c.l.b16 %v777
        %v786 = vunpack.c.l.b16 %v778
        %v787 = vunpack.c.l.b16 %v779
        %v788 = vunpack.c.l.b16 %v780
        %v789 = vpack.c.b16 %v786, %v785
        %v790 = vpack.c.b16 %v788, %v787
        %v792 = vshrl.u32 %v789, 16
        %v794 = vshll.u32 %v789, 16
        %v796 = vrot.slane %v794, 1
        %v797 = vor.u32 %v792, %v796
        %v799 = vshll.u32 %v790, 16
        %v801 = vrot.slane %v799, 1
        %v802 = vsel %vm513, %v797, %v801
        %v803 = vshrl.u32 %v790, 16
        %v805 = vor.u32 %v803, %v801
        %806 = vrot.lane.b32.xlu0 %v802, 96
        %v807 = vpop.permute.xlu0 %806
        %808 = vrot.lane.b32.xlu0 %v805, 96
        %v809 = vpop.permute.xlu0 %808
        %v810 = vrot.slane %v789, 1
        %v811 = vrot.slane %v790, 1
        %v812 = vsel %vm533, %v810, %v811
        %813 = vrot.lane.b32.xlu0 %v812, 64
        %v814 = vpop.permute.xlu0 %813
        %815 = vrot.lane.b32.xlu0 %v811, 64
        %v816 = vpop.permute.xlu0 %815
        %v817 = vrot.slane %v792, 1
        %v818 = vrot.slane %v794, 2
        %v819 = vor.u32 %v817, %v818
        %v820 = vrot.slane %v803, 1
        %v821 = vrot.slane %v799, 2
        %v822 = vor.u32 %v820, %v821
        %v823 = vsel %vm541, %v819, %v822
        %824 = vrot.lane.b32.xlu0 %v823, 32
        %v825 = vpop.permute.xlu0 %824
        %826 = vrot.lane.b32.xlu0 %v822, 32
        %v827 = vpop.permute.xlu0 %826
        %v828 = vrot.slane %v789, 2
        %v829 = vrot.slane %v790, 2
        %v830 = vsel %vm553, %v828, %v829
        %v832 = vsel %vm557, %v789, %v807
        %v835 = vsel %vm557, %v790, %v809
        %v837 = vsel %vm563, %v807, %v814
        %v840 = vsel %vm563, %v809, %v816
        %v842 = vsel %vm569, %v814, %v825
        %v845 = vsel %vm569, %v816, %v827
        %s846 = scalar_lea.vmem %s496, 80
        %v847 = vld [vmem:[%s846] sm:$0xf]
        %v848 = vld [vmem:[%s846 + $0x4] sm:$0xf]
        %v849 = vld [vmem:[%s846 + $0x8] sm:$0xf]
        %v850 = vld [vmem:[%s846 + $0xc] sm:$0xf]
        %v855 = vunpack.c.l.b16 %v847
        %v856 = vunpack.c.l.b16 %v848
        %v857 = vunpack.c.l.b16 %v849
        %v858 = vunpack.c.l.b16 %v850
        %v859 = vpack.c.b16 %v856, %v855
        %v860 = vpack.c.b16 %v858, %v857
        %v862 = vshrl.u32 %v859, 16
        %v864 = vshll.u32 %v859, 16
        %v866 = vrot.slane %v864, 1
        %v867 = vor.u32 %v862, %v866
        %v869 = vshll.u32 %v860, 16
        %v871 = vrot.slane %v869, 1
        %v872 = vsel %vm513, %v867, %v871
        %v873 = vshrl.u32 %v860, 16
        %v875 = vor.u32 %v873, %v871
        %876 = vrot.lane.b32.xlu0 %v872, 96
        %v877 = vpop.permute.xlu0 %876
        %878 = vrot.lane.b32.xlu0 %v875, 96
        %v879 = vpop.permute.xlu0 %878
        %v880 = vrot.slane %v859, 1
        %v881 = vrot.slane %v860, 1
        %v882 = vsel %vm533, %v880, %v881
        %883 = vrot.lane.b32.xlu0 %v882, 64
        %v884 = vpop.permute.xlu0 %883
        %885 = vrot.lane.b32.xlu0 %v881, 64
        %v886 = vpop.permute.xlu0 %885
        %v887 = vrot.slane %v862, 1
        %v888 = vrot.slane %v864, 2
        %v889 = vor.u32 %v887, %v888
        %v890 = vrot.slane %v873, 1
        %v891 = vrot.slane %v869, 2
        %v892 = vor.u32 %v890, %v891
        %v893 = vsel %vm541, %v889, %v892
        %894 = vrot.lane.b32.xlu0 %v893, 32
        %v895 = vpop.permute.xlu0 %894
        %896 = vrot.lane.b32.xlu0 %v892, 32
        %v897 = vpop.permute.xlu0 %896
        %v898 = vrot.slane %v859, 2
        %v899 = vrot.slane %v860, 2
        %v900 = vsel %vm553, %v898, %v899
        %v902 = vsel %vm557, %v859, %v877
        %v904 = vsel %vm557, %v860, %v879
        %v906 = vsel %vm563, %v877, %v884
        %v908 = vsel %vm563, %v879, %v886
        %v910 = vsel %vm569, %v884, %v895
        %v912 = vsel %vm569, %v886, %v897
        %s913 = scalar_lea.vmem %s496, 96
        %v914 = vld [vmem:[%s913] sm:$0xf]
        %v915 = vld [vmem:[%s913 + $0x4] sm:$0xf]
        %v916 = vld [vmem:[%s913 + $0x8] sm:$0xf]
        %v917 = vld [vmem:[%s913 + $0xc] sm:$0xf]
        %v922 = vunpack.c.l.b16 %v914
        %v923 = vunpack.c.l.b16 %v915
        %v924 = vunpack.c.l.b16 %v916
        %v925 = vunpack.c.l.b16 %v917
        %v926 = vpack.c.b16 %v923, %v922
        %v927 = vpack.c.b16 %v925, %v924
        %v929 = vshrl.u32 %v926, 16
        %v931 = vshll.u32 %v926, 16
        %v933 = vrot.slane %v931, 1
        %v934 = vor.u32 %v929, %v933
        %v936 = vshll.u32 %v927, 16
        %v938 = vrot.slane %v936, 1
        %v939 = vsel %vm513, %v934, %v938
        %v940 = vshrl.u32 %v927, 16
        %v942 = vor.u32 %v940, %v938
        %943 = vrot.lane.b32.xlu0 %v939, 96
        %v944 = vpop.permute.xlu0 %943
        %945 = vrot.lane.b32.xlu0 %v942, 96
        %v946 = vpop.permute.xlu0 %945
        %v947 = vrot.slane %v926, 1
        %v948 = vrot.slane %v927, 1
        %v949 = vsel %vm533, %v947, %v948
        %950 = vrot.lane.b32.xlu0 %v949, 64
        %v951 = vpop.permute.xlu0 %950
        %952 = vrot.lane.b32.xlu0 %v948, 64
        %v953 = vpop.permute.xlu0 %952
        %v954 = vrot.slane %v929, 1
        %v955 = vrot.slane %v931, 2
        %v956 = vor.u32 %v954, %v955
        %v957 = vrot.slane %v940, 1
        %v958 = vrot.slane %v936, 2
        %v959 = vor.u32 %v957, %v958
        %v960 = vsel %vm541, %v956, %v959
        %961 = vrot.lane.b32.xlu0 %v960, 32
        %v962 = vpop.permute.xlu0 %961
        %963 = vrot.lane.b32.xlu0 %v959, 32
        %v964 = vpop.permute.xlu0 %963
        %v965 = vrot.slane %v926, 2
        %v966 = vrot.slane %v927, 2
        %v967 = vsel %vm553, %v965, %v966
        %v969 = vsel %vm557, %v926, %v944
        %v971 = vsel %vm557, %v927, %v946
        %v973 = vsel %vm563, %v944, %v951
        %v975 = vsel %vm563, %v946, %v953
        %v977 = vsel %vm569, %v951, %v962
        %v979 = vsel %vm569, %v953, %v964
        %s980 = scalar_lea.vmem %s496, 112
        %v981 = vld [vmem:[%s980] sm:$0xf]
        %v982 = vld [vmem:[%s980 + $0x4] sm:$0xf]
        %v983 = vld [vmem:[%s980 + $0x8] sm:$0xf]
        %v984 = vld [vmem:[%s980 + $0xc] sm:$0xf]
        %v989 = vunpack.c.l.b16 %v981
        %v990 = vunpack.c.l.b16 %v982
        %v991 = vunpack.c.l.b16 %v983
        %v992 = vunpack.c.l.b16 %v984
        %v993 = vpack.c.b16 %v990, %v989
        %v994 = vpack.c.b16 %v992, %v991
        %v996 = vshrl.u32 %v993, 16
        %v998 = vshll.u32 %v993, 16
        %v1000 = vrot.slane %v998, 1
        %v1001 = vor.u32 %v996, %v1000
        %v1003 = vshll.u32 %v994, 16
        %v1005 = vrot.slane %v1003, 1
        %v1006 = vsel %vm513, %v1001, %v1005
        %v1007 = vshrl.u32 %v994, 16
        %v1009 = vor.u32 %v1007, %v1005
        %1010 = vrot.lane.b32.xlu0 %v1006, 96
        %v1011 = vpop.permute.xlu0 %1010
        %1012 = vrot.lane.b32.xlu0 %v1009, 96
        %v1013 = vpop.permute.xlu0 %1012
        %v1014 = vrot.slane %v993, 1
        %v1015 = vrot.slane %v994, 1
        %v1016 = vsel %vm533, %v1014, %v1015
        %1017 = vrot.lane.b32.xlu0 %v1016, 64
        %v1018 = vpop.permute.xlu0 %1017
        %1019 = vrot.lane.b32.xlu0 %v1015, 64
        %v1020 = vpop.permute.xlu0 %1019
        %v1021 = vrot.slane %v996, 1
        %v1022 = vrot.slane %v998, 2
        %v1023 = vor.u32 %v1021, %v1022
        %v1024 = vrot.slane %v1007, 1
        %v1025 = vrot.slane %v1003, 2
        %v1026 = vor.u32 %v1024, %v1025
        %v1027 = vsel %vm541, %v1023, %v1026
        %1028 = vrot.lane.b32.xlu0 %v1027, 32
        %v1029 = vpop.permute.xlu0 %1028
        %1030 = vrot.lane.b32.xlu0 %v1026, 32
        %v1031 = vpop.permute.xlu0 %1030
        %v1032 = vrot.slane %v993, 2
        %v1033 = vrot.slane %v994, 2
        %v1034 = vsel %vm553, %v1032, %v1033
        %v1036 = vsel %vm557, %v993, %v1011
        %v1038 = vsel %vm557, %v994, %v1013
        %v1040 = vsel %vm563, %v1011, %v1018
        %v1042 = vsel %vm563, %v1013, %v1020
        %v1044 = vsel %vm569, %v1018, %v1029
        %v1046 = vsel %vm569, %v1020, %v1031
        %v1053 = vrot.slane %v631, 2
        %v1054 = vrot.slane %v635, 2
        %v1055 = vrot.slane %v639, 2
        %v1056 = vrot.slane %v629, 2
        %v1057 = vrot.slane %v633, 2
        %v1058 = vsel %vm553, %v1053, %v1057
        %v1059 = vrot.slane %v637, 2
        %v1060 = vsel %vm553, %v1054, %v1059
        %v1061 = vrot.slane %v641, 2
        %v1062 = vsel %vm553, %v1055, %v1061
        %v1063 = vrot.slane %v628, 2
        %v1064 = vsel %vm553, %v1056, %v1063
        %vm1074 = vcmask 1043456
        %v1075 = vrot.slane %v698, 4
        %v1076 = vrot.slane %v702, 4
        %v1077 = vrot.slane %v706, 4
        %v1078 = vrot.slane %v696, 4
        %v1079 = vrot.slane %v700, 4
        %v1080 = vsel %vm1074, %v1075, %v1079
        %v1081 = vrot.slane %v704, 4
        %v1082 = vsel %vm1074, %v1076, %v1081
        %v1083 = vrot.slane %v708, 4
        %v1084 = vsel %vm1074, %v1077, %v1083
        %v1085 = vrot.slane %v695, 4
        %v1086 = vsel %vm1074, %v1078, %v1085
        %vm1096 = vcmask 1041408
        %v1097 = vrot.slane %v765, 6
        %v1098 = vrot.slane %v769, 6
        %v1099 = vrot.slane %v773, 6
        %v1100 = vrot.slane %v763, 6
        %v1101 = vrot.slane %v767, 6
        %v1102 = vsel %vm1096, %v1097, %v1101
        %v1103 = vrot.slane %v771, 6
        %v1104 = vsel %vm1096, %v1098, %v1103
        %v1105 = vrot.slane %v775, 6
        %v1106 = vsel %vm1096, %v1099, %v1105
        %v1107 = vrot.slane %v762, 6
        %v1108 = vsel %vm1096, %v1100, %v1107
        %v1118 = vrot.slane %v902, 2
        %v1119 = vrot.slane %v906, 2
        %v1120 = vrot.slane %v910, 2
        %v1121 = vrot.slane %v900, 2
        %v1122 = vrot.slane %v904, 2
        %v1123 = vsel %vm553, %v1118, %v1122
        %v1124 = vrot.slane %v908, 2
        %v1125 = vsel %vm553, %v1119, %v1124
        %v1126 = vrot.slane %v912, 2
        %v1127 = vsel %vm553, %v1120, %v1126
        %v1128 = vrot.slane %v899, 2
        %v1129 = vsel %vm553, %v1121, %v1128
        %v1139 = vrot.slane %v969, 4
        %v1140 = vrot.slane %v973, 4
        %v1141 = vrot.slane %v977, 4
        %v1142 = vrot.slane %v967, 4
        %v1143 = vrot.slane %v971, 4
        %v1144 = vsel %vm1074, %v1139, %v1143
        %v1145 = vrot.slane %v975, 4
        %v1146 = vsel %vm1074, %v1140, %v1145
        %v1147 = vrot.slane %v979, 4
        %v1148 = vsel %vm1074, %v1141, %v1147
        %v1149 = vrot.slane %v966, 4
        %v1150 = vsel %vm1074, %v1142, %v1149
        %v1160 = vrot.slane %v1036, 6
        %v1161 = vrot.slane %v1040, 6
        %v1162 = vrot.slane %v1044, 6
        %v1163 = vrot.slane %v1034, 6
        %v1164 = vrot.slane %v1038, 6
        %v1165 = vsel %vm1096, %v1160, %v1164
        %v1166 = vrot.slane %v1042, 6
        %v1167 = vsel %vm1096, %v1161, %v1166
        %v1168 = vrot.slane %v1046, 6
        %v1169 = vsel %vm1096, %v1162, %v1168
        %v1170 = vrot.slane %v1033, 6
        %v1171 = vsel %vm1096, %v1163, %v1170
        %vm1175 = vcmask 1045504
        %v1177 = vsel %vm1175, %v562, %v1053
        %v1180 = vsel %vm1175, %v568, %v1054
        %v1183 = vsel %vm1175, %v574, %v1055
        %v1187 = vsel %vm1175, %v555, %v1056
        %vm1188 = vcmask 1043456
        %v1191 = vsel %vm1188, %v1057, %v1075
        %v1195 = vsel %vm1188, %v1059, %v1076
        %v1199 = vsel %vm1188, %v1061, %v1077
        %v1203 = vsel %vm1188, %v1063, %v1078
        %vm1204 = vcmask 1041408
        %v1207 = vsel %vm1204, %v1079, %v1097
        %v1211 = vsel %vm1204, %v1081, %v1098
        %v1215 = vsel %vm1204, %v1083, %v1099
        %v1219 = vsel %vm1204, %v1085, %v1100
        %v1221 = vsel %vm1175, %v835, %v1118
        %v1224 = vsel %vm1175, %v840, %v1119
        %v1227 = vsel %vm1175, %v845, %v1120
        %v1231 = vsel %vm1175, %v829, %v1121
        %v1234 = vsel %vm1188, %v1122, %v1139
        %v1238 = vsel %vm1188, %v1124, %v1140
        %v1242 = vsel %vm1188, %v1126, %v1141
        %v1246 = vsel %vm1188, %v1128, %v1142
        %v1249 = vsel %vm1204, %v1143, %v1160
        %v1253 = vsel %vm1204, %v1145, %v1161
        %v1257 = vsel %vm1204, %v1147, %v1162
        %v1261 = vsel %vm1204, %v1149, %v1163
        %v1262 = vld [vmem:[%s1] sm:$0xff]
        %v1263 = vld [vmem:[%s1 + $0x8] sm:$0xff]
        %v1264 = vld [vmem:[%s1 + $0x10] sm:$0xff]
        %v1265 = vld [vmem:[%s1 + $0x18] sm:$0xff]
        %v1266 = vld [vmem:[%s1 + $0x20] sm:$0xff]
        %v1267 = vld [vmem:[%s1 + $0x28] sm:$0xff]
        %v1268 = vld [vmem:[%s1 + $0x30] sm:$0xff]
        %v1269 = vld [vmem:[%s1 + $0x38] sm:$0xff]
        %v1270 = vld [vmem:[%s1 + $0x40] sm:$0xff]
        %v1271 = vld [vmem:[%s1 + $0x48] sm:$0xff]
        %v1272 = vld [vmem:[%s1 + $0x50] sm:$0xff]
        %v1273 = vld [vmem:[%s1 + $0x58] sm:$0xff]
        %v1274 = vld [vmem:[%s1 + $0x60] sm:$0xff]
        %v1275 = vld [vmem:[%s1 + $0x68] sm:$0xff]
        %v1276 = vld [vmem:[%s1 + $0x70] sm:$0xff]
        %v1277 = vld [vmem:[%s1 + $0x78] sm:$0xff]
        %v1278 = vld [vmem:[%s1 + $0x80] sm:$0xff]
        %v1279 = vld [vmem:[%s1 + $0x88] sm:$0xff]
        %v1280 = vld [vmem:[%s1 + $0x90] sm:$0xff]
        %v1281 = vld [vmem:[%s1 + $0x98] sm:$0xff]
        %v1282 = vld [vmem:[%s1 + $0xa0] sm:$0xff]
        %v1283 = vld [vmem:[%s1 + $0xa8] sm:$0xff]
        %v1284 = vld [vmem:[%s1 + $0xb0] sm:$0xff]
        %v1285 = vld [vmem:[%s1 + $0xb8] sm:$0xff]
        %v1286 = vld [vmem:[%s1 + $0xc0] sm:$0xff]
        %v1287 = vld [vmem:[%s1 + $0xc8] sm:$0xff]
        %v1288 = vld [vmem:[%s1 + $0xd0] sm:$0xff]
        %v1289 = vld [vmem:[%s1 + $0xd8] sm:$0xff]
        %v1290 = vld [vmem:[%s1 + $0xe0] sm:$0xff]
        %v1291 = vld [vmem:[%s1 + $0xe8] sm:$0xff]
        %v1292 = vld [vmem:[%s1 + $0xf0] sm:$0xff]
        %v1293 = vld [vmem:[%s1 + $0xf8] sm:$0xff]
        %v1294 = vld [vmem:[%s1 + $0x100] sm:$0xff]
        %v1295 = vld [vmem:[%s1 + $0x108] sm:$0xff]
        %v1296 = vld [vmem:[%s1 + $0x110] sm:$0xff]
        %v1297 = vld [vmem:[%s1 + $0x118] sm:$0xff]
        %v1298 = vld [vmem:[%s1 + $0x120] sm:$0xff]
        %v1299 = vld [vmem:[%s1 + $0x128] sm:$0xff]
        %v1300 = vld [vmem:[%s1 + $0x130] sm:$0xff]
        %v1301 = vld [vmem:[%s1 + $0x138] sm:$0xff]
        %v1302 = vld [vmem:[%s1 + $0x140] sm:$0xff]
        %v1303 = vld [vmem:[%s1 + $0x148] sm:$0xff]
        %v1304 = vld [vmem:[%s1 + $0x150] sm:$0xff]
        %v1305 = vld [vmem:[%s1 + $0x158] sm:$0xff]
        %v1306 = vld [vmem:[%s1 + $0x160] sm:$0xff]
        %v1307 = vld [vmem:[%s1 + $0x168] sm:$0xff]
        %v1308 = vld [vmem:[%s1 + $0x170] sm:$0xff]
        %v1309 = vld [vmem:[%s1 + $0x178] sm:$0xff]
        %v1310 = vld [vmem:[%s1 + $0x180] sm:$0xff]
        %v1311 = vld [vmem:[%s1 + $0x188] sm:$0xff]
        %v1312 = vld [vmem:[%s1 + $0x190] sm:$0xff]
        %v1313 = vld [vmem:[%s1 + $0x198] sm:$0xff]
        %v1314 = vld [vmem:[%s1 + $0x1a0] sm:$0xff]
        %v1315 = vld [vmem:[%s1 + $0x1a8] sm:$0xff]
        %v1316 = vld [vmem:[%s1 + $0x1b0] sm:$0xff]
        %v1317 = vld [vmem:[%s1 + $0x1b8] sm:$0xff]
        %v1318 = vld [vmem:[%s1 + $0x1c0] sm:$0xff]
        %v1319 = vld [vmem:[%s1 + $0x1c8] sm:$0xff]
        %v1320 = vld [vmem:[%s1 + $0x1d0] sm:$0xff]
        %v1321 = vld [vmem:[%s1 + $0x1d8] sm:$0xff]
        %v1322 = vld [vmem:[%s2] sm:$0x3]
        %v1324 = vlaneseq
        %v1325 = vshrl.u32 %v1324, 7
        %v1326 = vsub.s32 0, %v1325
        %v1327 = vrot.slane %v1322, %v1326
        %v1328 = vlaneseq
        %v1329 = vshrl.u32 %v1328, 7
        %v1330 = vsub.s32 1, %v1329
        %v1331 = vrot.slane %v1322, %v1330
        %v1394 = vunpack.c.l.b16 %v1262
        %v1395 = vunpack.c.h.b16 %v1262
        %v1396 = vunpack.c.l.b16 %v1263
        %v1397 = vunpack.c.h.b16 %v1263
        %v1398 = vunpack.c.l.b16 %v1264
        %v1399 = vunpack.c.h.b16 %v1264
        %v1400 = vunpack.c.l.b16 %v1265
        %v1401 = vunpack.c.h.b16 %v1265
        %v1402 = vunpack.c.l.b16 %v1266
        %v1403 = vunpack.c.h.b16 %v1266
        %v1404 = vunpack.c.l.b16 %v1267
        %v1405 = vunpack.c.h.b16 %v1267
        %v1406 = vunpack.c.l.b16 %v1268
        %v1407 = vunpack.c.h.b16 %v1268
        %v1408 = vunpack.c.l.b16 %v1269
        %v1409 = vunpack.c.h.b16 %v1269
        %v1410 = vunpack.c.l.b16 %v1270
        %v1411 = vunpack.c.h.b16 %v1270
        %v1412 = vunpack.c.l.b16 %v1271
        %v1413 = vunpack.c.h.b16 %v1271
        %v1414 = vunpack.c.l.b16 %v1272
        %v1415 = vunpack.c.h.b16 %v1272
        %v1416 = vunpack.c.l.b16 %v1273
        %v1417 = vunpack.c.h.b16 %v1273
        %v1418 = vunpack.c.l.b16 %v1274
        %v1419 = vunpack.c.h.b16 %v1274
        %v1420 = vunpack.c.l.b16 %v1275
        %v1421 = vunpack.c.h.b16 %v1275
        %v1422 = vunpack.c.l.b16 %v1276
        %v1423 = vunpack.c.h.b16 %v1276
        %v1424 = vunpack.c.l.b16 %v1277
        %v1425 = vunpack.c.h.b16 %v1277
        %v1426 = vunpack.c.l.b16 %v1278
        %v1427 = vunpack.c.h.b16 %v1278
        %v1428 = vunpack.c.l.b16 %v1279
        %v1429 = vunpack.c.h.b16 %v1279
        %v1430 = vunpack.c.l.b16 %v1280
        %v1431 = vunpack.c.h.b16 %v1280
        %v1432 = vunpack.c.l.b16 %v1281
        %v1433 = vunpack.c.h.b16 %v1281
        %v1434 = vunpack.c.l.b16 %v1282
        %v1435 = vunpack.c.h.b16 %v1282
        %v1436 = vunpack.c.l.b16 %v1283
        %v1437 = vunpack.c.h.b16 %v1283
        %v1438 = vunpack.c.l.b16 %v1284
        %v1439 = vunpack.c.h.b16 %v1284
        %v1440 = vunpack.c.l.b16 %v1285
        %v1441 = vunpack.c.h.b16 %v1285
        %v1442 = vunpack.c.l.b16 %v1286
        %v1443 = vunpack.c.h.b16 %v1286
        %v1444 = vunpack.c.l.b16 %v1287
        %v1445 = vunpack.c.h.b16 %v1287
        %v1446 = vunpack.c.l.b16 %v1288
        %v1447 = vunpack.c.h.b16 %v1288
        %v1448 = vunpack.c.l.b16 %v1289
        %v1449 = vunpack.c.h.b16 %v1289
        %v1450 = vunpack.c.l.b16 %v1290
        %v1451 = vunpack.c.h.b16 %v1290
        %v1452 = vunpack.c.l.b16 %v1291
        %v1453 = vunpack.c.h.b16 %v1291
        %v1454 = vunpack.c.l.b16 %v1292
        %v1455 = vunpack.c.h.b16 %v1292
        %v1456 = vunpack.c.l.b16 %v1293
        %v1457 = vunpack.c.h.b16 %v1293
        %v1458 = vunpack.c.l.b16 %v1294
        %v1459 = vunpack.c.h.b16 %v1294
        %v1460 = vunpack.c.l.b16 %v1295
        %v1461 = vunpack.c.h.b16 %v1295
        %v1462 = vunpack.c.l.b16 %v1296
        %v1463 = vunpack.c.h.b16 %v1296
        %v1464 = vunpack.c.l.b16 %v1297
        %v1465 = vunpack.c.h.b16 %v1297
        %v1466 = vunpack.c.l.b16 %v1298
        %v1467 = vunpack.c.h.b16 %v1298
        %v1468 = vunpack.c.l.b16 %v1299
        %v1469 = vunpack.c.h.b16 %v1299
        %v1470 = vunpack.c.l.b16 %v1300
        %v1471 = vunpack.c.h.b16 %v1300
        %v1472 = vunpack.c.l.b16 %v1301
        %v1473 = vunpack.c.h.b16 %v1301
        %v1474 = vunpack.c.l.b16 %v1302
        %v1475 = vunpack.c.h.b16 %v1302
        %v1476 = vunpack.c.l.b16 %v1303
        %v1477 = vunpack.c.h.b16 %v1303
        %v1478 = vunpack.c.l.b16 %v1304
        %v1479 = vunpack.c.h.b16 %v1304
        %v1480 = vunpack.c.l.b16 %v1305
        %v1481 = vunpack.c.h.b16 %v1305
        %v1482 = vunpack.c.l.b16 %v1306
        %v1483 = vunpack.c.h.b16 %v1306
        %v1484 = vunpack.c.l.b16 %v1307
        %v1485 = vunpack.c.h.b16 %v1307
        %v1486 = vunpack.c.l.b16 %v1308
        %v1487 = vunpack.c.h.b16 %v1308
        %v1488 = vunpack.c.l.b16 %v1309
        %v1489 = vunpack.c.h.b16 %v1309
        %v1490 = vunpack.c.l.b16 %v1310
        %v1491 = vunpack.c.h.b16 %v1310
        %v1492 = vunpack.c.l.b16 %v1311
        %v1493 = vunpack.c.h.b16 %v1311
        %v1494 = vunpack.c.l.b16 %v1312
        %v1495 = vunpack.c.h.b16 %v1312
        %v1496 = vunpack.c.l.b16 %v1313
        %v1497 = vunpack.c.h.b16 %v1313
        %v1498 = vunpack.c.l.b16 %v1314
        %v1499 = vunpack.c.h.b16 %v1314
        %v1500 = vunpack.c.l.b16 %v1315
        %v1501 = vunpack.c.h.b16 %v1315
        %v1502 = vunpack.c.l.b16 %v1316
        %v1503 = vunpack.c.h.b16 %v1316
        %v1504 = vunpack.c.l.b16 %v1317
        %v1505 = vunpack.c.h.b16 %v1317
        %v1506 = vunpack.c.l.b16 %v1318
        %v1507 = vunpack.c.h.b16 %v1318
        %v1508 = vunpack.c.l.b16 %v1319
        %v1509 = vunpack.c.h.b16 %v1319
        %v1510 = vunpack.c.l.b16 %v1320
        %v1511 = vunpack.c.h.b16 %v1320
        %v1512 = vunpack.c.l.b16 %v1321
        %v1513 = vunpack.c.h.b16 %v1321
        %v1514 = vpack.c.b16 %v1396, %v1394
        %v1515 = vpack.c.b16 %v1397, %v1395
        %v1516 = vpack.c.b16 %v1400, %v1398
        %v1517 = vpack.c.b16 %v1401, %v1399
        %v1518 = vpack.c.b16 %v1404, %v1402
        %v1519 = vpack.c.b16 %v1405, %v1403
        %v1520 = vpack.c.b16 %v1408, %v1406
        %v1521 = vpack.c.b16 %v1409, %v1407
        %v1522 = vpack.c.b16 %v1412, %v1410
        %v1523 = vpack.c.b16 %v1413, %v1411
        %v1524 = vpack.c.b16 %v1416, %v1414
        %v1525 = vpack.c.b16 %v1417, %v1415
        %v1526 = vpack.c.b16 %v1420, %v1418
        %v1527 = vpack.c.b16 %v1421, %v1419
        %v1528 = vpack.c.b16 %v1424, %v1422
        %v1529 = vpack.c.b16 %v1425, %v1423
        %v1530 = vpack.c.b16 %v1428, %v1426
        %v1531 = vpack.c.b16 %v1429, %v1427
        %v1532 = vpack.c.b16 %v1432, %v1430
        %v1533 = vpack.c.b16 %v1433, %v1431
        %v1534 = vpack.c.b16 %v1436, %v1434
        %v1535 = vpack.c.b16 %v1437, %v1435
        %v1536 = vpack.c.b16 %v1440, %v1438
        %v1537 = vpack.c.b16 %v1441, %v1439
        %v1538 = vpack.c.b16 %v1444, %v1442
        %v1539 = vpack.c.b16 %v1445, %v1443
        %v1540 = vpack.c.b16 %v1448, %v1446
        %v1541 = vpack.c.b16 %v1449, %v1447
        %v1542 = vpack.c.b16 %v1452, %v1450
        %v1543 = vpack.c.b16 %v1453, %v1451
        %v1544 = vpack.c.b16 %v1456, %v1454
        %v1545 = vpack.c.b16 %v1457, %v1455
        %v1546 = vpack.c.b16 %v1460, %v1458
        %v1547 = vpack.c.b16 %v1461, %v1459
        %v1548 = vpack.c.b16 %v1464, %v1462
        %v1549 = vpack.c.b16 %v1465, %v1463
        %v1550 = vpack.c.b16 %v1468, %v1466
        %v1551 = vpack.c.b16 %v1469, %v1467
        %v1552 = vpack.c.b16 %v1472, %v1470
        %v1553 = vpack.c.b16 %v1473, %v1471
        %v1554 = vpack.c.b16 %v1476, %v1474
        %v1555 = vpack.c.b16 %v1477, %v1475
        %v1556 = vpack.c.b16 %v1480, %v1478
        %v1557 = vpack.c.b16 %v1481, %v1479
        %v1558 = vpack.c.b16 %v1484, %v1482
        %v1559 = vpack.c.b16 %v1485, %v1483
        %v1560 = vpack.c.b16 %v1488, %v1486
        %v1561 = vpack.c.b16 %v1489, %v1487
        %v1562 = vpack.c.b16 %v1492, %v1490
        %v1563 = vpack.c.b16 %v1493, %v1491
        %v1564 = vpack.c.b16 %v1496, %v1494
        %v1565 = vpack.c.b16 %v1497, %v1495
        %v1566 = vpack.c.b16 %v1500, %v1498
        %v1567 = vpack.c.b16 %v1501, %v1499
        %v1568 = vpack.c.b16 %v1504, %v1502
        %v1569 = vpack.c.b16 %v1505, %v1503
        %v1570 = vpack.c.b16 %v1508, %v1506
        %v1571 = vpack.c.b16 %v1509, %v1507
        %v1572 = vpack.c.b16 %v1512, %v1510
        %v1573 = vpack.c.b16 %v1513, %v1511
        %v1635 = vsel %vm557, %v556, 0
        %v1637 = vsel %vm557, %v1187, 0
        %v1640 = vsel %vm557, %v1064, 0
        %v1642 = vsel %vm557, %v1203, 0
        %v1645 = vsel %vm557, %v1086, 0
        %v1647 = vsel %vm557, %v1219, 0
        %v1650 = vsel %vm557, %v1108, 0
        %v1653 = vsel %vm557, %v830, 0
        %v1655 = vsel %vm557, %v1231, 0
        %v1658 = vsel %vm557, %v1129, 0
        %v1660 = vsel %vm557, %v1246, 0
        %v1663 = vsel %vm557, %v1150, 0
        %v1665 = vsel %vm557, %v1261, 0
        %v1668 = vsel %vm557, %v1171, 0
        %1670 = vmatprep.subr.bf16.mxu0 %v1515
        %1671 = vmatpush1.bf16.msra.mxu0 %v1514
        %1672 = vmatprep.subr.bf16.mxu0 %v1517
        %1673 = vmatpush1.bf16.msra.mxu0 %v1516
        %1674 = vmatprep.subr.bf16.mxu0 %v1519
        %1675 = vmatpush1.bf16.msra.mxu0 %v1518
        %1676 = vmatprep.subr.bf16.mxu0 %v1521
        %1677 = vmatpush1.bf16.msra.mxu0 %v1520
        %1678 = vmatprep.subr.bf16.mxu0 %v1523
        %1679 = vmatpush1.bf16.msra.mxu0 %v1522
        %1680 = vmatprep.subr.bf16.mxu0 %v1525
        %1681 = vmatpush1.bf16.msra.mxu0 %v1524
        %1682 = vmatprep.subr.bf16.mxu0 %v1527
        %1683 = vmatpush1.bf16.msra.mxu0 %v1526
        %1684 = vmatprep.subr.bf16.mxu0 %v1529
        %1685 = vmatpush1.bf16.msra.mxu0 %v1528
        %1686 = vmatprep.subr.bf16.mxu0 %v1531
        %1687 = vmatpush1.bf16.msra.mxu0 %v1530
        %1688 = vmatprep.subr.bf16.mxu0 %v1533
        %1689 = vmatpush1.bf16.msra.mxu0 %v1532
        %1690 = vmatprep.subr.bf16.mxu0 %v1535
        %1691 = vmatpush1.bf16.msra.mxu0 %v1534
        %1692 = vmatprep.subr.bf16.mxu0 %v1537
        %1693 = vmatpush1.bf16.msra.mxu0 %v1536
        %1694 = vmatprep.subr.bf16.mxu0 %v1539
        %1695 = vmatpush1.bf16.msra.mxu0 %v1538
        %1696 = vmatprep.subr.bf16.mxu0 %v1541
        %1697 = vmatpush1.bf16.msra.mxu0 %v1540
        %1698 = vmatprep.subr.bf16.mxu0 %v1543
        %1699 = vmatpush1.bf16.msra.mxu0 %v1542
        %1700 = vmatprep.subr.bf16.mxu0 %v1545
        %1701 = vmatpush1.bf16.msra.mxu0 %v1544
        %1702 = vmatprep.mubr.bf16.mxu0 %v565
        %1703 = vmatmul.mubr.bf16.gmra.mrb[0].mxu0 %v559
        %v1704 = vpop.f32.mrb[0].mxu0
        %v1705 = vadd.f32 %v1327, %v1704
        %v1706 = vpop.f32.mrb[0].mxu0
        %v1707 = vadd.f32 %v1331, %v1706
        %v1708 = vpop.f32.mrb[0].mxu0
        %v1709 = vadd.f32 %v1327, %v1708
        %v1710 = vpop.f32.mrb[0].mxu0
        %v1711 = vadd.f32 %v1331, %v1710
        %1712 = vmatprep.mubr.bf16.mxu0 %v1180
        %1713 = vmatmul.mubr.bf16.gmra.mrb[0].mxu0 %v1177
        %v1714 = vpop.f32.mrb[0].mxu0
        %v1715 = vadd.f32 %v1327, %v1714
        %v1716 = vpop.f32.mrb[0].mxu0
        %v1717 = vadd.f32 %v1331, %v1716
        %v1718 = vpop.f32.mrb[0].mxu0
        %v1719 = vadd.f32 %v1327, %v1718
        %v1720 = vpop.f32.mrb[0].mxu0
        %v1721 = vadd.f32 %v1331, %v1720
        %1722 = vmatprep.mubr.bf16.mxu0 %v1060
        %1723 = vmatmul.mubr.bf16.gmra.mrb[0].mxu0 %v1058
        %v1724 = vpop.f32.mrb[0].mxu0
        %v1725 = vadd.f32 %v1327, %v1724
        %v1726 = vpop.f32.mrb[0].mxu0
        %v1727 = vadd.f32 %v1331, %v1726
        %v1728 = vpop.f32.mrb[0].mxu0
        %v1729 = vadd.f32 %v1327, %v1728
        %v1730 = vpop.f32.mrb[0].mxu0
        %v1731 = vadd.f32 %v1331, %v1730
        %1732 = vmatprep.mubr.bf16.mxu0 %v1195
        %1733 = vmatmul.mubr.bf16.gmra.mrb[0].mxu0 %v1191
        %v1734 = vpop.f32.mrb[0].mxu0
        %v1735 = vadd.f32 %v1327, %v1734
        %v1736 = vpop.f32.mrb[0].mxu0
        %v1737 = vadd.f32 %v1331, %v1736
        %v1738 = vpop.f32.mrb[0].mxu0
        %v1739 = vadd.f32 %v1327, %v1738
        %v1740 = vpop.f32.mrb[0].mxu0
        %v1741 = vadd.f32 %v1331, %v1740
        %1742 = vmatprep.mubr.bf16.mxu0 %v1082
        %1743 = vmatmul.mubr.bf16.gmra.mrb[0].mxu0 %v1080
        %v1744 = vpop.f32.mrb[0].mxu0
        %v1745 = vadd.f32 %v1327, %v1744
        %v1746 = vpop.f32.mrb[0].mxu0
        %v1747 = vadd.f32 %v1331, %v1746
        %v1748 = vpop.f32.mrb[0].mxu0
        %v1749 = vadd.f32 %v1327, %v1748
        %v1750 = vpop.f32.mrb[0].mxu0
        %v1751 = vadd.f32 %v1331, %v1750
        %1752 = vmatprep.mubr.bf16.mxu0 %v1211
        %1753 = vmatmul.mubr.bf16.gmra.mrb[0].mxu0 %v1207
        %v1754 = vpop.f32.mrb[0].mxu0
        %v1755 = vadd.f32 %v1327, %v1754
        %v1756 = vpop.f32.mrb[0].mxu0
        %v1757 = vadd.f32 %v1331, %v1756
        %v1758 = vpop.f32.mrb[0].mxu0
        %v1759 = vadd.f32 %v1327, %v1758
        %v1760 = vpop.f32.mrb[0].mxu0
        %v1761 = vadd.f32 %v1331, %v1760
        %1762 = vmatprep.mubr.bf16.mxu0 %v1104
        %1763 = vmatmul.mubr.bf16.gmra.mrb[0].mxu0 %v1102
        %v1764 = vpop.f32.mrb[0].mxu0
        %v1765 = vadd.f32 %v1327, %v1764
        %v1766 = vpop.f32.mrb[0].mxu0
        %v1767 = vadd.f32 %v1331, %v1766
        %v1768 = vpop.f32.mrb[0].mxu0
        %v1769 = vadd.f32 %v1327, %v1768
        %v1770 = vpop.f32.mrb[0].mxu0
        %v1771 = vadd.f32 %v1331, %v1770
        %1772 = vmatprep.mubr.bf16.mxu0 %v837
        %1773 = vmatmul.mubr.bf16.gmra.mrb[0].mxu0 %v832
        %v1774 = vpop.f32.mrb[0].mxu0
        %v1775 = vadd.f32 %v1327, %v1774
        %v1776 = vpop.f32.mrb[0].mxu0
        %v1777 = vadd.f32 %v1331, %v1776
        %v1778 = vpop.f32.mrb[0].mxu0
        %v1779 = vadd.f32 %v1327, %v1778
        %v1780 = vpop.f32.mrb[0].mxu0
        %v1781 = vadd.f32 %v1331, %v1780
        %1782 = vmatprep.mubr.bf16.mxu0 %v1224
        %1783 = vmatmul.mubr.bf16.gmra.mrb[0].mxu0 %v1221
        %v1784 = vpop.f32.mrb[0].mxu0
        %v1785 = vadd.f32 %v1327, %v1784
        %v1786 = vpop.f32.mrb[0].mxu0
        %v1787 = vadd.f32 %v1331, %v1786
        %v1788 = vpop.f32.mrb[0].mxu0
        %v1789 = vadd.f32 %v1327, %v1788
        %v1790 = vpop.f32.mrb[0].mxu0
        %v1791 = vadd.f32 %v1331, %v1790
        %1792 = vmatprep.mubr.bf16.mxu0 %v1125
        %1793 = vmatmul.mubr.bf16.gmra.mrb[0].mxu0 %v1123
        %v1794 = vpop.f32.mrb[0].mxu0
        %v1795 = vadd.f32 %v1327, %v1794
        %v1796 = vpop.f32.mrb[0].mxu0
        %v1797 = vadd.f32 %v1331, %v1796
        %v1798 = vpop.f32.mrb[0].mxu0
        %v1799 = vadd.f32 %v1327, %v1798
        %v1800 = vpop.f32.mrb[0].mxu0
        %v1801 = vadd.f32 %v1331, %v1800
        %1802 = vmatprep.mubr.bf16.mxu0 %v1238
        %1803 = vmatmul.mubr.bf16.gmra.mrb[0].mxu0 %v1234
        %v1804 = vpop.f32.mrb[0].mxu0
        %v1805 = vadd.f32 %v1327, %v1804
        %v1806 = vpop.f32.mrb[0].mxu0
        %v1807 = vadd.f32 %v1331, %v1806
        %v1808 = vpop.f32.mrb[0].mxu0
        %v1809 = vadd.f32 %v1327, %v1808
        %v1810 = vpop.f32.mrb[0].mxu0
        %v1811 = vadd.f32 %v1331, %v1810
        %1812 = vmatprep.mubr.bf16.mxu0 %v1146
        %1813 = vmatmul.mubr.bf16.gmra.mrb[0].mxu0 %v1144
        %v1814 = vpop.f32.mrb[0].mxu0
        %v1815 = vadd.f32 %v1327, %v1814
        %v1816 = vpop.f32.mrb[0].mxu0
        %v1817 = vadd.f32 %v1331, %v1816
        %v1818 = vpop.f32.mrb[0].mxu0
        %v1819 = vadd.f32 %v1327, %v1818
        %v1820 = vpop.f32.mrb[0].mxu0
        %v1821 = vadd.f32 %v1331, %v1820
        %1822 = vmatprep.mubr.bf16.mxu0 %v1253
        %1823 = vmatmul.mubr.bf16.gmra.mrb[0].mxu0 %v1249
        %v1824 = vpop.f32.mrb[0].mxu0
        %v1825 = vadd.f32 %v1327, %v1824
        %v1826 = vpop.f32.mrb[0].mxu0
        %v1827 = vadd.f32 %v1331, %v1826
        %v1828 = vpop.f32.mrb[0].mxu0
        %v1829 = vadd.f32 %v1327, %v1828
        %v1830 = vpop.f32.mrb[0].mxu0
        %v1831 = vadd.f32 %v1331, %v1830
        %1832 = vmatprep.mubr.bf16.mxu0 %v1167
        %1833 = vmatmul.mubr.bf16.gmra.mrb[0].mxu0 %v1165
        %v1834 = vpop.f32.mrb[0].mxu0
        %v1835 = vadd.f32 %v1327, %v1834
        %v1836 = vpop.f32.mrb[0].mxu0
        %v1837 = vadd.f32 %v1331, %v1836
        %v1838 = vpop.f32.mrb[0].mxu0
        %v1839 = vadd.f32 %v1327, %v1838
        %v1840 = vpop.f32.mrb[0].mxu0
        %v1841 = vadd.f32 %v1331, %v1840
        %1842 = vdwg.mxu0
        %1843 = vmatprep.subr.bf16.mxu0 %v1547
        %1844 = vmatpush1.bf16.msra.mxu0 %v1546
        %1845 = vmatprep.subr.bf16.mxu0 %v1549
        %1846 = vmatpush1.bf16.msra.mxu0 %v1548
        %1847 = vmatprep.subr.bf16.mxu0 %v1551
        %1848 = vmatpush1.bf16.msra.mxu0 %v1550
        %1849 = vmatprep.subr.bf16.mxu0 %v1553
        %1850 = vmatpush1.bf16.msra.mxu0 %v1552
        %1851 = vmatprep.subr.bf16.mxu0 %v1555
        %1852 = vmatpush1.bf16.msra.mxu0 %v1554
        %1853 = vmatprep.subr.bf16.mxu0 %v1557
        %1854 = vmatpush1.bf16.msra.mxu0 %v1556
        %1855 = vmatprep.subr.bf16.mxu0 %v1559
        %1856 = vmatpush1.bf16.msra.mxu0 %v1558
        %1857 = vmatprep.subr.bf16.mxu0 %v1561
        %1858 = vmatpush1.bf16.msra.mxu0 %v1560
        %1859 = vmatprep.subr.bf16.mxu0 %v1563
        %1860 = vmatpush1.bf16.msra.mxu0 %v1562
        %1861 = vmatprep.subr.bf16.mxu0 %v1565
        %1862 = vmatpush1.bf16.msra.mxu0 %v1564
        %1863 = vmatprep.subr.bf16.mxu0 %v1567
        %1864 = vmatpush1.bf16.msra.mxu0 %v1566
        %1865 = vmatprep.subr.bf16.mxu0 %v1569
        %1866 = vmatpush1.bf16.msra.mxu0 %v1568
        %1867 = vmatprep.subr.bf16.mxu0 %v1571
        %1868 = vmatpush1.bf16.msra.mxu0 %v1570
        %1869 = vmatprep.subr.bf16.mxu0 %v1573
        %1870 = vmatpush1.bf16.msra.mxu0 %v1572
        %1871 = vmatprep.subr.bf16.mxu0 0
        %1872 = vmatpush1.bf16.msra.mxu0 0
        %1873 = vmatprep.subr.bf16.mxu0 0
        %1874 = vmatpush1.bf16.msra.mxu0 0
        %1875 = vmatprep.mubr.bf16.mxu0 %v1635
        %1876 = vmatmul.mubr.bf16.gmra.mrb[0].mxu0 %v571
        %v1877 = vpop.f32.mrb[0].mxu0
        %v1878 = vadd.f32 %v1705, %v1877
        %v1879 = vpop.f32.mrb[0].mxu0
        %v1880 = vadd.f32 %v1707, %v1879
        %v1881 = vpop.f32.mrb[0].mxu0
        %v1882 = vadd.f32 %v1709, %v1881
        %v1883 = vpop.f32.mrb[0].mxu0
        %v1884 = vadd.f32 %v1711, %v1883
        %1885 = vmatprep.mubr.bf16.mxu0 %v1637
        %1886 = vmatmul.mubr.bf16.gmra.mrb[0].mxu0 %v1183
        %v1887 = vpop.f32.mrb[0].mxu0
        %v1888 = vadd.f32 %v1715, %v1887
        %v1889 = vpop.f32.mrb[0].mxu0
        %v1890 = vadd.f32 %v1717, %v1889
        %v1891 = vpop.f32.mrb[0].mxu0
        %v1892 = vadd.f32 %v1719, %v1891
        %v1893 = vpop.f32.mrb[0].mxu0
        %v1894 = vadd.f32 %v1721, %v1893
        %1895 = vmatprep.mubr.bf16.mxu0 %v1640
        %1896 = vmatmul.mubr.bf16.gmra.mrb[0].mxu0 %v1062
        %v1897 = vpop.f32.mrb[0].mxu0
        %v1898 = vadd.f32 %v1725, %v1897
        %v1899 = vpop.f32.mrb[0].mxu0
        %v1900 = vadd.f32 %v1727, %v1899
        %v1901 = vpop.f32.mrb[0].mxu0
        %v1902 = vadd.f32 %v1729, %v1901
        %v1903 = vpop.f32.mrb[0].mxu0
        %v1904 = vadd.f32 %v1731, %v1903
        %1905 = vmatprep.mubr.bf16.mxu0 %v1642
        %1906 = vmatmul.mubr.bf16.gmra.mrb[0].mxu0 %v1199
        %v1907 = vpop.f32.mrb[0].mxu0
        %v1908 = vadd.f32 %v1735, %v1907
        %v1909 = vpop.f32.mrb[0].mxu0
        %v1910 = vadd.f32 %v1737, %v1909
        %v1911 = vpop.f32.mrb[0].mxu0
        %v1912 = vadd.f32 %v1739, %v1911
        %v1913 = vpop.f32.mrb[0].mxu0
        %v1914 = vadd.f32 %v1741, %v1913
        %1915 = vmatprep.mubr.bf16.mxu0 %v1645
        %1916 = vmatmul.mubr.bf16.gmra.mrb[0].mxu0 %v1084
        %v1917 = vpop.f32.mrb[0].mxu0
        %v1918 = vadd.f32 %v1745, %v1917
        %v1919 = vpop.f32.mrb[0].mxu0
        %v1920 = vadd.f32 %v1747, %v1919
        %v1921 = vpop.f32.mrb[0].mxu0
        %v1922 = vadd.f32 %v1749, %v1921
        %v1923 = vpop.f32.mrb[0].mxu0
        %v1924 = vadd.f32 %v1751, %v1923
        %1925 = vmatprep.mubr.bf16.mxu0 %v1647
        %1926 = vmatmul.mubr.bf16.gmra.mrb[0].mxu0 %v1215
        %v1927 = vpop.f32.mrb[0].mxu0
        %v1928 = vadd.f32 %v1755, %v1927
        %v1929 = vpop.f32.mrb[0].mxu0
        %v1930 = vadd.f32 %v1757, %v1929
        %v1931 = vpop.f32.mrb[0].mxu0
        %v1932 = vadd.f32 %v1759, %v1931
        %v1933 = vpop.f32.mrb[0].mxu0
        %v1934 = vadd.f32 %v1761, %v1933
        %1935 = vmatprep.mubr.bf16.mxu0 %v1650
        %1936 = vmatmul.mubr.bf16.gmra.mrb[0].mxu0 %v1106
        %v1937 = vpop.f32.mrb[0].mxu0
        %v1938 = vadd.f32 %v1765, %v1937
        %v1939 = vpop.f32.mrb[0].mxu0
        %v1940 = vadd.f32 %v1767, %v1939
        %v1941 = vpop.f32.mrb[0].mxu0
        %v1942 = vadd.f32 %v1769, %v1941
        %v1943 = vpop.f32.mrb[0].mxu0
        %v1944 = vadd.f32 %v1771, %v1943
        %1945 = vmatprep.mubr.bf16.mxu0 %v1653
        %1946 = vmatmul.mubr.bf16.gmra.mrb[0].mxu0 %v842
        %v1947 = vpop.f32.mrb[0].mxu0
        %v1948 = vadd.f32 %v1775, %v1947
        %v1949 = vpop.f32.mrb[0].mxu0
        %v1950 = vadd.f32 %v1777, %v1949
        %v1951 = vpop.f32.mrb[0].mxu0
        %v1952 = vadd.f32 %v1779, %v1951
        %v1953 = vpop.f32.mrb[0].mxu0
        %v1954 = vadd.f32 %v1781, %v1953
        %1955 = vmatprep.mubr.bf16.mxu0 %v1655
        %1956 = vmatmul.mubr.bf16.gmra.mrb[0].mxu0 %v1227
        %v1957 = vpop.f32.mrb[0].mxu0
        %v1958 = vadd.f32 %v1785, %v1957
        %v1959 = vpop.f32.mrb[0].mxu0
        %v1960 = vadd.f32 %v1787, %v1959
        %v1961 = vpop.f32.mrb[0].mxu0
        %v1962 = vadd.f32 %v1789, %v1961
        %v1963 = vpop.f32.mrb[0].mxu0
        %v1964 = vadd.f32 %v1791, %v1963
        %1965 = vmatprep.mubr.bf16.mxu0 %v1658
        %1966 = vmatmul.mubr.bf16.gmra.mrb[0].mxu0 %v1127
        %v1967 = vpop.f32.mrb[0].mxu0
        %v1968 = vadd.f32 %v1795, %v1967
        %v1969 = vpop.f32.mrb[0].mxu0
        %v1970 = vadd.f32 %v1797, %v1969
        %v1971 = vpop.f32.mrb[0].mxu0
        %v1972 = vadd.f32 %v1799, %v1971
        %v1973 = vpop.f32.mrb[0].mxu0
        %v1974 = vadd.f32 %v1801, %v1973
        %1975 = vmatprep.mubr.bf16.mxu0 %v1660
        %1976 = vmatmul.mubr.bf16.gmra.mrb[0].mxu0 %v1242
        %v1977 = vpop.f32.mrb[0].mxu0
        %v1978 = vadd.f32 %v1805, %v1977
        %v1979 = vpop.f32.mrb[0].mxu0
        %v1980 = vadd.f32 %v1807, %v1979
        %v1981 = vpop.f32.mrb[0].mxu0
        %v1982 = vadd.f32 %v1809, %v1981
        %v1983 = vpop.f32.mrb[0].mxu0
        %v1984 = vadd.f32 %v1811, %v1983
        %1985 = vmatprep.mubr.bf16.mxu0 %v1663
        %1986 = vmatmul.mubr.bf16.gmra.mrb[0].mxu0 %v1148
        %v1987 = vpop.f32.mrb[0].mxu0
        %v1988 = vadd.f32 %v1815, %v1987
        %v1989 = vpop.f32.mrb[0].mxu0
        %v1990 = vadd.f32 %v1817, %v1989
        %v1991 = vpop.f32.mrb[0].mxu0
        %v1992 = vadd.f32 %v1819, %v1991
        %v1993 = vpop.f32.mrb[0].mxu0
        %v1994 = vadd.f32 %v1821, %v1993
        %1995 = vmatprep.mubr.bf16.mxu0 %v1665
        %1996 = vmatmul.mubr.bf16.gmra.mrb[0].mxu0 %v1257
        %v1997 = vpop.f32.mrb[0].mxu0
        %v1998 = vadd.f32 %v1825, %v1997
        %v1999 = vpop.f32.mrb[0].mxu0
        %v2000 = vadd.f32 %v1827, %v1999
        %v2001 = vpop.f32.mrb[0].mxu0
        %v2002 = vadd.f32 %v1829, %v2001
        %v2003 = vpop.f32.mrb[0].mxu0
        %v2004 = vadd.f32 %v1831, %v2003
        %2005 = vmatprep.mubr.bf16.mxu0 %v1668
        %2006 = vmatmul.mubr.bf16.gmra.mrb[0].mxu0 %v1169
        %v2007 = vpop.f32.mrb[0].mxu0
        %v2008 = vadd.f32 %v1835, %v2007
        %v2009 = vpop.f32.mrb[0].mxu0
        %v2010 = vadd.f32 %v1837, %v2009
        %v2011 = vpop.f32.mrb[0].mxu0
        %v2012 = vadd.f32 %v1839, %v2011
        %v2013 = vpop.f32.mrb[0].mxu0
        %v2014 = vadd.f32 %v1841, %v2013
        %2015 = vdwg.mxu0
        %v2016 = vmax.f32 %v1878, 0.0
        %v2017 = vmax.f32 %v1880, 0.0
        %v2018 = vmax.f32 %v1882, 0.0
        %v2019 = vmax.f32 %v1884, 0.0
        %v2020 = vmax.f32 %v1888, 0.0
        %v2021 = vmax.f32 %v1890, 0.0
        %v2022 = vmax.f32 %v1892, 0.0
        %v2023 = vmax.f32 %v1894, 0.0
        %v2024 = vmax.f32 %v1898, 0.0
        %v2025 = vmax.f32 %v1900, 0.0
        %v2026 = vmax.f32 %v1902, 0.0
        %v2027 = vmax.f32 %v1904, 0.0
        %v2028 = vmax.f32 %v1908, 0.0
        %v2029 = vmax.f32 %v1910, 0.0
        %v2030 = vmax.f32 %v1912, 0.0
        %v2031 = vmax.f32 %v1914, 0.0
        %v2032 = vmax.f32 %v1918, 0.0
        %v2033 = vmax.f32 %v1920, 0.0
        %v2034 = vmax.f32 %v1922, 0.0
        %v2035 = vmax.f32 %v1924, 0.0
        %v2036 = vmax.f32 %v1928, 0.0
        %v2037 = vmax.f32 %v1930, 0.0
        %v2038 = vmax.f32 %v1932, 0.0
        %v2039 = vmax.f32 %v1934, 0.0
        %v2040 = vmax.f32 %v1938, 0.0
        %v2041 = vmax.f32 %v1940, 0.0
        %v2042 = vmax.f32 %v1942, 0.0
        %v2043 = vmax.f32 %v1944, 0.0
        %v2044 = vmax.f32 %v1948, 0.0
        %v2045 = vmax.f32 %v1950, 0.0
        %v2046 = vmax.f32 %v1952, 0.0
        %v2047 = vmax.f32 %v1954, 0.0
        %v2048 = vmax.f32 %v1958, 0.0
        %v2049 = vmax.f32 %v1960, 0.0
        %v2050 = vmax.f32 %v1962, 0.0
        %v2051 = vmax.f32 %v1964, 0.0
        %v2052 = vmax.f32 %v1968, 0.0
        %v2053 = vmax.f32 %v1970, 0.0
        %v2054 = vmax.f32 %v1972, 0.0
        %v2055 = vmax.f32 %v1974, 0.0
        %v2056 = vmax.f32 %v1978, 0.0
        %v2057 = vmax.f32 %v1980, 0.0
        %v2058 = vmax.f32 %v1982, 0.0
        %v2059 = vmax.f32 %v1984, 0.0
        %v2060 = vmax.f32 %v1988, 0.0
        %v2061 = vmax.f32 %v1990, 0.0
        %v2062 = vmax.f32 %v1992, 0.0
        %v2063 = vmax.f32 %v1994, 0.0
        %v2064 = vmax.f32 %v1998, 0.0
        %v2065 = vmax.f32 %v2000, 0.0
        %v2066 = vmax.f32 %v2002, 0.0
        %v2067 = vmax.f32 %v2004, 0.0
        %v2068 = vmax.f32 %v2008, 0.0
        %v2069 = vmax.f32 %v2010, 0.0
        %v2070 = vmax.f32 %v2012, 0.0
        %v2071 = vmax.f32 %v2014, 0.0
        %v2072 = vpack.c.bf16 %v2018, %v2016
        %v2073 = vpack.c.bf16 %v2019, %v2017
        %v2074 = vpack.c.bf16 %v2022, %v2020
        %v2075 = vpack.c.bf16 %v2023, %v2021
        %v2076 = vpack.c.bf16 %v2026, %v2024
        %v2077 = vpack.c.bf16 %v2027, %v2025
        %v2078 = vpack.c.bf16 %v2030, %v2028
        %v2079 = vpack.c.bf16 %v2031, %v2029
        %v2080 = vpack.c.bf16 %v2034, %v2032
        %v2081 = vpack.c.bf16 %v2035, %v2033
        %v2082 = vpack.c.bf16 %v2038, %v2036
        %v2083 = vpack.c.bf16 %v2039, %v2037
        %v2084 = vpack.c.bf16 %v2042, %v2040
        %v2085 = vpack.c.bf16 %v2043, %v2041
        %v2086 = vpack.c.bf16 %v2046, %v2044
        %v2087 = vpack.c.bf16 %v2047, %v2045
        %v2088 = vpack.c.bf16 %v2050, %v2048
        %v2089 = vpack.c.bf16 %v2051, %v2049
        %v2090 = vpack.c.bf16 %v2054, %v2052
        %v2091 = vpack.c.bf16 %v2055, %v2053
        %v2092 = vpack.c.bf16 %v2058, %v2056
        %v2093 = vpack.c.bf16 %v2059, %v2057
        %v2094 = vpack.c.bf16 %v2062, %v2060
        %v2095 = vpack.c.bf16 %v2063, %v2061
        %v2096 = vpack.c.bf16 %v2066, %v2064
        %v2097 = vpack.c.bf16 %v2067, %v2065
        %v2098 = vpack.c.bf16 %v2070, %v2068
        %v2099 = vpack.c.bf16 %v2071, %v2069
        %v2100 = vld [vmem:[%s3] sm:$0xff]
        %v2101 = vld [vmem:[%s3 + $0x8] sm:$0xff]
        %v2102 = vld [vmem:[%s3 + $0x10] sm:$0xff]
        %v2103 = vld [vmem:[%s3 + $0x18] sm:$0xff]
        %v2104 = vld [vmem:[%s3 + $0x20] sm:$0xff]
        %v2105 = vld [vmem:[%s3 + $0x28] sm:$0xff]
        %v2106 = vld [vmem:[%s3 + $0x30] sm:$0xff]
        %v2107 = vld [vmem:[%s3 + $0x38] sm:$0xff]
        %v2108 = vld [vmem:[%s3 + $0x40] sm:$0xff]
        %v2109 = vld [vmem:[%s3 + $0x48] sm:$0xff]
        %v2110 = vld [vmem:[%s3 + $0x50] sm:$0xff]
        %v2111 = vld [vmem:[%s3 + $0x58] sm:$0xff]
        %v2112 = vld [vmem:[%s3 + $0x60] sm:$0xff]
        %v2113 = vld [vmem:[%s3 + $0x68] sm:$0xff]
        %v2114 = vld [vmem:[%s3 + $0x70] sm:$0xff]
        %v2115 = vld [vmem:[%s3 + $0x78] sm:$0xff]
        %v2116 = vld [vmem:[%s3 + $0x80] sm:$0xff]
        %v2117 = vld [vmem:[%s3 + $0x88] sm:$0xff]
        %v2118 = vld [vmem:[%s3 + $0x90] sm:$0xff]
        %v2119 = vld [vmem:[%s3 + $0x98] sm:$0xff]
        %v2120 = vld [vmem:[%s3 + $0xa0] sm:$0xff]
        %v2142 = vunpack.c.l.b16 %v2100
        %v2143 = vunpack.c.h.b16 %v2100
        %v2144 = vunpack.c.l.b16 %v2101
        %v2145 = vunpack.c.h.b16 %v2101
        %v2146 = vunpack.c.l.b16 %v2102
        %v2147 = vunpack.c.h.b16 %v2102
        %v2148 = vunpack.c.l.b16 %v2103
        %v2149 = vunpack.c.h.b16 %v2103
        %v2150 = vunpack.c.l.b16 %v2104
        %v2151 = vunpack.c.h.b16 %v2104
        %v2152 = vunpack.c.l.b16 %v2105
        %v2153 = vunpack.c.h.b16 %v2105
        %v2154 = vunpack.c.l.b16 %v2106
        %v2155 = vunpack.c.h.b16 %v2106
        %v2156 = vunpack.c.l.b16 %v2107
        %v2157 = vunpack.c.h.b16 %v2107
        %v2158 = vunpack.c.l.b16 %v2108
        %v2159 = vunpack.c.h.b16 %v2108
        %v2160 = vunpack.c.l.b16 %v2109
        %v2161 = vunpack.c.h.b16 %v2109
        %v2162 = vunpack.c.l.b16 %v2110
        %v2163 = vunpack.c.h.b16 %v2110
        %v2164 = vunpack.c.l.b16 %v2111
        %v2165 = vunpack.c.h.b16 %v2111
        %v2166 = vunpack.c.l.b16 %v2112
        %v2167 = vunpack.c.h.b16 %v2112
        %v2168 = vunpack.c.l.b16 %v2113
        %v2169 = vunpack.c.h.b16 %v2113
        %v2170 = vunpack.c.l.b16 %v2114
        %v2171 = vunpack.c.h.b16 %v2114
        %v2172 = vunpack.c.l.b16 %v2115
        %v2173 = vunpack.c.h.b16 %v2115
        %v2174 = vunpack.c.l.b16 %v2116
        %v2175 = vunpack.c.h.b16 %v2116
        %v2176 = vunpack.c.l.b16 %v2117
        %v2177 = vunpack.c.h.b16 %v2117
        %v2178 = vunpack.c.l.b16 %v2118
        %v2179 = vunpack.c.h.b16 %v2118
        %v2180 = vunpack.c.l.b16 %v2119
        %v2181 = vunpack.c.h.b16 %v2119
        %v2182 = vunpack.c.l.b16 %v2120
        %v2183 = vunpack.c.h.b16 %v2120
        %v2184 = vpack.c.b16 %v2144, %v2142
        %v2185 = vpack.c.b16 %v2145, %v2143
        %v2186 = vpack.c.b16 %v2148, %v2146
        %v2187 = vpack.c.b16 %v2149, %v2147
        %v2188 = vpack.c.b16 %v2152, %v2150
        %v2189 = vpack.c.b16 %v2153, %v2151
        %v2190 = vpack.c.b16 %v2156, %v2154
        %v2191 = vpack.c.b16 %v2157, %v2155
        %v2192 = vpack.c.b16 %v2160, %v2158
        %v2193 = vpack.c.b16 %v2161, %v2159
        %v2194 = vpack.c.b16 %v2164, %v2162
        %v2195 = vpack.c.b16 %v2165, %v2163
        %v2196 = vpack.c.b16 %v2168, %v2166
        %v2197 = vpack.c.b16 %v2169, %v2167
        %v2198 = vpack.c.b16 %v2172, %v2170
        %v2199 = vpack.c.b16 %v2173, %v2171
        %v2200 = vpack.c.b16 %v2176, %v2174
        %v2201 = vpack.c.b16 %v2177, %v2175
        %v2202 = vpack.c.b16 %v2180, %v2178
        %v2203 = vpack.c.b16 %v2181, %v2179
        %v2204 = vpack.c.b16 %v2182, %v2182
        %v2205 = vpack.c.b16 %v2183, %v2183
        %vm2226 = vcmask 326656
        %v2228 = vsel %vm2226, %v2073, 0
        %v2231 = vsel %vm2226, %v2075, 0
        %v2234 = vsel %vm2226, %v2077, 0
        %v2237 = vsel %vm2226, %v2079, 0
        %v2240 = vsel %vm2226, %v2081, 0
        %v2243 = vsel %vm2226, %v2083, 0
        %v2246 = vsel %vm2226, %v2085, 0
        %v2249 = vsel %vm2226, %v2087, 0
        %v2252 = vsel %vm2226, %v2089, 0
        %v2255 = vsel %vm2226, %v2091, 0
        %v2258 = vsel %vm2226, %v2093, 0
        %v2261 = vsel %vm2226, %v2095, 0
        %v2264 = vsel %vm2226, %v2097, 0
        %v2267 = vsel %vm2226, %v2099, 0
        %v2270 = vsel %vm1188, %v2204, 0
        %v2273 = vsel %vm1188, %v2205, 0
        %2275 = vmatprep.subr.bf16.mxu0 %v2185
        %2276 = vmatpush1.bf16.msra.mxu0 %v2184
        %2277 = vmatprep.subr.bf16.mxu0 %v2187
        %2278 = vmatpush1.bf16.msra.mxu0 %v2186
        %2279 = vmatprep.subr.bf16.mxu0 %v2189
        %2280 = vmatpush1.bf16.msra.mxu0 %v2188
        %2281 = vmatprep.subr.bf16.mxu0 %v2191
        %2282 = vmatpush1.bf16.msra.mxu0 %v2190
        %2283 = vmatprep.subr.bf16.mxu0 %v2193
        %2284 = vmatpush1.bf16.msra.mxu0 %v2192
        %2285 = vmatprep.subr.bf16.mxu0 %v2195
        %2286 = vmatpush1.bf16.msra.mxu0 %v2194
        %2287 = vmatprep.subr.bf16.mxu0 %v2197
        %2288 = vmatpush1.bf16.msra.mxu0 %v2196
        %2289 = vmatprep.subr.bf16.mxu0 %v2199
        %2290 = vmatpush1.bf16.msra.mxu0 %v2198
        %2291 = vmatprep.subr.bf16.mxu0 %v2201
        %2292 = vmatpush1.bf16.msra.mxu0 %v2200
        %2293 = vmatprep.subr.bf16.mxu0 %v2203
        %2294 = vmatpush1.bf16.msra.mxu0 %v2202
        %2295 = vmatprep.subr.bf16.mxu0 %v2273
        %2296 = vmatpush1.bf16.msra.mxu0 %v2270
        %2297 = vmatprep.subr.bf16.mxu0 0
        %2298 = vmatpush1.bf16.msra.mxu0 0
        %2299 = vmatprep.subr.bf16.mxu0 0
        %2300 = vmatpush1.bf16.msra.mxu0 0
        %2301 = vmatprep.subr.bf16.mxu0 0
        %2302 = vmatpush1.bf16.msra.mxu0 0
        %2303 = vmatprep.subr.bf16.mxu0 0
        %2304 = vmatpush1.bf16.msra.mxu0 0
        %2305 = vmatprep.subr.bf16.mxu0 0
        %2306 = vmatpush1.bf16.msra.mxu0 0
        %2307 = vmatprep.mubr.bf16.mxu0 %v2228
        %2308 = vmatmul.mubr.bf16.gmra.mrb[0].mxu0 %v2072
        %v2309 = vpop.f32.mrb[0].mxu0
        %v2310 = vadd.f32 0.0, %v2309
        %v2311 = vpop.f32.mrb[0].mxu0
        %v2312 = vadd.f32 0.0, %v2311
        %v2313 = vpop.f32.mrb[0].mxu0
        %v2314 = vadd.f32 0.0, %v2313
        %v2315 = vpop.f32.mrb[0].mxu0
        %v2316 = vadd.f32 0.0, %v2315
        %2317 = vmatprep.mubr.bf16.mxu0 %v2231
        %2318 = vmatmul.mubr.bf16.gmra.mrb[0].mxu0 %v2074
        %v2319 = vpop.f32.mrb[0].mxu0
        %v2320 = vadd.f32 0.0, %v2319
        %v2321 = vpop.f32.mrb[0].mxu0
        %v2322 = vadd.f32 0.0, %v2321
        %v2323 = vpop.f32.mrb[0].mxu0
        %v2324 = vadd.f32 0.0, %v2323
        %v2325 = vpop.f32.mrb[0].mxu0
        %v2326 = vadd.f32 0.0, %v2325
        %2327 = vmatprep.mubr.bf16.mxu0 %v2234
        %2328 = vmatmul.mubr.bf16.gmra.mrb[0].mxu0 %v2076
        %v2329 = vpop.f32.mrb[0].mxu0
        %v2330 = vadd.f32 0.0, %v2329
        %v2331 = vpop.f32.mrb[0].mxu0
        %v2332 = vadd.f32 0.0, %v2331
        %v2333 = vpop.f32.mrb[0].mxu0
        %v2334 = vadd.f32 0.0, %v2333
        %v2335 = vpop.f32.mrb[0].mxu0
        %v2336 = vadd.f32 0.0, %v2335
        %2337 = vmatprep.mubr.bf16.mxu0 %v2237
        %2338 = vmatmul.mubr.bf16.gmra.mrb[0].mxu0 %v2078
        %v2339 = vpop.f32.mrb[0].mxu0
        %v2340 = vadd.f32 0.0, %v2339
        %v2341 = vpop.f32.mrb[0].mxu0
        %v2342 = vadd.f32 0.0, %v2341
        %v2343 = vpop.f32.mrb[0].mxu0
        %v2344 = vadd.f32 0.0, %v2343
        %v2345 = vpop.f32.mrb[0].mxu0
        %v2346 = vadd.f32 0.0, %v2345
        %2347 = vmatprep.mubr.bf16.mxu0 %v2240
        %2348 = vmatmul.mubr.bf16.gmra.mrb[0].mxu0 %v2080
        %v2349 = vpop.f32.mrb[0].mxu0
        %v2350 = vadd.f32 0.0, %v2349
        %v2351 = vpop.f32.mrb[0].mxu0
        %v2352 = vadd.f32 0.0, %v2351
        %v2353 = vpop.f32.mrb[0].mxu0
        %v2354 = vadd.f32 0.0, %v2353
        %v2355 = vpop.f32.mrb[0].mxu0
        %v2356 = vadd.f32 0.0, %v2355
        %2357 = vmatprep.mubr.bf16.mxu0 %v2243
        %2358 = vmatmul.mubr.bf16.gmra.mrb[0].mxu0 %v2082
        %v2359 = vpop.f32.mrb[0].mxu0
        %v2360 = vadd.f32 0.0, %v2359
        %v2361 = vpop.f32.mrb[0].mxu0
        %v2362 = vadd.f32 0.0, %v2361
        %v2363 = vpop.f32.mrb[0].mxu0
        %v2364 = vadd.f32 0.0, %v2363
        %v2365 = vpop.f32.mrb[0].mxu0
        %v2366 = vadd.f32 0.0, %v2365
        %2367 = vmatprep.mubr.bf16.mxu0 %v2246
        %2368 = vmatmul.mubr.bf16.gmra.mrb[0].mxu0 %v2084
        %v2369 = vpop.f32.mrb[0].mxu0
        %v2370 = vadd.f32 0.0, %v2369
        %v2371 = vpop.f32.mrb[0].mxu0
        %v2372 = vadd.f32 0.0, %v2371
        %v2373 = vpop.f32.mrb[0].mxu0
        %v2374 = vadd.f32 0.0, %v2373
        %v2375 = vpop.f32.mrb[0].mxu0
        %v2376 = vadd.f32 0.0, %v2375
        %2377 = vmatprep.mubr.bf16.mxu0 %v2249
        %2378 = vmatmul.mubr.bf16.gmra.mrb[0].mxu0 %v2086
        %v2379 = vpop.f32.mrb[0].mxu0
        %v2380 = vadd.f32 0.0, %v2379
        %v2381 = vpop.f32.mrb[0].mxu0
        %v2382 = vadd.f32 0.0, %v2381
        %v2383 = vpop.f32.mrb[0].mxu0
        %v2384 = vadd.f32 0.0, %v2383
        %v2385 = vpop.f32.mrb[0].mxu0
        %v2386 = vadd.f32 0.0, %v2385
        %2387 = vmatprep.mubr.bf16.mxu0 %v2252
        %2388 = vmatmul.mubr.bf16.gmra.mrb[0].mxu0 %v2088
        %v2389 = vpop.f32.mrb[0].mxu0
        %v2390 = vadd.f32 0.0, %v2389
        %v2391 = vpop.f32.mrb[0].mxu0
        %v2392 = vadd.f32 0.0, %v2391
        %v2393 = vpop.f32.mrb[0].mxu0
        %v2394 = vadd.f32 0.0, %v2393
        %v2395 = vpop.f32.mrb[0].mxu0
        %v2396 = vadd.f32 0.0, %v2395
        %2397 = vmatprep.mubr.bf16.mxu0 %v2255
        %2398 = vmatmul.mubr.bf16.gmra.mrb[0].mxu0 %v2090
        %v2399 = vpop.f32.mrb[0].mxu0
        %v2400 = vadd.f32 0.0, %v2399
        %v2401 = vpop.f32.mrb[0].mxu0
        %v2402 = vadd.f32 0.0, %v2401
        %v2403 = vpop.f32.mrb[0].mxu0
        %v2404 = vadd.f32 0.0, %v2403
        %v2405 = vpop.f32.mrb[0].mxu0
        %v2406 = vadd.f32 0.0, %v2405
        %2407 = vmatprep.mubr.bf16.mxu0 %v2258
        %2408 = vmatmul.mubr.bf16.gmra.mrb[0].mxu0 %v2092
        %v2409 = vpop.f32.mrb[0].mxu0
        %v2410 = vadd.f32 0.0, %v2409
        %v2411 = vpop.f32.mrb[0].mxu0
        %v2412 = vadd.f32 0.0, %v2411
        %v2413 = vpop.f32.mrb[0].mxu0
        %v2414 = vadd.f32 0.0, %v2413
        %v2415 = vpop.f32.mrb[0].mxu0
        %v2416 = vadd.f32 0.0, %v2415
        %2417 = vmatprep.mubr.bf16.mxu0 %v2261
        %2418 = vmatmul.mubr.bf16.gmra.mrb[0].mxu0 %v2094
        %v2419 = vpop.f32.mrb[0].mxu0
        %v2420 = vadd.f32 0.0, %v2419
        %v2421 = vpop.f32.mrb[0].mxu0
        %v2422 = vadd.f32 0.0, %v2421
        %v2423 = vpop.f32.mrb[0].mxu0
        %v2424 = vadd.f32 0.0, %v2423
        %v2425 = vpop.f32.mrb[0].mxu0
        %v2426 = vadd.f32 0.0, %v2425
        %2427 = vmatprep.mubr.bf16.mxu0 %v2264
        %2428 = vmatmul.mubr.bf16.gmra.mrb[0].mxu0 %v2096
        %v2429 = vpop.f32.mrb[0].mxu0
        %v2430 = vadd.f32 0.0, %v2429
        %v2431 = vpop.f32.mrb[0].mxu0
        %v2432 = vadd.f32 0.0, %v2431
        %v2433 = vpop.f32.mrb[0].mxu0
        %v2434 = vadd.f32 0.0, %v2433
        %v2435 = vpop.f32.mrb[0].mxu0
        %v2436 = vadd.f32 0.0, %v2435
        %2437 = vmatprep.mubr.bf16.mxu0 %v2267
        %2438 = vmatmul.mubr.bf16.gmra.mrb[0].mxu0 %v2098
        %v2439 = vpop.f32.mrb[0].mxu0
        %v2440 = vadd.f32 0.0, %v2439
        %v2441 = vpop.f32.mrb[0].mxu0
        %v2442 = vadd.f32 0.0, %v2441
        %v2443 = vpop.f32.mrb[0].mxu0
        %v2444 = vadd.f32 0.0, %v2443
        %v2445 = vpop.f32.mrb[0].mxu0
        %v2446 = vadd.f32 0.0, %v2445
        %2447 = vdwg.mxu0
        %2504 = vrot.lane.b32.xlu0 %v2310, 44
        %v2505 = vpop.permute.xlu0 %2504
        %2506 = vrot.lane.b32.xlu0 %v2312, 44
        %v2507 = vpop.permute.xlu0 %2506
        %2508 = vrot.lane.b32.xlu0 %v2314, 44
        %v2509 = vpop.permute.xlu0 %2508
        %2510 = vrot.lane.b32.xlu0 %v2316, 44
        %v2511 = vpop.permute.xlu0 %2510
        %2512 = vrot.lane.b32.xlu0 %v2320, 44
        %v2513 = vpop.permute.xlu0 %2512
        %2514 = vrot.lane.b32.xlu0 %v2322, 44
        %v2515 = vpop.permute.xlu0 %2514
        %2516 = vrot.lane.b32.xlu0 %v2324, 44
        %v2517 = vpop.permute.xlu0 %2516
        %2518 = vrot.lane.b32.xlu0 %v2326, 44
        %v2519 = vpop.permute.xlu0 %2518
        %2520 = vrot.lane.b32.xlu0 %v2330, 44
        %v2521 = vpop.permute.xlu0 %2520
        %2522 = vrot.lane.b32.xlu0 %v2332, 44
        %v2523 = vpop.permute.xlu0 %2522
        %2524 = vrot.lane.b32.xlu0 %v2334, 44
        %v2525 = vpop.permute.xlu0 %2524
        %2526 = vrot.lane.b32.xlu0 %v2336, 44
        %v2527 = vpop.permute.xlu0 %2526
        %2528 = vrot.lane.b32.xlu0 %v2340, 44
        %v2529 = vpop.permute.xlu0 %2528
        %2530 = vrot.lane.b32.xlu0 %v2342, 44
        %v2531 = vpop.permute.xlu0 %2530
        %2532 = vrot.lane.b32.xlu0 %v2344, 44
        %v2533 = vpop.permute.xlu0 %2532
        %2534 = vrot.lane.b32.xlu0 %v2346, 44
        %v2535 = vpop.permute.xlu0 %2534
        %2536 = vrot.lane.b32.xlu0 %v2350, 44
        %v2537 = vpop.permute.xlu0 %2536
        %2538 = vrot.lane.b32.xlu0 %v2352, 44
        %v2539 = vpop.permute.xlu0 %2538
        %2540 = vrot.lane.b32.xlu0 %v2354, 44
        %v2541 = vpop.permute.xlu0 %2540
        %2542 = vrot.lane.b32.xlu0 %v2356, 44
        %v2543 = vpop.permute.xlu0 %2542
        %2544 = vrot.lane.b32.xlu0 %v2360, 44
        %v2545 = vpop.permute.xlu0 %2544
        %2546 = vrot.lane.b32.xlu0 %v2362, 44
        %v2547 = vpop.permute.xlu0 %2546
        %2548 = vrot.lane.b32.xlu0 %v2364, 44
        %v2549 = vpop.permute.xlu0 %2548
        %2550 = vrot.lane.b32.xlu0 %v2366, 44
        %v2551 = vpop.permute.xlu0 %2550
        %2552 = vrot.lane.b32.xlu0 %v2370, 44
        %v2553 = vpop.permute.xlu0 %2552
        %2554 = vrot.lane.b32.xlu0 %v2372, 44
        %v2555 = vpop.permute.xlu0 %2554
        %2556 = vrot.lane.b32.xlu0 %v2374, 44
        %v2557 = vpop.permute.xlu0 %2556
        %2558 = vrot.lane.b32.xlu0 %v2376, 44
        %v2559 = vpop.permute.xlu0 %2558
        %2560 = vrot.lane.b32.xlu0 %v2380, 44
        %v2561 = vpop.permute.xlu0 %2560
        %2562 = vrot.lane.b32.xlu0 %v2382, 44
        %v2563 = vpop.permute.xlu0 %2562
        %2564 = vrot.lane.b32.xlu0 %v2384, 44
        %v2565 = vpop.permute.xlu0 %2564
        %2566 = vrot.lane.b32.xlu0 %v2386, 44
        %v2567 = vpop.permute.xlu0 %2566
        %2568 = vrot.lane.b32.xlu0 %v2390, 44
        %v2569 = vpop.permute.xlu0 %2568
        %2570 = vrot.lane.b32.xlu0 %v2392, 44
        %v2571 = vpop.permute.xlu0 %2570
        %2572 = vrot.lane.b32.xlu0 %v2394, 44
        %v2573 = vpop.permute.xlu0 %2572
        %2574 = vrot.lane.b32.xlu0 %v2396, 44
        %v2575 = vpop.permute.xlu0 %2574
        %2576 = vrot.lane.b32.xlu0 %v2400, 44
        %v2577 = vpop.permute.xlu0 %2576
        %2578 = vrot.lane.b32.xlu0 %v2402, 44
        %v2579 = vpop.permute.xlu0 %2578
        %2580 = vrot.lane.b32.xlu0 %v2404, 44
        %v2581 = vpop.permute.xlu0 %2580
        %2582 = vrot.lane.b32.xlu0 %v2406, 44
        %v2583 = vpop.permute.xlu0 %2582
        %2584 = vrot.lane.b32.xlu0 %v2410, 44
        %v2585 = vpop.permute.xlu0 %2584
        %2586 = vrot.lane.b32.xlu0 %v2412, 44
        %v2587 = vpop.permute.xlu0 %2586
        %2588 = vrot.lane.b32.xlu0 %v2414, 44
        %v2589 = vpop.permute.xlu0 %2588
        %2590 = vrot.lane.b32.xlu0 %v2416, 44
        %v2591 = vpop.permute.xlu0 %2590
        %2592 = vrot.lane.b32.xlu0 %v2420, 44
        %v2593 = vpop.permute.xlu0 %2592
        %2594 = vrot.lane.b32.xlu0 %v2422, 44
        %v2595 = vpop.permute.xlu0 %2594
        %2596 = vrot.lane.b32.xlu0 %v2424, 44
        %v2597 = vpop.permute.xlu0 %2596
        %2598 = vrot.lane.b32.xlu0 %v2426, 44
        %v2599 = vpop.permute.xlu0 %2598
        %2600 = vrot.lane.b32.xlu0 %v2430, 44
        %v2601 = vpop.permute.xlu0 %2600
        %2602 = vrot.lane.b32.xlu0 %v2432, 44
        %v2603 = vpop.permute.xlu0 %2602
        %2604 = vrot.lane.b32.xlu0 %v2434, 44
        %v2605 = vpop.permute.xlu0 %2604
        %2606 = vrot.lane.b32.xlu0 %v2436, 44
        %v2607 = vpop.permute.xlu0 %2606
        %2608 = vrot.lane.b32.xlu0 %v2440, 44
        %v2609 = vpop.permute.xlu0 %2608
        %2610 = vrot.lane.b32.xlu0 %v2442, 44
        %v2611 = vpop.permute.xlu0 %2610
        %2612 = vrot.lane.b32.xlu0 %v2444, 44
        %v2613 = vpop.permute.xlu0 %2612
        %2614 = vrot.lane.b32.xlu0 %v2446, 44
        %v2615 = vpop.permute.xlu0 %2614
        %vm2616 = vcmask 359424
        %v2617 = vsel %vm2616, %v2505, %v2507
        %v2618 = vsel %vm2616, %v2509, %v2511
        %v2619 = vsel %vm2616, %v2513, %v2515
        %v2620 = vsel %vm2616, %v2517, %v2519
        %v2621 = vsel %vm2616, %v2521, %v2523
        %v2622 = vsel %vm2616, %v2525, %v2527
        %v2623 = vsel %vm2616, %v2529, %v2531
        %v2624 = vsel %vm2616, %v2533, %v2535
        %v2625 = vsel %vm2616, %v2537, %v2539
        %v2626 = vsel %vm2616, %v2541, %v2543
        %v2627 = vsel %vm2616, %v2545, %v2547
        %v2628 = vsel %vm2616, %v2549, %v2551
        %v2629 = vsel %vm2616, %v2553, %v2555
        %v2630 = vsel %vm2616, %v2557, %v2559
        %v2631 = vsel %vm2616, %v2561, %v2563
        %v2632 = vsel %vm2616, %v2565, %v2567
        %v2633 = vsel %vm2616, %v2569, %v2571
        %v2634 = vsel %vm2616, %v2573, %v2575
        %v2635 = vsel %vm2616, %v2577, %v2579
        %v2636 = vsel %vm2616, %v2581, %v2583
        %v2637 = vsel %vm2616, %v2585, %v2587
        %v2638 = vsel %vm2616, %v2589, %v2591
        %v2639 = vsel %vm2616, %v2593, %v2595
        %v2640 = vsel %vm2616, %v2597, %v2599
        %v2641 = vsel %vm2616, %v2601, %v2603
        %v2642 = vsel %vm2616, %v2605, %v2607
        %v2643 = vsel %vm2616, %v2609, %v2611
        %v2644 = vsel %vm2616, %v2613, %v2615
        %v2673 = vmax.f32 %v2310, %v2617
        %v2674 = vmax.f32 %v2314, %v2618
        %v2675 = vmax.f32 %v2320, %v2619
        %v2676 = vmax.f32 %v2324, %v2620
        %v2677 = vmax.f32 %v2330, %v2621
        %v2678 = vmax.f32 %v2334, %v2622
        %v2679 = vmax.f32 %v2340, %v2623
        %v2680 = vmax.f32 %v2344, %v2624
        %v2681 = vmax.f32 %v2350, %v2625
        %v2682 = vmax.f32 %v2354, %v2626
        %v2683 = vmax.f32 %v2360, %v2627
        %v2684 = vmax.f32 %v2364, %v2628
        %v2685 = vmax.f32 %v2370, %v2629
        %v2686 = vmax.f32 %v2374, %v2630
        %v2687 = vmax.f32 %v2380, %v2631
        %v2688 = vmax.f32 %v2384, %v2632
        %v2689 = vmax.f32 %v2390, %v2633
        %v2690 = vmax.f32 %v2394, %v2634
        %v2691 = vmax.f32 %v2400, %v2635
        %v2692 = vmax.f32 %v2404, %v2636
        %v2693 = vmax.f32 %v2410, %v2637
        %v2694 = vmax.f32 %v2414, %v2638
        %v2695 = vmax.f32 %v2420, %v2639
        %v2696 = vmax.f32 %v2424, %v2640
        %v2697 = vmax.f32 %v2430, %v2641
        %v2698 = vmax.f32 %v2434, %v2642
        %v2699 = vmax.f32 %v2440, %v2643
        %v2700 = vmax.f32 %v2444, %v2644
        %v2701 = vpack.c.bf16 %v2674, %v2673
        %v2702 = vpack.c.bf16 %v2676, %v2675
        %v2703 = vpack.c.bf16 %v2678, %v2677
        %v2704 = vpack.c.bf16 %v2680, %v2679
        %v2705 = vpack.c.bf16 %v2682, %v2681
        %v2706 = vpack.c.bf16 %v2684, %v2683
        %v2707 = vpack.c.bf16 %v2686, %v2685
        %v2708 = vpack.c.bf16 %v2688, %v2687
        %v2709 = vpack.c.bf16 %v2690, %v2689
        %v2710 = vpack.c.bf16 %v2692, %v2691
        %v2711 = vpack.c.bf16 %v2694, %v2693
        %v2712 = vpack.c.bf16 %v2696, %v2695
        %v2713 = vpack.c.bf16 %v2698, %v2697
        %v2714 = vpack.c.bf16 %v2700, %v2699
        %v2715 = vld [vmem:[%s4] sm:$0xf]
        %v2716 = vld [vmem:[%s4 + $0x4] sm:$0xf]
        %v2717 = vld [vmem:[%s4 + $0x8] sm:$0xf]
        %v2718 = vld [vmem:[%s4 + $0xc] sm:$0x3]
        %v2723 = vunpack.c.l.b16 %v2715
        %v2724 = vunpack.c.l.b16 %v2716
        %v2725 = vunpack.c.l.b16 %v2717
        %v2726 = vunpack.c.l.b16 %v2718
        %v2727 = vpack.c.b16 %v2724, %v2723
        %v2728 = vpack.c.b16 %v2726, %v2725
        %vm2729 = vcmask 228352
        %v2731 = vsel %vm2729, %v2727, 0
        %v2734 = vsel %vm2729, %v2728, 0
        %v2737 = vsel %vm1175, %v2702, 0
        %2739 = vmatprep.subr.bf16.mxu0 0
        %2740 = vmatpush1.bf16.msra.mxu0 %v2701
        %2741 = vmatprep.subr.bf16.mxu0 0
        %2742 = vmatpush1.bf16.msra.mxu0 %v2737
        %2743 = vmatprep.subr.bf16.mxu0 0
        %2744 = vmatpush1.bf16.msra.mxu0 0
        %2745 = vmatprep.subr.bf16.mxu0 0
        %2746 = vmatpush1.bf16.msra.mxu0 0
        %2747 = vmatprep.subr.bf16.mxu0 0
        %2748 = vmatpush1.bf16.msra.mxu0 0
        %2749 = vmatprep.subr.bf16.mxu0 0
        %2750 = vmatpush1.bf16.msra.mxu0 0
        %2751 = vmatprep.subr.bf16.mxu0 0
        %2752 = vmatpush1.bf16.msra.mxu0 0
        %2753 = vmatprep.subr.bf16.mxu0 0
        %2754 = vmatpush1.bf16.msra.mxu0 0
        %2755 = vmatprep.subr.bf16.mxu0 0
        %2756 = vmatpush1.bf16.msra.mxu0 0
        %2757 = vmatprep.subr.bf16.mxu0 0
        %2758 = vmatpush1.bf16.msra.mxu0 0
        %2759 = vmatprep.subr.bf16.mxu0 0
        %2760 = vmatpush1.bf16.msra.mxu0 0
        %2761 = vmatprep.subr.bf16.mxu0 0
        %2762 = vmatpush1.bf16.msra.mxu0 0
        %2763 = vmatprep.subr.bf16.mxu0 0
        %2764 = vmatpush1.bf16.msra.mxu0 0
        %2765 = vmatprep.subr.bf16.mxu0 0
        %2766 = vmatpush1.bf16.msra.mxu0 0
        %2767 = vmatprep.subr.bf16.mxu0 0
        %2768 = vmatpush1.bf16.msra.mxu0 0
        %2769 = vmatprep.subr.bf16.mxu0 0
        %2770 = vmatpush1.bf16.msra.mxu0 0
        %2771 = vmatprep.mubr.bf16.mxu0 0
        %2772 = vmatmul.mubr.bf16.gmra.mrb[0].mxu0 %v2731
        %v2773 = vpop.f32.mrb[0].mxu0
        %v2774 = vadd.f32 0.0, %v2773
        %v2775 = vpop.f32.mrb[0].mxu0
        %v2776 = vpop.f32.mrb[0].mxu0
        %v2777 = vadd.f32 0.0, %v2776
        %v2778 = vpop.f32.mrb[0].mxu0
        %2779 = vmatprep.mubr.bf16.mxu0 0
        %2780 = vmatmul.mubr.bf16.gmra.mrb[0].mxu0 %v2734
        %v2781 = vpop.f32.mrb[0].mxu0
        %v2782 = vadd.f32 0.0, %v2781
        %v2783 = vpop.f32.mrb[0].mxu0
        %v2784 = vpop.f32.mrb[0].mxu0
        %v2785 = vadd.f32 0.0, %v2784
        %v2786 = vpop.f32.mrb[0].mxu0
        %2787 = vdwg.mxu0
        %v2791 = vrot.slane %v2777, 6
        %v2792 = vrot.slane %v2782, 6
        %v2793 = vsel %vm1204, %v2791, %v2792
        %v2794 = vrot.slane %v2785, 6
        %v2795 = vsel %vm1204, %v2792, %v2794
        %v2798 = vmax.f32 %v2774, %v2793
        %v2799 = vmax.f32 %v2777, %v2795
        %v2800 = vpack.c.bf16 %v2799, %v2798
        %v2802 = vshrl.u32 %v2800, 16
        %v2804 = vshll.u32 %v2800, 16
        %v2806 = vrot.slane %v2804, 1
        %v2807 = vor.u32 %v2802, %v2806
        %2808 = vrot.lane.b32.xlu0 %v2807, 84
        %v2809 = vpop.permute.xlu0 %2808
        %v2811 = vrot.slane %v2800, 1
        %2812 = vrot.lane.b32.xlu0 %v2811, 40
        %v2813 = vpop.permute.xlu0 %2812
        %v2814 = vrot.slane %v2802, 1
        %v2815 = vrot.slane %v2804, 2
        %v2816 = vor.u32 %v2814, %v2815
        %2817 = vrot.lane.b32.xlu0 %v2816, 124
        %v2818 = vpop.permute.xlu0 %2817
        %v2819 = vrot.slane %v2800, 2
        %2820 = vrot.lane.b32.xlu0 %v2819, 80
        %v2821 = vpop.permute.xlu0 %2820
        %vm2822 = vcmask 687104
        %v2824 = vsel %vm2822, %v2800, %v2809
        %v2826 = vsel %vm2226, %v2809, %v2813
        %vm2827 = vcmask 1014784
        %v2829 = vsel %vm2827, %v2826, %v2818
        %vm2830 = vcmask 654336
        %v2832 = vsel %vm2830, %v2818, %v2821
        %v2836 = vrot.slane %v2702, 6
        %v2837 = vrot.slane %v2703, 6
        %v2838 = vsel %vm1096, %v2836, %v2837
        %v2839 = vrot.slane %v2704, 6
        %v2840 = vsel %vm1096, %v2837, %v2839
        %v2843 = vsel %vm1175, %v2840, 0
        %2845 = vmatprep.subr.bf16.mxu0 0
        %2846 = vmatpush1.bf16.msra.mxu0 %v2838
        %2847 = vmatprep.subr.bf16.mxu0 0
        %2848 = vmatpush1.bf16.msra.mxu0 %v2843
        %2849 = vmatprep.subr.bf16.mxu0 0
        %2850 = vmatpush1.bf16.msra.mxu0 0
        %2851 = vmatprep.subr.bf16.mxu0 0
        %2852 = vmatpush1.bf16.msra.mxu0 0
        %2853 = vmatprep.subr.bf16.mxu0 0
        %2854 = vmatpush1.bf16.msra.mxu0 0
        %2855 = vmatprep.subr.bf16.mxu0 0
        %2856 = vmatpush1.bf16.msra.mxu0 0
        %2857 = vmatprep.subr.bf16.mxu0 0
        %2858 = vmatpush1.bf16.msra.mxu0 0
        %2859 = vmatprep.subr.bf16.mxu0 0
        %2860 = vmatpush1.bf16.msra.mxu0 0
        %2861 = vmatprep.subr.bf16.mxu0 0
        %2862 = vmatpush1.bf16.msra.mxu0 0
        %2863 = vmatprep.subr.bf16.mxu0 0
        %2864 = vmatpush1.bf16.msra.mxu0 0
        %2865 = vmatprep.subr.bf16.mxu0 0
        %2866 = vmatpush1.bf16.msra.mxu0 0
        %2867 = vmatprep.subr.bf16.mxu0 0
        %2868 = vmatpush1.bf16.msra.mxu0 0
        %2869 = vmatprep.subr.bf16.mxu0 0
        %2870 = vmatpush1.bf16.msra.mxu0 0
        %2871 = vmatprep.subr.bf16.mxu0 0
        %2872 = vmatpush1.bf16.msra.mxu0 0
        %2873 = vmatprep.subr.bf16.mxu0 0
        %2874 = vmatpush1.bf16.msra.mxu0 0
        %2875 = vmatprep.subr.bf16.mxu0 0
        %2876 = vmatpush1.bf16.msra.mxu0 0
        %2877 = vmatprep.mubr.bf16.mxu0 0
        %2878 = vmatmul.mubr.bf16.gmra.mrb[0].mxu0 %v2731
        %v2879 = vpop.f32.mrb[0].mxu0
        %v2880 = vadd.f32 0.0, %v2879
        %v2881 = vpop.f32.mrb[0].mxu0
        %v2882 = vpop.f32.mrb[0].mxu0
        %v2883 = vadd.f32 0.0, %v2882
        %v2884 = vpop.f32.mrb[0].mxu0
        %2885 = vmatprep.mubr.bf16.mxu0 0
        %2886 = vmatmul.mubr.bf16.gmra.mrb[0].mxu0 %v2734
        %v2887 = vpop.f32.mrb[0].mxu0
        %v2888 = vadd.f32 0.0, %v2887
        %v2889 = vpop.f32.mrb[0].mxu0
        %v2890 = vpop.f32.mrb[0].mxu0
        %v2891 = vadd.f32 0.0, %v2890
        %v2892 = vpop.f32.mrb[0].mxu0
        %2893 = vdwg.mxu0
        %v2897 = vrot.slane %v2883, 6
        %v2898 = vrot.slane %v2888, 6
        %v2899 = vsel %vm1204, %v2897, %v2898
        %v2900 = vrot.slane %v2891, 6
        %v2901 = vsel %vm1204, %v2898, %v2900
        %v2904 = vmax.f32 %v2880, %v2899
        %v2905 = vmax.f32 %v2883, %v2901
        %v2906 = vpack.c.bf16 %v2905, %v2904
        %v2908 = vshrl.u32 %v2906, 16
        %v2910 = vshll.u32 %v2906, 16
        %v2912 = vrot.slane %v2910, 1
        %v2913 = vor.u32 %v2908, %v2912
        %2914 = vrot.lane.b32.xlu0 %v2913, 84
        %v2915 = vpop.permute.xlu0 %2914
        %v2917 = vrot.slane %v2906, 1
        %2918 = vrot.lane.b32.xlu0 %v2917, 40
        %v2919 = vpop.permute.xlu0 %2918
        %v2920 = vrot.slane %v2908, 1
        %v2921 = vrot.slane %v2910, 2
        %v2922 = vor.u32 %v2920, %v2921
        %2923 = vrot.lane.b32.xlu0 %v2922, 124
        %v2924 = vpop.permute.xlu0 %2923
        %v2925 = vrot.slane %v2906, 2
        %2926 = vrot.lane.b32.xlu0 %v2925, 80
        %v2927 = vpop.permute.xlu0 %2926
        %v2929 = vsel %vm2822, %v2906, %v2915
        %v2931 = vsel %vm2226, %v2915, %v2919
        %v2933 = vsel %vm2827, %v2931, %v2924
        %v2935 = vsel %vm2830, %v2924, %v2927
        %v2938 = vrot.slane %v2704, 4
        %v2939 = vrot.slane %v2705, 4
        %v2940 = vsel %vm1074, %v2938, %v2939
        %v2941 = vrot.slane %v2706, 4
        %v2942 = vsel %vm1074, %v2939, %v2941
        %v2945 = vsel %vm1175, %v2942, 0
        %2947 = vmatprep.subr.bf16.mxu0 0
        %2948 = vmatpush1.bf16.msra.mxu0 %v2940
        %2949 = vmatprep.subr.bf16.mxu0 0
        %2950 = vmatpush1.bf16.msra.mxu0 %v2945
        %2951 = vmatprep.subr.bf16.mxu0 0
        %2952 = vmatpush1.bf16.msra.mxu0 0
        %2953 = vmatprep.subr.bf16.mxu0 0
        %2954 = vmatpush1.bf16.msra.mxu0 0
        %2955 = vmatprep.subr.bf16.mxu0 0
        %2956 = vmatpush1.bf16.msra.mxu0 0
        %2957 = vmatprep.subr.bf16.mxu0 0
        %2958 = vmatpush1.bf16.msra.mxu0 0
        %2959 = vmatprep.subr.bf16.mxu0 0
        %2960 = vmatpush1.bf16.msra.mxu0 0
        %2961 = vmatprep.subr.bf16.mxu0 0
        %2962 = vmatpush1.bf16.msra.mxu0 0
        %2963 = vmatprep.subr.bf16.mxu0 0
        %2964 = vmatpush1.bf16.msra.mxu0 0
        %2965 = vmatprep.subr.bf16.mxu0 0
        %2966 = vmatpush1.bf16.msra.mxu0 0
        %2967 = vmatprep.subr.bf16.mxu0 0
        %2968 = vmatpush1.bf16.msra.mxu0 0
        %2969 = vmatprep.subr.bf16.mxu0 0
        %2970 = vmatpush1.bf16.msra.mxu0 0
        %2971 = vmatprep.subr.bf16.mxu0 0
        %2972 = vmatpush1.bf16.msra.mxu0 0
        %2973 = vmatprep.subr.bf16.mxu0 0
        %2974 = vmatpush1.bf16.msra.mxu0 0
        %2975 = vmatprep.subr.bf16.mxu0 0
        %2976 = vmatpush1.bf16.msra.mxu0 0
        %2977 = vmatprep.subr.bf16.mxu0 0
        %2978 = vmatpush1.bf16.msra.mxu0 0
        %2979 = vmatprep.mubr.bf16.mxu0 0
        %2980 = vmatmul.mubr.bf16.gmra.mrb[0].mxu0 %v2731
        %v2981 = vpop.f32.mrb[0].mxu0
        %v2982 = vadd.f32 0.0, %v2981
        %v2983 = vpop.f32.mrb[0].mxu0
        %v2984 = vpop.f32.mrb[0].mxu0
        %v2985 = vadd.f32 0.0, %v2984
        %v2986 = vpop.f32.mrb[0].mxu0
        %2987 = vmatprep.mubr.bf16.mxu0 0
        %2988 = vmatmul.mubr.bf16.gmra.mrb[0].mxu0 %v2734
        %v2989 = vpop.f32.mrb[0].mxu0
        %v2990 = vadd.f32 0.0, %v2989
        %v2991 = vpop.f32.mrb[0].mxu0
        %v2992 = vpop.f32.mrb[0].mxu0
        %v2993 = vadd.f32 0.0, %v2992
        %v2994 = vpop.f32.mrb[0].mxu0
        %2995 = vdwg.mxu0
        %v2999 = vrot.slane %v2985, 6
        %v3000 = vrot.slane %v2990, 6
        %v3001 = vsel %vm1204, %v2999, %v3000
        %v3002 = vrot.slane %v2993, 6
        %v3003 = vsel %vm1204, %v3000, %v3002
        %v3006 = vmax.f32 %v2982, %v3001
        %v3007 = vmax.f32 %v2985, %v3003
        %v3008 = vpack.c.bf16 %v3007, %v3006
        %v3010 = vshrl.u32 %v3008, 16
        %v3012 = vshll.u32 %v3008, 16
        %v3014 = vrot.slane %v3012, 1
        %v3015 = vor.u32 %v3010, %v3014
        %3016 = vrot.lane.b32.xlu0 %v3015, 84
        %v3017 = vpop.permute.xlu0 %3016
        %v3019 = vrot.slane %v3008, 1
        %3020 = vrot.lane.b32.xlu0 %v3019, 40
        %v3021 = vpop.permute.xlu0 %3020
        %v3022 = vrot.slane %v3010, 1
        %v3023 = vrot.slane %v3012, 2
        %v3024 = vor.u32 %v3022, %v3023
        %3025 = vrot.lane.b32.xlu0 %v3024, 124
        %v3026 = vpop.permute.xlu0 %3025
        %v3027 = vrot.slane %v3008, 2
        %3028 = vrot.lane.b32.xlu0 %v3027, 80
        %v3029 = vpop.permute.xlu0 %3028
        %v3031 = vsel %vm2822, %v3008, %v3017
        %v3033 = vsel %vm2226, %v3017, %v3021
        %v3035 = vsel %vm2827, %v3033, %v3026
        %v3037 = vsel %vm2830, %v3026, %v3029
        %v3039 = vrot.slane %v2706, 2
        %v3040 = vrot.slane %v2707, 2
        %v3041 = vsel %vm553, %v3039, %v3040
        %v3044 = vsel %vm1175, %v3040, 0
        %3046 = vmatprep.subr.bf16.mxu0 0
        %3047 = vmatpush1.bf16.msra.mxu0 %v3041
        %3048 = vmatprep.subr.bf16.mxu0 0
        %3049 = vmatpush1.bf16.msra.mxu0 %v3044
        %3050 = vmatprep.subr.bf16.mxu0 0
        %3051 = vmatpush1.bf16.msra.mxu0 0
        %3052 = vmatprep.subr.bf16.mxu0 0
        %3053 = vmatpush1.bf16.msra.mxu0 0
        %3054 = vmatprep.subr.bf16.mxu0 0
        %3055 = vmatpush1.bf16.msra.mxu0 0
        %3056 = vmatprep.subr.bf16.mxu0 0
        %3057 = vmatpush1.bf16.msra.mxu0 0
        %3058 = vmatprep.subr.bf16.mxu0 0
        %3059 = vmatpush1.bf16.msra.mxu0 0
        %3060 = vmatprep.subr.bf16.mxu0 0
        %3061 = vmatpush1.bf16.msra.mxu0 0
        %3062 = vmatprep.subr.bf16.mxu0 0
        %3063 = vmatpush1.bf16.msra.mxu0 0
        %3064 = vmatprep.subr.bf16.mxu0 0
        %3065 = vmatpush1.bf16.msra.mxu0 0
        %3066 = vmatprep.subr.bf16.mxu0 0
        %3067 = vmatpush1.bf16.msra.mxu0 0
        %3068 = vmatprep.subr.bf16.mxu0 0
        %3069 = vmatpush1.bf16.msra.mxu0 0
        %3070 = vmatprep.subr.bf16.mxu0 0
        %3071 = vmatpush1.bf16.msra.mxu0 0
        %3072 = vmatprep.subr.bf16.mxu0 0
        %3073 = vmatpush1.bf16.msra.mxu0 0
        %3074 = vmatprep.subr.bf16.mxu0 0
        %3075 = vmatpush1.bf16.msra.mxu0 0
        %3076 = vmatprep.subr.bf16.mxu0 0
        %3077 = vmatpush1.bf16.msra.mxu0 0
        %3078 = vmatprep.mubr.bf16.mxu0 0
        %3079 = vmatmul.mubr.bf16.gmra.mrb[0].mxu0 %v2731
        %v3080 = vpop.f32.mrb[0].mxu0
        %v3081 = vadd.f32 0.0, %v3080
        %v3082 = vpop.f32.mrb[0].mxu0
        %v3083 = vpop.f32.mrb[0].mxu0
        %v3084 = vadd.f32 0.0, %v3083
        %v3085 = vpop.f32.mrb[0].mxu0
        %3086 = vmatprep.mubr.bf16.mxu0 0
        %3087 = vmatmul.mubr.bf16.gmra.mrb[0].mxu0 %v2734
        %v3088 = vpop.f32.mrb[0].mxu0
        %v3089 = vadd.f32 0.0, %v3088
        %v3090 = vpop.f32.mrb[0].mxu0
        %v3091 = vpop.f32.mrb[0].mxu0
        %v3092 = vadd.f32 0.0, %v3091
        %v3093 = vpop.f32.mrb[0].mxu0
        %3094 = vdwg.mxu0
        %v3098 = vrot.slane %v3084, 6
        %v3099 = vrot.slane %v3089, 6
        %v3100 = vsel %vm1204, %v3098, %v3099
        %v3101 = vrot.slane %v3092, 6
        %v3102 = vsel %vm1204, %v3099, %v3101
        %v3105 = vmax.f32 %v3081, %v3100
        %v3106 = vmax.f32 %v3084, %v3102
        %v3107 = vpack.c.bf16 %v3106, %v3105
        %v3109 = vshrl.u32 %v3107, 16
        %v3111 = vshll.u32 %v3107, 16
        %v3113 = vrot.slane %v3111, 1
        %v3114 = vor.u32 %v3109, %v3113
        %3115 = vrot.lane.b32.xlu0 %v3114, 84
        %v3116 = vpop.permute.xlu0 %3115
        %v3118 = vrot.slane %v3107, 1
        %3119 = vrot.lane.b32.xlu0 %v3118, 40
        %v3120 = vpop.permute.xlu0 %3119
        %v3121 = vrot.slane %v3109, 1
        %v3122 = vrot.slane %v3111, 2
        %v3123 = vor.u32 %v3121, %v3122
        %3124 = vrot.lane.b32.xlu0 %v3123, 124
        %v3125 = vpop.permute.xlu0 %3124
        %v3126 = vrot.slane %v3107, 2
        %3127 = vrot.lane.b32.xlu0 %v3126, 80
        %v3128 = vpop.permute.xlu0 %3127
        %v3130 = vsel %vm2822, %v3107, %v3116
        %v3132 = vsel %vm2226, %v3116, %v3120
        %v3134 = vsel %vm2827, %v3132, %v3125
        %v3136 = vsel %vm2830, %v3125, %v3128
        %v3138 = vsel %vm1175, %v2709, 0
        %3140 = vmatprep.subr.bf16.mxu0 0
        %3141 = vmatpush1.bf16.msra.mxu0 %v2708
        %3142 = vmatprep.subr.bf16.mxu0 0
        %3143 = vmatpush1.bf16.msra.mxu0 %v3138
        %3144 = vmatprep.subr.bf16.mxu0 0
        %3145 = vmatpush1.bf16.msra.mxu0 0
        %3146 = vmatprep.subr.bf16.mxu0 0
        %3147 = vmatpush1.bf16.msra.mxu0 0
        %3148 = vmatprep.subr.bf16.mxu0 0
        %3149 = vmatpush1.bf16.msra.mxu0 0
        %3150 = vmatprep.subr.bf16.mxu0 0
        %3151 = vmatpush1.bf16.msra.mxu0 0
        %3152 = vmatprep.subr.bf16.mxu0 0
        %3153 = vmatpush1.bf16.msra.mxu0 0
        %3154 = vmatprep.subr.bf16.mxu0 0
        %3155 = vmatpush1.bf16.msra.mxu0 0
        %3156 = vmatprep.subr.bf16.mxu0 0
        %3157 = vmatpush1.bf16.msra.mxu0 0
        %3158 = vmatprep.subr.bf16.mxu0 0
        %3159 = vmatpush1.bf16.msra.mxu0 0
        %3160 = vmatprep.subr.bf16.mxu0 0
        %3161 = vmatpush1.bf16.msra.mxu0 0
        %3162 = vmatprep.subr.bf16.mxu0 0
        %3163 = vmatpush1.bf16.msra.mxu0 0
        %3164 = vmatprep.subr.bf16.mxu0 0
        %3165 = vmatpush1.bf16.msra.mxu0 0
        %3166 = vmatprep.subr.bf16.mxu0 0
        %3167 = vmatpush1.bf16.msra.mxu0 0
        %3168 = vmatprep.subr.bf16.mxu0 0
        %3169 = vmatpush1.bf16.msra.mxu0 0
        %3170 = vmatprep.subr.bf16.mxu0 0
        %3171 = vmatpush1.bf16.msra.mxu0 0
        %3172 = vmatprep.mubr.bf16.mxu0 0
        %3173 = vmatmul.mubr.bf16.gmra.mrb[0].mxu0 %v2731
        %v3174 = vpop.f32.mrb[0].mxu0
        %v3175 = vadd.f32 0.0, %v3174
        %v3176 = vpop.f32.mrb[0].mxu0
        %v3177 = vpop.f32.mrb[0].mxu0
        %v3178 = vadd.f32 0.0, %v3177
        %v3179 = vpop.f32.mrb[0].mxu0
        %3180 = vmatprep.mubr.bf16.mxu0 0
        %3181 = vmatmul.mubr.bf16.gmra.mrb[0].mxu0 %v2734
        %v3182 = vpop.f32.mrb[0].mxu0
        %v3183 = vadd.f32 0.0, %v3182
        %v3184 = vpop.f32.mrb[0].mxu0
        %v3185 = vpop.f32.mrb[0].mxu0
        %v3186 = vadd.f32 0.0, %v3185
        %v3187 = vpop.f32.mrb[0].mxu0
        %3188 = vdwg.mxu0
        %v3192 = vrot.slane %v3178, 6
        %v3193 = vrot.slane %v3183, 6
        %v3194 = vsel %vm1204, %v3192, %v3193
        %v3195 = vrot.slane %v3186, 6
        %v3196 = vsel %vm1204, %v3193, %v3195
        %v3199 = vmax.f32 %v3175, %v3194
        %v3200 = vmax.f32 %v3178, %v3196
        %v3201 = vpack.c.bf16 %v3200, %v3199
        %v3203 = vshrl.u32 %v3201, 16
        %v3205 = vshll.u32 %v3201, 16
        %v3207 = vrot.slane %v3205, 1
        %v3208 = vor.u32 %v3203, %v3207
        %3209 = vrot.lane.b32.xlu0 %v3208, 84
        %v3210 = vpop.permute.xlu0 %3209
        %v3212 = vrot.slane %v3201, 1
        %3213 = vrot.lane.b32.xlu0 %v3212, 40
        %v3214 = vpop.permute.xlu0 %3213
        %v3215 = vrot.slane %v3203, 1
        %v3216 = vrot.slane %v3205, 2
        %v3217 = vor.u32 %v3215, %v3216
        %3218 = vrot.lane.b32.xlu0 %v3217, 124
        %v3219 = vpop.permute.xlu0 %3218
        %v3220 = vrot.slane %v3201, 2
        %3221 = vrot.lane.b32.xlu0 %v3220, 80
        %v3222 = vpop.permute.xlu0 %3221
        %v3224 = vsel %vm2822, %v3201, %v3210
        %v3226 = vsel %vm2226, %v3210, %v3214
        %v3228 = vsel %vm2827, %v3226, %v3219
        %v3230 = vsel %vm2830, %v3219, %v3222
        %v3234 = vrot.slane %v2709, 6
        %v3235 = vrot.slane %v2710, 6
        %v3236 = vsel %vm1096, %v3234, %v3235
        %v3237 = vrot.slane %v2711, 6
        %v3238 = vsel %vm1096, %v3235, %v3237
        %v3241 = vsel %vm1175, %v3238, 0
        %3243 = vmatprep.subr.bf16.mxu0 0
        %3244 = vmatpush1.bf16.msra.mxu0 %v3236
        %3245 = vmatprep.subr.bf16.mxu0 0
        %3246 = vmatpush1.bf16.msra.mxu0 %v3241
        %3247 = vmatprep.subr.bf16.mxu0 0
        %3248 = vmatpush1.bf16.msra.mxu0 0
        %3249 = vmatprep.subr.bf16.mxu0 0
        %3250 = vmatpush1.bf16.msra.mxu0 0
        %3251 = vmatprep.subr.bf16.mxu0 0
        %3252 = vmatpush1.bf16.msra.mxu0 0
        %3253 = vmatprep.subr.bf16.mxu0 0
        %3254 = vmatpush1.bf16.msra.mxu0 0
        %3255 = vmatprep.subr.bf16.mxu0 0
        %3256 = vmatpush1.bf16.msra.mxu0 0
        %3257 = vmatprep.subr.bf16.mxu0 0
        %3258 = vmatpush1.bf16.msra.mxu0 0
        %3259 = vmatprep.subr.bf16.mxu0 0
        %3260 = vmatpush1.bf16.msra.mxu0 0
        %3261 = vmatprep.subr.bf16.mxu0 0
        %3262 = vmatpush1.bf16.msra.mxu0 0
        %3263 = vmatprep.subr.bf16.mxu0 0
        %3264 = vmatpush1.bf16.msra.mxu0 0
        %3265 = vmatprep.subr.bf16.mxu0 0
        %3266 = vmatpush1.bf16.msra.mxu0 0
        %3267 = vmatprep.subr.bf16.mxu0 0
        %3268 = vmatpush1.bf16.msra.mxu0 0
        %3269 = vmatprep.subr.bf16.mxu0 0
        %3270 = vmatpush1.bf16.msra.mxu0 0
        %3271 = vmatprep.subr.bf16.mxu0 0
        %3272 = vmatpush1.bf16.msra.mxu0 0
        %3273 = vmatprep.subr.bf16.mxu0 0
        %3274 = vmatpush1.bf16.msra.mxu0 0
        %3275 = vmatprep.mubr.bf16.mxu0 0
        %3276 = vmatmul.mubr.bf16.gmra.mrb[0].mxu0 %v2731
        %v3277 = vpop.f32.mrb[0].mxu0
        %v3278 = vadd.f32 0.0, %v3277
        %v3279 = vpop.f32.mrb[0].mxu0
        %v3280 = vpop.f32.mrb[0].mxu0
        %v3281 = vadd.f32 0.0, %v3280
        %v3282 = vpop.f32.mrb[0].mxu0
        %3283 = vmatprep.mubr.bf16.mxu0 0
        %3284 = vmatmul.mubr.bf16.gmra.mrb[0].mxu0 %v2734
        %v3285 = vpop.f32.mrb[0].mxu0
        %v3286 = vadd.f32 0.0, %v3285
        %v3287 = vpop.f32.mrb[0].mxu0
        %v3288 = vpop.f32.mrb[0].mxu0
        %v3289 = vadd.f32 0.0, %v3288
        %v3290 = vpop.f32.mrb[0].mxu0
        %3291 = vdwg.mxu0
        %v3295 = vrot.slane %v3281, 6
        %v3296 = vrot.slane %v3286, 6
        %v3297 = vsel %vm1204, %v3295, %v3296
        %v3298 = vrot.slane %v3289, 6
        %v3299 = vsel %vm1204, %v3296, %v3298
        %v3302 = vmax.f32 %v3278, %v3297
        %v3303 = vmax.f32 %v3281, %v3299
        %v3304 = vpack.c.bf16 %v3303, %v3302
        %v3306 = vshrl.u32 %v3304, 16
        %v3308 = vshll.u32 %v3304, 16
        %v3310 = vrot.slane %v3308, 1
        %v3311 = vor.u32 %v3306, %v3310
        %3312 = vrot.lane.b32.xlu0 %v3311, 84
        %v3313 = vpop.permute.xlu0 %3312
        %v3315 = vrot.slane %v3304, 1
        %3316 = vrot.lane.b32.xlu0 %v3315, 40
        %v3317 = vpop.permute.xlu0 %3316
        %v3318 = vrot.slane %v3306, 1
        %v3319 = vrot.slane %v3308, 2
        %v3320 = vor.u32 %v3318, %v3319
        %3321 = vrot.lane.b32.xlu0 %v3320, 124
        %v3322 = vpop.permute.xlu0 %3321
        %v3323 = vrot.slane %v3304, 2
        %3324 = vrot.lane.b32.xlu0 %v3323, 80
        %v3325 = vpop.permute.xlu0 %3324
        %v3327 = vsel %vm2822, %v3304, %v3313
        %v3329 = vsel %vm2226, %v3313, %v3317
        %v3331 = vsel %vm2827, %v3329, %v3322
        %v3333 = vsel %vm2830, %v3322, %v3325
        %v3336 = vrot.slane %v2711, 4
        %v3337 = vrot.slane %v2712, 4
        %v3338 = vsel %vm1074, %v3336, %v3337
        %v3339 = vrot.slane %v2713, 4
        %v3340 = vsel %vm1074, %v3337, %v3339
        %v3343 = vsel %vm1175, %v3340, 0
        %3345 = vmatprep.subr.bf16.mxu0 0
        %3346 = vmatpush1.bf16.msra.mxu0 %v3338
        %3347 = vmatprep.subr.bf16.mxu0 0
        %3348 = vmatpush1.bf16.msra.mxu0 %v3343
        %3349 = vmatprep.subr.bf16.mxu0 0
        %3350 = vmatpush1.bf16.msra.mxu0 0
        %3351 = vmatprep.subr.bf16.mxu0 0
        %3352 = vmatpush1.bf16.msra.mxu0 0
        %3353 = vmatprep.subr.bf16.mxu0 0
        %3354 = vmatpush1.bf16.msra.mxu0 0
        %3355 = vmatprep.subr.bf16.mxu0 0
        %3356 = vmatpush1.bf16.msra.mxu0 0
        %3357 = vmatprep.subr.bf16.mxu0 0
        %3358 = vmatpush1.bf16.msra.mxu0 0
        %3359 = vmatprep.subr.bf16.mxu0 0
        %3360 = vmatpush1.bf16.msra.mxu0 0
        %3361 = vmatprep.subr.bf16.mxu0 0
        %3362 = vmatpush1.bf16.msra.mxu0 0
        %3363 = vmatprep.subr.bf16.mxu0 0
        %3364 = vmatpush1.bf16.msra.mxu0 0
        %3365 = vmatprep.subr.bf16.mxu0 0
        %3366 = vmatpush1.bf16.msra.mxu0 0
        %3367 = vmatprep.subr.bf16.mxu0 0
        %3368 = vmatpush1.bf16.msra.mxu0 0
        %3369 = vmatprep.subr.bf16.mxu0 0
        %3370 = vmatpush1.bf16.msra.mxu0 0
        %3371 = vmatprep.subr.bf16.mxu0 0
        %3372 = vmatpush1.bf16.msra.mxu0 0
        %3373 = vmatprep.subr.bf16.mxu0 0
        %3374 = vmatpush1.bf16.msra.mxu0 0
        %3375 = vmatprep.subr.bf16.mxu0 0
        %3376 = vmatpush1.bf16.msra.mxu0 0
        %3377 = vmatprep.mubr.bf16.mxu0 0
        %3378 = vmatmul.mubr.bf16.gmra.mrb[0].mxu0 %v2731
        %v3379 = vpop.f32.mrb[0].mxu0
        %v3380 = vadd.f32 0.0, %v3379
        %v3381 = vpop.f32.mrb[0].mxu0
        %v3382 = vpop.f32.mrb[0].mxu0
        %v3383 = vadd.f32 0.0, %v3382
        %v3384 = vpop.f32.mrb[0].mxu0
        %3385 = vmatprep.mubr.bf16.mxu0 0
        %3386 = vmatmul.mubr.bf16.gmra.mrb[0].mxu0 %v2734
        %v3387 = vpop.f32.mrb[0].mxu0
        %v3388 = vadd.f32 0.0, %v3387
        %v3389 = vpop.f32.mrb[0].mxu0
        %v3390 = vpop.f32.mrb[0].mxu0
        %v3391 = vadd.f32 0.0, %v3390
        %v3392 = vpop.f32.mrb[0].mxu0
        %3393 = vdwg.mxu0
        %v3397 = vrot.slane %v3383, 6
        %v3398 = vrot.slane %v3388, 6
        %v3399 = vsel %vm1204, %v3397, %v3398
        %v3400 = vrot.slane %v3391, 6
        %v3401 = vsel %vm1204, %v3398, %v3400
        %v3404 = vmax.f32 %v3380, %v3399
        %v3405 = vmax.f32 %v3383, %v3401
        %v3406 = vpack.c.bf16 %v3405, %v3404
        %v3408 = vshrl.u32 %v3406, 16
        %v3410 = vshll.u32 %v3406, 16
        %v3412 = vrot.slane %v3410, 1
        %v3413 = vor.u32 %v3408, %v3412
        %3414 = vrot.lane.b32.xlu0 %v3413, 84
        %v3415 = vpop.permute.xlu0 %3414
        %v3417 = vrot.slane %v3406, 1
        %3418 = vrot.lane.b32.xlu0 %v3417, 40
        %v3419 = vpop.permute.xlu0 %3418
        %v3420 = vrot.slane %v3408, 1
        %v3421 = vrot.slane %v3410, 2
        %v3422 = vor.u32 %v3420, %v3421
        %3423 = vrot.lane.b32.xlu0 %v3422, 124
        %v3424 = vpop.permute.xlu0 %3423
        %v3425 = vrot.slane %v3406, 2
        %3426 = vrot.lane.b32.xlu0 %v3425, 80
        %v3427 = vpop.permute.xlu0 %3426
        %v3429 = vsel %vm2822, %v3406, %v3415
        %v3431 = vsel %vm2226, %v3415, %v3419
        %v3433 = vsel %vm2827, %v3431, %v3424
        %v3435 = vsel %vm2830, %v3424, %v3427
        %v3437 = vrot.slane %v2713, 2
        %v3438 = vrot.slane %v2714, 2
        %v3439 = vsel %vm553, %v3437, %v3438
        %v3442 = vsel %vm1175, %v3438, 0
        %3444 = vmatprep.subr.bf16.mxu0 0
        %3445 = vmatpush1.bf16.msra.mxu0 %v3439
        %3446 = vmatprep.subr.bf16.mxu0 0
        %3447 = vmatpush1.bf16.msra.mxu0 %v3442
        %3448 = vmatprep.subr.bf16.mxu0 0
        %3449 = vmatpush1.bf16.msra.mxu0 0
        %3450 = vmatprep.subr.bf16.mxu0 0
        %3451 = vmatpush1.bf16.msra.mxu0 0
        %3452 = vmatprep.subr.bf16.mxu0 0
        %3453 = vmatpush1.bf16.msra.mxu0 0
        %3454 = vmatprep.subr.bf16.mxu0 0
        %3455 = vmatpush1.bf16.msra.mxu0 0
        %3456 = vmatprep.subr.bf16.mxu0 0
        %3457 = vmatpush1.bf16.msra.mxu0 0
        %3458 = vmatprep.subr.bf16.mxu0 0
        %3459 = vmatpush1.bf16.msra.mxu0 0
        %3460 = vmatprep.subr.bf16.mxu0 0
        %3461 = vmatpush1.bf16.msra.mxu0 0
        %3462 = vmatprep.subr.bf16.mxu0 0
        %3463 = vmatpush1.bf16.msra.mxu0 0
        %3464 = vmatprep.subr.bf16.mxu0 0
        %3465 = vmatpush1.bf16.msra.mxu0 0
        %3466 = vmatprep.subr.bf16.mxu0 0
        %3467 = vmatpush1.bf16.msra.mxu0 0
        %3468 = vmatprep.subr.bf16.mxu0 0
        %3469 = vmatpush1.bf16.msra.mxu0 0
        %3470 = vmatprep.subr.bf16.mxu0 0
        %3471 = vmatpush1.bf16.msra.mxu0 0
        %3472 = vmatprep.subr.bf16.mxu0 0
        %3473 = vmatpush1.bf16.msra.mxu0 0
        %3474 = vmatprep.subr.bf16.mxu0 0
        %3475 = vmatpush1.bf16.msra.mxu0 0
        %3476 = vmatprep.mubr.bf16.mxu0 0
        %3477 = vmatmul.mubr.bf16.gmra.mrb[0].mxu0 %v2731
        %v3478 = vpop.f32.mrb[0].mxu0
        %v3479 = vadd.f32 0.0, %v3478
        %v3480 = vpop.f32.mrb[0].mxu0
        %v3481 = vpop.f32.mrb[0].mxu0
        %v3482 = vadd.f32 0.0, %v3481
        %v3483 = vpop.f32.mrb[0].mxu0
        %3484 = vmatprep.mubr.bf16.mxu0 0
        %3485 = vmatmul.mubr.bf16.gmra.mrb[0].mxu0 %v2734
        %v3486 = vpop.f32.mrb[0].mxu0
        %v3487 = vadd.f32 0.0, %v3486
        %v3488 = vpop.f32.mrb[0].mxu0
        %v3489 = vpop.f32.mrb[0].mxu0
        %v3490 = vadd.f32 0.0, %v3489
        %v3491 = vpop.f32.mrb[0].mxu0
        %3492 = vdwg.mxu0
        %v3496 = vrot.slane %v3482, 6
        %v3497 = vrot.slane %v3487, 6
        %v3498 = vsel %vm1204, %v3496, %v3497
        %v3499 = vrot.slane %v3490, 6
        %v3500 = vsel %vm1204, %v3497, %v3499
        %v3503 = vmax.f32 %v3479, %v3498
        %v3504 = vmax.f32 %v3482, %v3500
        %v3505 = vpack.c.bf16 %v3504, %v3503
        %v3507 = vshrl.u32 %v3505, 16
        %v3509 = vshll.u32 %v3505, 16
        %v3511 = vrot.slane %v3509, 1
        %v3512 = vor.u32 %v3507, %v3511
        %3513 = vrot.lane.b32.xlu0 %v3512, 84
        %v3514 = vpop.permute.xlu0 %3513
        %v3516 = vrot.slane %v3505, 1
        %3517 = vrot.lane.b32.xlu0 %v3516, 40
        %v3518 = vpop.permute.xlu0 %3517
        %v3519 = vrot.slane %v3507, 1
        %v3520 = vrot.slane %v3509, 2
        %v3521 = vor.u32 %v3519, %v3520
        %3522 = vrot.lane.b32.xlu0 %v3521, 124
        %v3523 = vpop.permute.xlu0 %3522
        %v3524 = vrot.slane %v3505, 2
        %3525 = vrot.lane.b32.xlu0 %v3524, 80
        %v3526 = vpop.permute.xlu0 %3525
        %v3528 = vsel %vm2822, %v3505, %v3514
        %v3530 = vsel %vm2226, %v3514, %v3518
        %v3532 = vsel %vm2827, %v3530, %v3523
        %v3534 = vsel %vm2830, %v3523, %v3526
        %v3538 = vrot.slane %v2929, 3
        %v3539 = vrot.slane %v2933, 3
        %v3540 = vrot.slane %v2935, 3
        %v3541 = vrot.slane %v2927, 3
        %v3545 = vrot.slane %v3031, 6
        %v3546 = vrot.slane %v3035, 6
        %v3547 = vrot.slane %v3037, 6
        %v3548 = vrot.slane %v3029, 6
        %v3552 = vrot.slane %v3130, 1
        %v3553 = vrot.slane %v3134, 1
        %v3554 = vrot.slane %v3136, 1
        %v3555 = vrot.slane %v3128, 1
        %v3559 = vrot.slane %v3224, 4
        %v3560 = vrot.slane %v3228, 4
        %v3561 = vrot.slane %v3230, 4
        %v3562 = vrot.slane %v3222, 4
        %v3566 = vrot.slane %v3327, 7
        %v3567 = vrot.slane %v3331, 7
        %v3568 = vrot.slane %v3333, 7
        %v3569 = vrot.slane %v3325, 7
        %v3573 = vrot.slane %v3429, 2
        %v3574 = vrot.slane %v3433, 2
        %v3575 = vrot.slane %v3435, 2
        %v3576 = vrot.slane %v3427, 2
        %v3580 = vrot.slane %v3528, 5
        %v3581 = vrot.slane %v3532, 5
        %v3582 = vrot.slane %v3534, 5
        %v3583 = vrot.slane %v3526, 5
        %vm3584 = vcmask 1044480
        %v3586 = vsel %vm3584, %v2824, %v3538
        %v3589 = vsel %vm3584, %v2829, %v3539
        %v3592 = vsel %vm3584, %v2832, %v3540
        %v3595 = vsel %vm3584, %v2821, %v3541
        %v3597 = vsel %vm1204, %v3538, %v3545
        %v3599 = vsel %vm1204, %v3539, %v3546
        %v3601 = vsel %vm1204, %v3540, %v3547
        %v3603 = vsel %vm1204, %v3541, %v3548
        %vm3604 = vcmask 1046528
        %v3606 = vsel %vm3604, %v3597, %v3552
        %v3609 = vsel %vm3604, %v3599, %v3553
        %v3612 = vsel %vm3604, %v3601, %v3554
        %v3615 = vsel %vm3604, %v3603, %v3555
        %v3617 = vsel %vm1188, %v3552, %v3559
        %v3620 = vsel %vm1188, %v3553, %v3560
        %v3623 = vsel %vm1188, %v3554, %v3561
        %v3626 = vsel %vm1188, %v3555, %v3562
        %vm3627 = vcmask 1040384
        %v3629 = vsel %vm3627, %v3559, %v3566
        %v3631 = vsel %vm3627, %v3560, %v3567
        %v3633 = vsel %vm3627, %v3561, %v3568
        %v3635 = vsel %vm3627, %v3562, %v3569
        %v3637 = vsel %vm1175, %v3629, %v3573
        %v3640 = vsel %vm1175, %v3631, %v3574
        %v3643 = vsel %vm1175, %v3633, %v3575
        %v3646 = vsel %vm1175, %v3635, %v3576
        %vm3647 = vcmask 1042432
        %v3649 = vsel %vm3647, %v3573, %v3580
        %v3652 = vsel %vm3647, %v3574, %v3581
        %v3655 = vsel %vm3647, %v3575, %v3582
        %v3658 = vsel %vm3647, %v3576, %v3583
        %v3659 = vld [vmem:[%s5] sm:$0xff]
        %v3660 = vld [vmem:[%s5 + $0x8] sm:$0xff]
        %v3661 = vld [vmem:[%s5 + $0x10] sm:$0xff]
        %v3662 = vld [vmem:[%s5 + $0x18] sm:$0xff]
        %v3663 = vld [vmem:[%s5 + $0x20] sm:$0xff]
        %v3664 = vld [vmem:[%s5 + $0x28] sm:$0xff]
        %v3665 = vld [vmem:[%s5 + $0x30] sm:$0xff]
        %v3666 = vld [vmem:[%s5 + $0x38] sm:$0xff]
        %v3667 = vld [vmem:[%s5 + $0x40] sm:$0xff]
        %v3668 = vld [vmem:[%s5 + $0x48] sm:$0xff]
        %v3669 = vld [vmem:[%s5 + $0x50] sm:$0xff]
        %v3670 = vld [vmem:[%s5 + $0x58] sm:$0xff]
        %v3671 = vld [vmem:[%s5 + $0x60] sm:$0xff]
        %v3672 = vld [vmem:[%s5 + $0x68] sm:$0xff]
        %v3673 = vld [vmem:[%s5 + $0x70] sm:$0xff]
        %v3674 = vld [vmem:[%s5 + $0x78] sm:$0xff]
        %v3675 = vld [vmem:[%s5 + $0x80] sm:$0xff]
        %v3676 = vld [vmem:[%s5 + $0x88] sm:$0xff]
        %v3677 = vld [vmem:[%s5 + $0x90] sm:$0xff]
        %v3678 = vld [vmem:[%s5 + $0x98] sm:$0xff]
        %v3679 = vld [vmem:[%s5 + $0xa0] sm:$0xff]
        %v3680 = vld [vmem:[%s5 + $0xa8] sm:$0xff]
        %v3681 = vld [vmem:[%s5 + $0xb0] sm:$0xff]
        %v3682 = vld [vmem:[%s5 + $0xb8] sm:$0xff]
        %v3683 = vld [vmem:[%s5 + $0xc0] sm:$0xff]
        %v3684 = vld [vmem:[%s5 + $0xc8] sm:$0xff]
        %v3685 = vld [vmem:[%s5 + $0xd0] sm:$0xff]
        %v3686 = vld [vmem:[%s5 + $0xd8] sm:$0xff]
        %v3687 = vld [vmem:[%s5 + $0xe0] sm:$0xff]
        %v3688 = vld [vmem:[%s5 + $0xe8] sm:$0xff]
        %v3689 = vld [vmem:[%s5 + $0xf0] sm:$0xff]
        %v3690 = vld [vmem:[%s5 + $0xf8] sm:$0xff]
        %v3691 = vld [vmem:[%s5 + $0x100] sm:$0xff]
        %v3692 = vld [vmem:[%s5 + $0x108] sm:$0xff]
        %v3693 = vld [vmem:[%s5 + $0x110] sm:$0xff]
        %v3694 = vld [vmem:[%s5 + $0x118] sm:$0xff]
        %v3695 = vld [vmem:[%s5 + $0x120] sm:$0xff]
        %v3696 = vld [vmem:[%s5 + $0x128] sm:$0xff]
        %v3697 = vld [vmem:[%s5 + $0x130] sm:$0xff]
        %v3698 = vld [vmem:[%s5 + $0x138] sm:$0xff]
        %v3699 = vld [vmem:[%s5 + $0x140] sm:$0xff]
        %v3700 = vld [vmem:[%s5 + $0x148] sm:$0xff]
        %v3701 = vld [vmem:[%s5 + $0x150] sm:$0xff]
        %v3702 = vld [vmem:[%s5 + $0x158] sm:$0xff]
        %v3703 = vld [vmem:[%s5 + $0x160] sm:$0xff]
        %v3704 = vld [vmem:[%s5 + $0x168] sm:$0xff]
        %v3705 = vld [vmem:[%s5 + $0x170] sm:$0xff]
        %v3706 = vld [vmem:[%s5 + $0x178] sm:$0xff]
        %v3707 = vld [vmem:[%s5 + $0x180] sm:$0xff]
        %v3708 = vld [vmem:[%s5 + $0x188] sm:$0xff]
        %v3709 = vld [vmem:[%s5 + $0x190] sm:$0xff]
        %v3710 = vld [vmem:[%s5 + $0x198] sm:$0xff]
        %v3711 = vld [vmem:[%s5 + $0x1a0] sm:$0x33]
        %v3712 = vld [vmem:[%s6] sm:$0x3]
        %v3714 = vlaneseq
        %v3715 = vshrl.u32 %v3714, 7
        %v3716 = vsub.s32 0, %v3715
        %v3717 = vrot.slane %v3712, %v3716
        %v3718 = vlaneseq
        %v3719 = vshrl.u32 %v3718, 7
        %v3720 = vsub.s32 1, %v3719
        %v3721 = vrot.slane %v3712, %v3720
        %v3777 = vunpack.c.l.b16 %v3659
        %v3778 = vunpack.c.h.b16 %v3659
        %v3779 = vunpack.c.l.b16 %v3660
        %v3780 = vunpack.c.h.b16 %v3660
        %v3781 = vunpack.c.l.b16 %v3661
        %v3782 = vunpack.c.h.b16 %v3661
        %v3783 = vunpack.c.l.b16 %v3662
        %v3784 = vunpack.c.h.b16 %v3662
        %v3785 = vunpack.c.l.b16 %v3663
        %v3786 = vunpack.c.h.b16 %v3663
        %v3787 = vunpack.c.l.b16 %v3664
        %v3788 = vunpack.c.h.b16 %v3664
        %v3789 = vunpack.c.l.b16 %v3665
        %v3790 = vunpack.c.h.b16 %v3665
        %v3791 = vunpack.c.l.b16 %v3666
        %v3792 = vunpack.c.h.b16 %v3666
        %v3793 = vunpack.c.l.b16 %v3667
        %v3794 = vunpack.c.h.b16 %v3667
        %v3795 = vunpack.c.l.b16 %v3668
        %v3796 = vunpack.c.h.b16 %v3668
        %v3797 = vunpack.c.l.b16 %v3669
        %v3798 = vunpack.c.h.b16 %v3669
        %v3799 = vunpack.c.l.b16 %v3670
        %v3800 = vunpack.c.h.b16 %v3670
        %v3801 = vunpack.c.l.b16 %v3671
        %v3802 = vunpack.c.h.b16 %v3671
        %v3803 = vunpack.c.l.b16 %v3672
        %v3804 = vunpack.c.h.b16 %v3672
        %v3805 = vunpack.c.l.b16 %v3673
        %v3806 = vunpack.c.h.b16 %v3673
        %v3807 = vunpack.c.l.b16 %v3674
        %v3808 = vunpack.c.h.b16 %v3674
        %v3809 = vunpack.c.l.b16 %v3675
        %v3810 = vunpack.c.h.b16 %v3675
        %v3811 = vunpack.c.l.b16 %v3676
        %v3812 = vunpack.c.h.b16 %v3676
        %v3813 = vunpack.c.l.b16 %v3677
        %v3814 = vunpack.c.h.b16 %v3677
        %v3815 = vunpack.c.l.b16 %v3678
        %v3816 = vunpack.c.h.b16 %v3678
        %v3817 = vunpack.c.l.b16 %v3679
        %v3818 = vunpack.c.h.b16 %v3679
        %v3819 = vunpack.c.l.b16 %v3680
        %v3820 = vunpack.c.h.b16 %v3680
        %v3821 = vunpack.c.l.b16 %v3681
        %v3822 = vunpack.c.h.b16 %v3681
        %v3823 = vunpack.c.l.b16 %v3682
        %v3824 = vunpack.c.h.b16 %v3682
        %v3825 = vunpack.c.l.b16 %v3683
        %v3826 = vunpack.c.h.b16 %v3683
        %v3827 = vunpack.c.l.b16 %v3684
        %v3828 = vunpack.c.h.b16 %v3684
        %v3829 = vunpack.c.l.b16 %v3685
        %v3830 = vunpack.c.h.b16 %v3685
        %v3831 = vunpack.c.l.b16 %v3686
        %v3832 = vunpack.c.h.b16 %v3686
        %v3833 = vunpack.c.l.b16 %v3687
        %v3834 = vunpack.c.h.b16 %v3687
        %v3835 = vunpack.c.l.b16 %v3688
        %v3836 = vunpack.c.h.b16 %v3688
        %v3837 = vunpack.c.l.b16 %v3689
        %v3838 = vunpack.c.h.b16 %v3689
        %v3839 = vunpack.c.l.b16 %v3690
        %v3840 = vunpack.c.h.b16 %v3690
        %v3841 = vunpack.c.l.b16 %v3691
        %v3842 = vunpack.c.h.b16 %v3691
        %v3843 = vunpack.c.l.b16 %v3692
        %v3844 = vunpack.c.h.b16 %v3692
        %v3845 = vunpack.c.l.b16 %v3693
        %v3846 = vunpack.c.h.b16 %v3693
        %v3847 = vunpack.c.l.b16 %v3694
        %v3848 = vunpack.c.h.b16 %v3694
        %v3849 = vunpack.c.l.b16 %v3695
        %v3850 = vunpack.c.h.b16 %v3695
        %v3851 = vunpack.c.l.b16 %v3696
        %v3852 = vunpack.c.h.b16 %v3696
        %v3853 = vunpack.c.l.b16 %v3697
        %v3854 = vunpack.c.h.b16 %v3697
        %v3855 = vunpack.c.l.b16 %v3698
        %v3856 = vunpack.c.h.b16 %v3698
        %v3857 = vunpack.c.l.b16 %v3699
        %v3858 = vunpack.c.h.b16 %v3699
        %v3859 = vunpack.c.l.b16 %v3700
        %v3860 = vunpack.c.h.b16 %v3700
        %v3861 = vunpack.c.l.b16 %v3701
        %v3862 = vunpack.c.h.b16 %v3701
        %v3863 = vunpack.c.l.b16 %v3702
        %v3864 = vunpack.c.h.b16 %v3702
        %v3865 = vunpack.c.l.b16 %v3703
        %v3866 = vunpack.c.h.b16 %v3703
        %v3867 = vunpack.c.l.b16 %v3704
        %v3868 = vunpack.c.h.b16 %v3704
        %v3869 = vunpack.c.l.b16 %v3705
        %v3870 = vunpack.c.h.b16 %v3705
        %v3871 = vunpack.c.l.b16 %v3706
        %v3872 = vunpack.c.h.b16 %v3706
        %v3873 = vunpack.c.l.b16 %v3707
        %v3874 = vunpack.c.h.b16 %v3707
        %v3875 = vunpack.c.l.b16 %v3708
        %v3876 = vunpack.c.h.b16 %v3708
        %v3877 = vunpack.c.l.b16 %v3709
        %v3878 = vunpack.c.h.b16 %v3709
        %v3879 = vunpack.c.l.b16 %v3710
        %v3880 = vunpack.c.h.b16 %v3710
        %v3881 = vunpack.c.l.b16 %v3711
        %v3882 = vunpack.c.h.b16 %v3711
        %v3883 = vpack.c.b16 %v3779, %v3777
        %v3884 = vpack.c.b16 %v3780, %v3778
        %v3885 = vpack.c.b16 %v3783, %v3781
        %v3886 = vpack.c.b16 %v3784, %v3782
        %v3887 = vpack.c.b16 %v3787, %v3785
        %v3888 = vpack.c.b16 %v3788, %v3786
        %v3889 = vpack.c.b16 %v3791, %v3789
        %v3890 = vpack.c.b16 %v3792, %v3790
        %v3891 = vpack.c.b16 %v3795, %v3793
        %v3892 = vpack.c.b16 %v3796, %v3794
        %v3893 = vpack.c.b16 %v3799, %v3797
        %v3894 = vpack.c.b16 %v3800, %v3798
        %v3895 = vpack.c.b16 %v3803, %v3801
        %v3896 = vpack.c.b16 %v3804, %v3802
        %v3897 = vpack.c.b16 %v3807, %v3805
        %v3898 = vpack.c.b16 %v3808, %v3806
        %v3899 = vpack.c.b16 %v3811, %v3809
        %v3900 = vpack.c.b16 %v3812, %v3810
        %v3901 = vpack.c.b16 %v3815, %v3813
        %v3902 = vpack.c.b16 %v3816, %v3814
        %v3903 = vpack.c.b16 %v3819, %v3817
        %v3904 = vpack.c.b16 %v3820, %v3818
        %v3905 = vpack.c.b16 %v3823, %v3821
        %v3906 = vpack.c.b16 %v3824, %v3822
        %v3907 = vpack.c.b16 %v3827, %v3825
        %v3908 = vpack.c.b16 %v3828, %v3826
        %v3909 = vpack.c.b16 %v3831, %v3829
        %v3910 = vpack.c.b16 %v3832, %v3830
        %v3911 = vpack.c.b16 %v3835, %v3833
        %v3912 = vpack.c.b16 %v3836, %v3834
        %v3913 = vpack.c.b16 %v3839, %v3837
        %v3914 = vpack.c.b16 %v3840, %v3838
        %v3915 = vpack.c.b16 %v3843, %v3841
        %v3916 = vpack.c.b16 %v3844, %v3842
        %v3917 = vpack.c.b16 %v3847, %v3845
        %v3918 = vpack.c.b16 %v3848, %v3846
        %v3919 = vpack.c.b16 %v3851, %v3849
        %v3920 = vpack.c.b16 %v3852, %v3850
        %v3921 = vpack.c.b16 %v3855, %v3853
        %v3922 = vpack.c.b16 %v3856, %v3854
        %v3923 = vpack.c.b16 %v3859, %v3857
        %v3924 = vpack.c.b16 %v3860, %v3858
        %v3925 = vpack.c.b16 %v3863, %v3861
        %v3926 = vpack.c.b16 %v3864, %v3862
        %v3927 = vpack.c.b16 %v3867, %v3865
        %v3928 = vpack.c.b16 %v3868, %v3866
        %v3929 = vpack.c.b16 %v3871, %v3869
        %v3930 = vpack.c.b16 %v3872, %v3870
        %v3931 = vpack.c.b16 %v3875, %v3873
        %v3932 = vpack.c.b16 %v3876, %v3874
        %v3933 = vpack.c.b16 %v3879, %v3877
        %v3934 = vpack.c.b16 %v3880, %v3878
        %v3935 = vpack.c.b16 %v3881, %v3881
        %v3936 = vpack.c.b16 %v3882, %v3882
        %vm3989 = vcmask 293888
        %v3990 = vsel %vm3989, %v3595, 0
        %v3992 = vsel %vm3989, %v3615, 0
        %v3994 = vsel %vm3989, %v3626, 0
        %v3996 = vsel %vm3989, %v3646, 0
        %v3998 = vsel %vm3989, %v3658, 0
        %v4001 = vsel %vm1204, %v3935, 0
        %v4004 = vsel %vm1204, %v3936, 0
        %4006 = vmatprep.subr.bf16.mxu0 %v3884
        %4007 = vmatpush1.bf16.msra.mxu0 %v3883
        %4008 = vmatprep.subr.bf16.mxu0 %v3886
        %4009 = vmatpush1.bf16.msra.mxu0 %v3885
        %4010 = vmatprep.subr.bf16.mxu0 %v3888
        %4011 = vmatpush1.bf16.msra.mxu0 %v3887
        %4012 = vmatprep.subr.bf16.mxu0 %v3890
        %4013 = vmatpush1.bf16.msra.mxu0 %v3889
        %4014 = vmatprep.subr.bf16.mxu0 %v3892
        %4015 = vmatpush1.bf16.msra.mxu0 %v3891
        %4016 = vmatprep.subr.bf16.mxu0 %v3894
        %4017 = vmatpush1.bf16.msra.mxu0 %v3893
        %4018 = vmatprep.subr.bf16.mxu0 %v3896
        %4019 = vmatpush1.bf16.msra.mxu0 %v3895
        %4020 = vmatprep.subr.bf16.mxu0 %v3898
        %4021 = vmatpush1.bf16.msra.mxu0 %v3897
        %4022 = vmatprep.subr.bf16.mxu0 %v3900
        %4023 = vmatpush1.bf16.msra.mxu0 %v3899
        %4024 = vmatprep.subr.bf16.mxu0 %v3902
        %4025 = vmatpush1.bf16.msra.mxu0 %v3901
        %4026 = vmatprep.subr.bf16.mxu0 %v3904
        %4027 = vmatpush1.bf16.msra.mxu0 %v3903
        %4028 = vmatprep.subr.bf16.mxu0 %v3906
        %4029 = vmatpush1.bf16.msra.mxu0 %v3905
        %4030 = vmatprep.subr.bf16.mxu0 %v3908
        %4031 = vmatpush1.bf16.msra.mxu0 %v3907
        %4032 = vmatprep.subr.bf16.mxu0 %v3910
        %4033 = vmatpush1.bf16.msra.mxu0 %v3909
        %4034 = vmatprep.subr.bf16.mxu0 %v3912
        %4035 = vmatpush1.bf16.msra.mxu0 %v3911
        %4036 = vmatprep.subr.bf16.mxu0 %v3914
        %4037 = vmatpush1.bf16.msra.mxu0 %v3913
        %4038 = vmatprep.mubr.bf16.mxu0 %v3589
        %4039 = vmatmul.mubr.bf16.gmra.mrb[0].mxu0 %v3586
        %v4040 = vpop.f32.mrb[0].mxu0
        %v4041 = vadd.f32 %v3717, %v4040
        %v4042 = vpop.f32.mrb[0].mxu0
        %v4043 = vadd.f32 %v3721, %v4042
        %v4044 = vpop.f32.mrb[0].mxu0
        %v4045 = vadd.f32 %v3717, %v4044
        %v4046 = vpop.f32.mrb[0].mxu0
        %v4047 = vadd.f32 %v3721, %v4046
        %4048 = vmatprep.mubr.bf16.mxu0 %v3609
        %4049 = vmatmul.mubr.bf16.gmra.mrb[0].mxu0 %v3606
        %v4050 = vpop.f32.mrb[0].mxu0
        %v4051 = vadd.f32 %v3717, %v4050
        %v4052 = vpop.f32.mrb[0].mxu0
        %v4053 = vadd.f32 %v3721, %v4052
        %v4054 = vpop.f32.mrb[0].mxu0
        %v4055 = vadd.f32 %v3717, %v4054
        %v4056 = vpop.f32.mrb[0].mxu0
        %v4057 = vadd.f32 %v3721, %v4056
        %4058 = vmatprep.mubr.bf16.mxu0 %v3620
        %4059 = vmatmul.mubr.bf16.gmra.mrb[0].mxu0 %v3617
        %v4060 = vpop.f32.mrb[0].mxu0
        %v4061 = vadd.f32 %v3717, %v4060
        %v4062 = vpop.f32.mrb[0].mxu0
        %v4063 = vadd.f32 %v3721, %v4062
        %v4064 = vpop.f32.mrb[0].mxu0
        %v4065 = vadd.f32 %v3717, %v4064
        %v4066 = vpop.f32.mrb[0].mxu0
        %v4067 = vadd.f32 %v3721, %v4066
        %4068 = vmatprep.mubr.bf16.mxu0 %v3640
        %4069 = vmatmul.mubr.bf16.gmra.mrb[0].mxu0 %v3637
        %v4070 = vpop.f32.mrb[0].mxu0
        %v4071 = vadd.f32 %v3717, %v4070
        %v4072 = vpop.f32.mrb[0].mxu0
        %v4073 = vadd.f32 %v3721, %v4072
        %v4074 = vpop.f32.mrb[0].mxu0
        %v4075 = vadd.f32 %v3717, %v4074
        %v4076 = vpop.f32.mrb[0].mxu0
        %v4077 = vadd.f32 %v3721, %v4076
        %4078 = vmatprep.mubr.bf16.mxu0 %v3652
        %4079 = vmatmul.mubr.bf16.gmra.mrb[0].mxu0 %v3649
        %v4080 = vpop.f32.mrb[0].mxu0
        %v4081 = vadd.f32 %v3717, %v4080
        %v4082 = vpop.f32.mrb[0].mxu0
        %v4083 = vadd.f32 %v3721, %v4082
        %v4084 = vpop.f32.mrb[0].mxu0
        %v4085 = vadd.f32 %v3717, %v4084
        %v4086 = vpop.f32.mrb[0].mxu0
        %v4087 = vadd.f32 %v3721, %v4086
        %4088 = vdwg.mxu0
        %4089 = vmatprep.subr.bf16.mxu0 %v3916
        %4090 = vmatpush1.bf16.msra.mxu0 %v3915
        %4091 = vmatprep.subr.bf16.mxu0 %v3918
        %4092 = vmatpush1.bf16.msra.mxu0 %v3917
        %4093 = vmatprep.subr.bf16.mxu0 %v3920
        %4094 = vmatpush1.bf16.msra.mxu0 %v3919
        %4095 = vmatprep.subr.bf16.mxu0 %v3922
        %4096 = vmatpush1.bf16.msra.mxu0 %v3921
        %4097 = vmatprep.subr.bf16.mxu0 %v3924
        %4098 = vmatpush1.bf16.msra.mxu0 %v3923
        %4099 = vmatprep.subr.bf16.mxu0 %v3926
        %4100 = vmatpush1.bf16.msra.mxu0 %v3925
        %4101 = vmatprep.subr.bf16.mxu0 %v3928
        %4102 = vmatpush1.bf16.msra.mxu0 %v3927
        %4103 = vmatprep.subr.bf16.mxu0 %v3930
        %4104 = vmatpush1.bf16.msra.mxu0 %v3929
        %4105 = vmatprep.subr.bf16.mxu0 %v3932
        %4106 = vmatpush1.bf16.msra.mxu0 %v3931
        %4107 = vmatprep.subr.bf16.mxu0 %v3934
        %4108 = vmatpush1.bf16.msra.mxu0 %v3933
        %4109 = vmatprep.subr.bf16.mxu0 %v4004
        %4110 = vmatpush1.bf16.msra.mxu0 %v4001
        %4111 = vmatprep.subr.bf16.mxu0 0
        %4112 = vmatpush1.bf16.msra.mxu0 0
        %4113 = vmatprep.subr.bf16.mxu0 0
        %4114 = vmatpush1.bf16.msra.mxu0 0
        %4115 = vmatprep.subr.bf16.mxu0 0
        %4116 = vmatpush1.bf16.msra.mxu0 0
        %4117 = vmatprep.subr.bf16.mxu0 0
        %4118 = vmatpush1.bf16.msra.mxu0 0
        %4119 = vmatprep.subr.bf16.mxu0 0
        %4120 = vmatpush1.bf16.msra.mxu0 0
        %4121 = vmatprep.mubr.bf16.mxu0 %v3990
        %4122 = vmatmul.mubr.bf16.gmra.mrb[0].mxu0 %v3592
        %v4123 = vpop.f32.mrb[0].mxu0
        %v4124 = vadd.f32 %v4041, %v4123
        %v4125 = vpop.f32.mrb[0].mxu0
        %v4126 = vadd.f32 %v4043, %v4125
        %v4127 = vpop.f32.mrb[0].mxu0
        %v4128 = vadd.f32 %v4045, %v4127
        %v4129 = vpop.f32.mrb[0].mxu0
        %v4130 = vadd.f32 %v4047, %v4129
        %4131 = vmatprep.mubr.bf16.mxu0 %v3992
        %4132 = vmatmul.mubr.bf16.gmra.mrb[0].mxu0 %v3612
        %v4133 = vpop.f32.mrb[0].mxu0
        %v4134 = vadd.f32 %v4051, %v4133
        %v4135 = vpop.f32.mrb[0].mxu0
        %v4136 = vadd.f32 %v4053, %v4135
        %v4137 = vpop.f32.mrb[0].mxu0
        %v4138 = vadd.f32 %v4055, %v4137
        %v4139 = vpop.f32.mrb[0].mxu0
        %v4140 = vadd.f32 %v4057, %v4139
        %4141 = vmatprep.mubr.bf16.mxu0 %v3994
        %4142 = vmatmul.mubr.bf16.gmra.mrb[0].mxu0 %v3623
        %v4143 = vpop.f32.mrb[0].mxu0
        %v4144 = vadd.f32 %v4061, %v4143
        %v4145 = vpop.f32.mrb[0].mxu0
        %v4146 = vadd.f32 %v4063, %v4145
        %v4147 = vpop.f32.mrb[0].mxu0
        %v4148 = vadd.f32 %v4065, %v4147
        %v4149 = vpop.f32.mrb[0].mxu0
        %v4150 = vadd.f32 %v4067, %v4149
        %4151 = vmatprep.mubr.bf16.mxu0 %v3996
        %4152 = vmatmul.mubr.bf16.gmra.mrb[0].mxu0 %v3643
        %v4153 = vpop.f32.mrb[0].mxu0
        %v4154 = vadd.f32 %v4071, %v4153
        %v4155 = vpop.f32.mrb[0].mxu0
        %v4156 = vadd.f32 %v4073, %v4155
        %v4157 = vpop.f32.mrb[0].mxu0
        %v4158 = vadd.f32 %v4075, %v4157
        %v4159 = vpop.f32.mrb[0].mxu0
        %v4160 = vadd.f32 %v4077, %v4159
        %4161 = vmatprep.mubr.bf16.mxu0 %v3998
        %4162 = vmatmul.mubr.bf16.gmra.mrb[0].mxu0 %v3655
        %v4163 = vpop.f32.mrb[0].mxu0
        %v4164 = vadd.f32 %v4081, %v4163
        %v4165 = vpop.f32.mrb[0].mxu0
        %v4166 = vadd.f32 %v4083, %v4165
        %v4167 = vpop.f32.mrb[0].mxu0
        %v4168 = vadd.f32 %v4085, %v4167
        %v4169 = vpop.f32.mrb[0].mxu0
        %v4170 = vadd.f32 %v4087, %v4169
        %4171 = vdwg.mxu0
        %v4172 = vmax.f32 %v4124, 0.0
        %v4173 = vmax.f32 %v4126, 0.0
        %v4174 = vmax.f32 %v4128, 0.0
        %v4175 = vmax.f32 %v4130, 0.0
        %v4176 = vmax.f32 %v4134, 0.0
        %v4177 = vmax.f32 %v4136, 0.0
        %v4178 = vmax.f32 %v4138, 0.0
        %v4179 = vmax.f32 %v4140, 0.0
        %v4180 = vmax.f32 %v4144, 0.0
        %v4181 = vmax.f32 %v4146, 0.0
        %v4182 = vmax.f32 %v4148, 0.0
        %v4183 = vmax.f32 %v4150, 0.0
        %v4184 = vmax.f32 %v4154, 0.0
        %v4185 = vmax.f32 %v4156, 0.0
        %v4186 = vmax.f32 %v4158, 0.0
        %v4187 = vmax.f32 %v4160, 0.0
        %v4188 = vmax.f32 %v4164, 0.0
        %v4189 = vmax.f32 %v4166, 0.0
        %v4190 = vmax.f32 %v4168, 0.0
        %v4191 = vmax.f32 %v4170, 0.0
        %v4192 = vpack.c.bf16 %v4174, %v4172
        %v4193 = vpack.c.bf16 %v4175, %v4173
        %v4194 = vpack.c.bf16 %v4178, %v4176
        %v4195 = vpack.c.bf16 %v4179, %v4177
        %v4196 = vpack.c.bf16 %v4182, %v4180
        %v4197 = vpack.c.bf16 %v4183, %v4181
        %v4198 = vpack.c.bf16 %v4186, %v4184
        %v4199 = vpack.c.bf16 %v4187, %v4185
        %v4200 = vpack.c.bf16 %v4190, %v4188
        %v4201 = vpack.c.bf16 %v4191, %v4189
        %v4202 = vld [vmem:[%s7] sm:$0xff]
        %v4203 = vld [vmem:[%s7 + $0x8] sm:$0xff]
        %v4204 = vld [vmem:[%s7 + $0x10] sm:$0xff]
        %v4205 = vld [vmem:[%s7 + $0x18] sm:$0xff]
        %v4206 = vld [vmem:[%s7 + $0x20] sm:$0xff]
        %v4207 = vld [vmem:[%s7 + $0x28] sm:$0xff]
        %v4208 = vld [vmem:[%s7 + $0x30] sm:$0xff]
        %v4209 = vld [vmem:[%s7 + $0x38] sm:$0xff]
        %v4210 = vld [vmem:[%s7 + $0x40] sm:$0xff]
        %v4211 = vld [vmem:[%s7 + $0x48] sm:$0xff]
        %v4212 = vld [vmem:[%s7 + $0x50] sm:$0xff]
        %v4213 = vld [vmem:[%s7 + $0x58] sm:$0xff]
        %v4214 = vld [vmem:[%s7 + $0x60] sm:$0xff]
        %v4215 = vld [vmem:[%s7 + $0x68] sm:$0xff]
        %v4216 = vld [vmem:[%s7 + $0x70] sm:$0xff]
        %v4217 = vld [vmem:[%s7 + $0x78] sm:$0xff]
        %v4218 = vld [vmem:[%s7 + $0x80] sm:$0xff]
        %v4219 = vld [vmem:[%s7 + $0x88] sm:$0xff]
        %v4220 = vld [vmem:[%s7 + $0x90] sm:$0xff]
        %v4221 = vld [vmem:[%s7 + $0x98] sm:$0xff]
        %v4242 = vunpack.c.l.b16 %v4202
        %v4243 = vunpack.c.h.b16 %v4202
        %v4244 = vunpack.c.l.b16 %v4203
        %v4245 = vunpack.c.h.b16 %v4203
        %v4246 = vunpack.c.l.b16 %v4204
        %v4247 = vunpack.c.h.b16 %v4204
        %v4248 = vunpack.c.l.b16 %v4205
        %v4249 = vunpack.c.h.b16 %v4205
        %v4250 = vunpack.c.l.b16 %v4206
        %v4251 = vunpack.c.h.b16 %v4206
        %v4252 = vunpack.c.l.b16 %v4207
        %v4253 = vunpack.c.h.b16 %v4207
        %v4254 = vunpack.c.l.b16 %v4208
        %v4255 = vunpack.c.h.b16 %v4208
        %v4256 = vunpack.c.l.b16 %v4209
        %v4257 = vunpack.c.h.b16 %v4209
        %v4258 = vunpack.c.l.b16 %v4210
        %v4259 = vunpack.c.h.b16 %v4210
        %v4260 = vunpack.c.l.b16 %v4211
        %v4261 = vunpack.c.h.b16 %v4211
        %v4262 = vunpack.c.l.b16 %v4212
        %v4263 = vunpack.c.h.b16 %v4212
        %v4264 = vunpack.c.l.b16 %v4213
        %v4265 = vunpack.c.h.b16 %v4213
        %v4266 = vunpack.c.l.b16 %v4214
        %v4267 = vunpack.c.h.b16 %v4214
        %v4268 = vunpack.c.l.b16 %v4215
        %v4269 = vunpack.c.h.b16 %v4215
        %v4270 = vunpack.c.l.b16 %v4216
        %v4271 = vunpack.c.h.b16 %v4216
        %v4272 = vunpack.c.l.b16 %v4217
        %v4273 = vunpack.c.h.b16 %v4217
        %v4274 = vunpack.c.l.b16 %v4218
        %v4275 = vunpack.c.h.b16 %v4218
        %v4276 = vunpack.c.l.b16 %v4219
        %v4277 = vunpack.c.h.b16 %v4219
        %v4278 = vunpack.c.l.b16 %v4220
        %v4279 = vunpack.c.h.b16 %v4220
        %v4280 = vunpack.c.l.b16 %v4221
        %v4281 = vunpack.c.h.b16 %v4221
        %v4282 = vpack.c.b16 %v4244, %v4242
        %v4283 = vpack.c.b16 %v4245, %v4243
        %v4284 = vpack.c.b16 %v4248, %v4246
        %v4285 = vpack.c.b16 %v4249, %v4247
        %v4286 = vpack.c.b16 %v4252, %v4250
        %v4287 = vpack.c.b16 %v4253, %v4251
        %v4288 = vpack.c.b16 %v4256, %v4254
        %v4289 = vpack.c.b16 %v4257, %v4255
        %v4290 = vpack.c.b16 %v4260, %v4258
        %v4291 = vpack.c.b16 %v4261, %v4259
        %v4292 = vpack.c.b16 %v4264, %v4262
        %v4293 = vpack.c.b16 %v4265, %v4263
        %v4294 = vpack.c.b16 %v4268, %v4266
        %v4295 = vpack.c.b16 %v4269, %v4267
        %v4296 = vpack.c.b16 %v4272, %v4270
        %v4297 = vpack.c.b16 %v4273, %v4271
        %v4298 = vpack.c.b16 %v4276, %v4274
        %v4299 = vpack.c.b16 %v4277, %v4275
        %v4300 = vpack.c.b16 %v4280, %v4278
        %v4301 = vpack.c.b16 %v4281, %v4279
        %v4323 = vsel %vm569, %v4193, 0
        %v4326 = vsel %vm569, %v4195, 0
        %v4329 = vsel %vm569, %v4197, 0
        %v4332 = vsel %vm569, %v4199, 0
        %v4335 = vsel %vm569, %v4201, 0
        %4337 = vmatprep.subr.bf16.mxu0 %v4283
        %4338 = vmatpush1.bf16.msra.mxu0 %v4282
        %4339 = vmatprep.subr.bf16.mxu0 %v4285
        %4340 = vmatpush1.bf16.msra.mxu0 %v4284
        %4341 = vmatprep.subr.bf16.mxu0 %v4287
        %4342 = vmatpush1.bf16.msra.mxu0 %v4286
        %4343 = vmatprep.subr.bf16.mxu0 %v4289
        %4344 = vmatpush1.bf16.msra.mxu0 %v4288
        %4345 = vmatprep.subr.bf16.mxu0 %v4291
        %4346 = vmatpush1.bf16.msra.mxu0 %v4290
        %4347 = vmatprep.subr.bf16.mxu0 %v4293
        %4348 = vmatpush1.bf16.msra.mxu0 %v4292
        %4349 = vmatprep.subr.bf16.mxu0 %v4295
        %4350 = vmatpush1.bf16.msra.mxu0 %v4294
        %4351 = vmatprep.subr.bf16.mxu0 %v4297
        %4352 = vmatpush1.bf16.msra.mxu0 %v4296
        %4353 = vmatprep.subr.bf16.mxu0 %v4299
        %4354 = vmatpush1.bf16.msra.mxu0 %v4298
        %4355 = vmatprep.subr.bf16.mxu0 %v4301
        %4356 = vmatpush1.bf16.msra.mxu0 %v4300
        %4357 = vmatprep.subr.bf16.mxu0 0
        %4358 = vmatpush1.bf16.msra.mxu0 0
        %4359 = vmatprep.subr.bf16.mxu0 0
        %4360 = vmatpush1.bf16.msra.mxu0 0
        %4361 = vmatprep.subr.bf16.mxu0 0
        %4362 = vmatpush1.bf16.msra.mxu0 0
        %4363 = vmatprep.subr.bf16.mxu0 0
        %4364 = vmatpush1.bf16.msra.mxu0 0
        %4365 = vmatprep.subr.bf16.mxu0 0
        %4366 = vmatpush1.bf16.msra.mxu0 0
        %4367 = vmatprep.subr.bf16.mxu0 0
        %4368 = vmatpush1.bf16.msra.mxu0 0
        %4369 = vmatprep.mubr.bf16.mxu0 %v4323
        %4370 = vmatmul.mubr.bf16.gmra.mrb[0].mxu0 %v4192
        %v4371 = vpop.f32.mrb[0].mxu0
        %v4372 = vadd.f32 0.0, %v4371
        %v4373 = vpop.f32.mrb[0].mxu0
        %v4374 = vadd.f32 0.0, %v4373
        %v4375 = vpop.f32.mrb[0].mxu0
        %v4376 = vadd.f32 0.0, %v4375
        %v4377 = vpop.f32.mrb[0].mxu0
        %v4378 = vadd.f32 0.0, %v4377
        %4379 = vmatprep.mubr.bf16.mxu0 %v4326
        %4380 = vmatmul.mubr.bf16.gmra.mrb[0].mxu0 %v4194
        %v4381 = vpop.f32.mrb[0].mxu0
        %v4382 = vadd.f32 0.0, %v4381
        %v4383 = vpop.f32.mrb[0].mxu0
        %v4384 = vadd.f32 0.0, %v4383
        %v4385 = vpop.f32.mrb[0].mxu0
        %v4386 = vadd.f32 0.0, %v4385
        %v4387 = vpop.f32.mrb[0].mxu0
        %v4388 = vadd.f32 0.0, %v4387
        %4389 = vmatprep.mubr.bf16.mxu0 %v4329
        %4390 = vmatmul.mubr.bf16.gmra.mrb[0].mxu0 %v4196
        %v4391 = vpop.f32.mrb[0].mxu0
        %v4392 = vadd.f32 0.0, %v4391
        %v4393 = vpop.f32.mrb[0].mxu0
        %v4394 = vadd.f32 0.0, %v4393
        %v4395 = vpop.f32.mrb[0].mxu0
        %v4396 = vadd.f32 0.0, %v4395
        %v4397 = vpop.f32.mrb[0].mxu0
        %v4398 = vadd.f32 0.0, %v4397
        %4399 = vmatprep.mubr.bf16.mxu0 %v4332
        %4400 = vmatmul.mubr.bf16.gmra.mrb[0].mxu0 %v4198
        %v4401 = vpop.f32.mrb[0].mxu0
        %v4402 = vadd.f32 0.0, %v4401
        %v4403 = vpop.f32.mrb[0].mxu0
        %v4404 = vadd.f32 0.0, %v4403
        %v4405 = vpop.f32.mrb[0].mxu0
        %v4406 = vadd.f32 0.0, %v4405
        %v4407 = vpop.f32.mrb[0].mxu0
        %v4408 = vadd.f32 0.0, %v4407
        %4409 = vmatprep.mubr.bf16.mxu0 %v4335
        %4410 = vmatmul.mubr.bf16.gmra.mrb[0].mxu0 %v4200
        %v4411 = vpop.f32.mrb[0].mxu0
        %v4412 = vadd.f32 0.0, %v4411
        %v4413 = vpop.f32.mrb[0].mxu0
        %v4414 = vadd.f32 0.0, %v4413
        %v4415 = vpop.f32.mrb[0].mxu0
        %v4416 = vadd.f32 0.0, %v4415
        %v4417 = vpop.f32.mrb[0].mxu0
        %v4418 = vadd.f32 0.0, %v4417
        %4419 = vdwg.mxu0
        %4440 = vrot.lane.b32.xlu0 %v4372, 48
        %v4441 = vpop.permute.xlu0 %4440
        %4442 = vrot.lane.b32.xlu0 %v4374, 48
        %v4443 = vpop.permute.xlu0 %4442
        %4444 = vrot.lane.b32.xlu0 %v4376, 48
        %v4445 = vpop.permute.xlu0 %4444
        %4446 = vrot.lane.b32.xlu0 %v4378, 48
        %v4447 = vpop.permute.xlu0 %4446
        %4448 = vrot.lane.b32.xlu0 %v4382, 48
        %v4449 = vpop.permute.xlu0 %4448
        %4450 = vrot.lane.b32.xlu0 %v4384, 48
        %v4451 = vpop.permute.xlu0 %4450
        %4452 = vrot.lane.b32.xlu0 %v4386, 48
        %v4453 = vpop.permute.xlu0 %4452
        %4454 = vrot.lane.b32.xlu0 %v4388, 48
        %v4455 = vpop.permute.xlu0 %4454
        %4456 = vrot.lane.b32.xlu0 %v4392, 48
        %v4457 = vpop.permute.xlu0 %4456
        %4458 = vrot.lane.b32.xlu0 %v4394, 48
        %v4459 = vpop.permute.xlu0 %4458
        %4460 = vrot.lane.b32.xlu0 %v4396, 48
        %v4461 = vpop.permute.xlu0 %4460
        %4462 = vrot.lane.b32.xlu0 %v4398, 48
        %v4463 = vpop.permute.xlu0 %4462
        %4464 = vrot.lane.b32.xlu0 %v4402, 48
        %v4465 = vpop.permute.xlu0 %4464
        %4466 = vrot.lane.b32.xlu0 %v4404, 48
        %v4467 = vpop.permute.xlu0 %4466
        %4468 = vrot.lane.b32.xlu0 %v4406, 48
        %v4469 = vpop.permute.xlu0 %4468
        %4470 = vrot.lane.b32.xlu0 %v4408, 48
        %v4471 = vpop.permute.xlu0 %4470
        %4472 = vrot.lane.b32.xlu0 %v4412, 48
        %v4473 = vpop.permute.xlu0 %4472
        %4474 = vrot.lane.b32.xlu0 %v4414, 48
        %v4475 = vpop.permute.xlu0 %4474
        %4476 = vrot.lane.b32.xlu0 %v4416, 48
        %v4477 = vpop.permute.xlu0 %4476
        %4478 = vrot.lane.b32.xlu0 %v4418, 48
        %v4479 = vpop.permute.xlu0 %4478
        %vm4480 = vcmask 392192
        %v4481 = vsel %vm4480, %v4441, %v4443
        %v4482 = vsel %vm4480, %v4445, %v4447
        %v4483 = vsel %vm4480, %v4449, %v4451
        %v4484 = vsel %vm4480, %v4453, %v4455
        %v4485 = vsel %vm4480, %v4457, %v4459
        %v4486 = vsel %vm4480, %v4461, %v4463
        %v4487 = vsel %vm4480, %v4465, %v4467
        %v4488 = vsel %vm4480, %v4469, %v4471
        %v4489 = vsel %vm4480, %v4473, %v4475
        %v4490 = vsel %vm4480, %v4477, %v4479
        %v4501 = vmax.f32 %v4372, %v4481
        %v4502 = vmax.f32 %v4376, %v4482
        %v4503 = vmax.f32 %v4382, %v4483
        %v4504 = vmax.f32 %v4386, %v4484
        %v4505 = vmax.f32 %v4392, %v4485
        %v4506 = vmax.f32 %v4396, %v4486
        %v4507 = vmax.f32 %v4402, %v4487
        %v4508 = vmax.f32 %v4406, %v4488
        %v4509 = vmax.f32 %v4412, %v4489
        %v4510 = vmax.f32 %v4416, %v4490
        %v4511 = vpack.c.bf16 %v4502, %v4501
        %v4512 = vpack.c.bf16 %v4504, %v4503
        %v4513 = vpack.c.bf16 %v4506, %v4505
        %v4514 = vpack.c.bf16 %v4508, %v4507
        %v4515 = vpack.c.bf16 %v4510, %v4509
        %v4516 = vld [vmem:[%s8] sm:$0xf]
        %v4517 = vld [vmem:[%s8 + $0x4] sm:$0x1]
        %v4520 = vunpack.c.l.b16 %v4516
        %v4521 = vunpack.c.l.b16 %v4517
        %v4522 = vpack.c.b16 %v4521, %v4520
        %vm4523 = vcmask 80896
        %v4525 = vsel %vm4523, %v4522, 0
        %v4528 = vsel %vm3584, %v4511, 0
        %4530 = vmatprep.subr.bf16.mxu0 0
        %4531 = vmatpush1.bf16.msra.mxu0 %v4528
        %4532 = vmatprep.subr.bf16.mxu0 0
        %4533 = vmatpush1.bf16.msra.mxu0 0
        %4534 = vmatprep.subr.bf16.mxu0 0
        %4535 = vmatpush1.bf16.msra.mxu0 0
        %4536 = vmatprep.subr.bf16.mxu0 0
        %4537 = vmatpush1.bf16.msra.mxu0 0
        %4538 = vmatprep.subr.bf16.mxu0 0
        %4539 = vmatpush1.bf16.msra.mxu0 0
        %4540 = vmatprep.subr.bf16.mxu0 0
        %4541 = vmatpush1.bf16.msra.mxu0 0
        %4542 = vmatprep.subr.bf16.mxu0 0
        %4543 = vmatpush1.bf16.msra.mxu0 0
        %4544 = vmatprep.subr.bf16.mxu0 0
        %4545 = vmatpush1.bf16.msra.mxu0 0
        %4546 = vmatprep.subr.bf16.mxu0 0
        %4547 = vmatpush1.bf16.msra.mxu0 0
        %4548 = vmatprep.subr.bf16.mxu0 0
        %4549 = vmatpush1.bf16.msra.mxu0 0
        %4550 = vmatprep.subr.bf16.mxu0 0
        %4551 = vmatpush1.bf16.msra.mxu0 0
        %4552 = vmatprep.subr.bf16.mxu0 0
        %4553 = vmatpush1.bf16.msra.mxu0 0
        %4554 = vmatprep.subr.bf16.mxu0 0
        %4555 = vmatpush1.bf16.msra.mxu0 0
        %4556 = vmatprep.subr.bf16.mxu0 0
        %4557 = vmatpush1.bf16.msra.mxu0 0
        %4558 = vmatprep.subr.bf16.mxu0 0
        %4559 = vmatpush1.bf16.msra.mxu0 0
        %4560 = vmatprep.subr.bf16.mxu0 0
        %4561 = vmatpush1.bf16.msra.mxu0 0
        %4562 = vmatprep.mubr.bf16.mxu0 0
        %4563 = vmatmul.mubr.bf16.gmra.mrb[0].mxu0 %v4525
        %v4564 = vpop.f32.mrb[0].mxu0
        %v4565 = vadd.f32 0.0, %v4564
        %v4566 = vpop.f32.mrb[0].mxu0
        %v4567 = vpop.f32.mrb[0].mxu0
        %v4568 = vadd.f32 0.0, %v4567
        %v4569 = vpop.f32.mrb[0].mxu0
        %4570 = vdwg.mxu0
        %v4573 = vrot.slane %v4565, 5
        %v4574 = vrot.slane %v4568, 5
        %v4575 = vsel %vm3647, %v4573, %v4574
        %v4577 = vmax.f32 %v4565, %v4575
        %v4578 = vpack.c.bf16 %v4577, %v4577
        %v4580 = vshrl.u32 %v4578, 16
        %4582 = vrot.lane.b32.xlu0 %v4580, 80
        %v4583 = vpop.permute.xlu0 %4582
        %v4585 = vrot.slane %v4578, 1
        %4586 = vrot.lane.b32.xlu0 %v4585, 32
        %v4587 = vpop.permute.xlu0 %4586
        %v4588 = vrot.slane %v4580, 1
        %4589 = vrot.lane.b32.xlu0 %v4588, 112
        %v4590 = vpop.permute.xlu0 %4589
        %v4591 = vrot.slane %v4578, 2
        %4592 = vrot.lane.b32.xlu0 %v4591, 64
        %v4593 = vpop.permute.xlu0 %4592
        %v4596 = vsel %vm2830, %v4578, %v4583
        %v4599 = vsel %vm569, %v4583, %v4587
        %vm4600 = vcmask 916480
        %v4602 = vsel %vm4600, %v4599, %v4590
        %v4605 = vsel %vm563, %v4590, %v4593
        %vm4609 = vcmask 1042432
        %v4610 = vrot.slane %v4511, 5
        %v4611 = vrot.slane %v4512, 5
        %v4612 = vsel %vm4609, %v4610, %v4611
        %v4614 = vsel %vm3584, %v4612, 0
        %4616 = vmatprep.subr.bf16.mxu0 0
        %4617 = vmatpush1.bf16.msra.mxu0 %v4614
        %4618 = vmatprep.subr.bf16.mxu0 0
        %4619 = vmatpush1.bf16.msra.mxu0 0
        %4620 = vmatprep.subr.bf16.mxu0 0
        %4621 = vmatpush1.bf16.msra.mxu0 0
        %4622 = vmatprep.subr.bf16.mxu0 0
        %4623 = vmatpush1.bf16.msra.mxu0 0
        %4624 = vmatprep.subr.bf16.mxu0 0
        %4625 = vmatpush1.bf16.msra.mxu0 0
        %4626 = vmatprep.subr.bf16.mxu0 0
        %4627 = vmatpush1.bf16.msra.mxu0 0
        %4628 = vmatprep.subr.bf16.mxu0 0
        %4629 = vmatpush1.bf16.msra.mxu0 0
        %4630 = vmatprep.subr.bf16.mxu0 0
        %4631 = vmatpush1.bf16.msra.mxu0 0
        %4632 = vmatprep.subr.bf16.mxu0 0
        %4633 = vmatpush1.bf16.msra.mxu0 0
        %4634 = vmatprep.subr.bf16.mxu0 0
        %4635 = vmatpush1.bf16.msra.mxu0 0
        %4636 = vmatprep.subr.bf16.mxu0 0
        %4637 = vmatpush1.bf16.msra.mxu0 0
        %4638 = vmatprep.subr.bf16.mxu0 0
        %4639 = vmatpush1.bf16.msra.mxu0 0
        %4640 = vmatprep.subr.bf16.mxu0 0
        %4641 = vmatpush1.bf16.msra.mxu0 0
        %4642 = vmatprep.subr.bf16.mxu0 0
        %4643 = vmatpush1.bf16.msra.mxu0 0
        %4644 = vmatprep.subr.bf16.mxu0 0
        %4645 = vmatpush1.bf16.msra.mxu0 0
        %4646 = vmatprep.subr.bf16.mxu0 0
        %4647 = vmatpush1.bf16.msra.mxu0 0
        %4648 = vmatprep.mubr.bf16.mxu0 0
        %4649 = vmatmul.mubr.bf16.gmra.mrb[0].mxu0 %v4525
        %v4650 = vpop.f32.mrb[0].mxu0
        %v4651 = vadd.f32 0.0, %v4650
        %v4652 = vpop.f32.mrb[0].mxu0
        %v4653 = vpop.f32.mrb[0].mxu0
        %v4654 = vadd.f32 0.0, %v4653
        %v4655 = vpop.f32.mrb[0].mxu0
        %4656 = vdwg.mxu0
        %v4659 = vrot.slane %v4651, 5
        %v4660 = vrot.slane %v4654, 5
        %v4661 = vsel %vm3647, %v4659, %v4660
        %v4663 = vmax.f32 %v4651, %v4661
        %v4664 = vpack.c.bf16 %v4663, %v4663
        %v4666 = vshrl.u32 %v4664, 16
        %4668 = vrot.lane.b32.xlu0 %v4666, 80
        %v4669 = vpop.permute.xlu0 %4668
        %v4671 = vrot.slane %v4664, 1
        %4672 = vrot.lane.b32.xlu0 %v4671, 32
        %v4673 = vpop.permute.xlu0 %4672
        %v4674 = vrot.slane %v4666, 1
        %4675 = vrot.lane.b32.xlu0 %v4674, 112
        %v4676 = vpop.permute.xlu0 %4675
        %v4677 = vrot.slane %v4664, 2
        %4678 = vrot.lane.b32.xlu0 %v4677, 64
        %v4679 = vpop.permute.xlu0 %4678
        %v4681 = vsel %vm2830, %v4664, %v4669
        %v4683 = vsel %vm569, %v4669, %v4673
        %v4685 = vsel %vm4600, %v4683, %v4676
        %v4687 = vsel %vm563, %v4676, %v4679
        %v4688 = vrot.slane %v4512, 2
        %v4690 = vsel %vm3584, %v4688, 0
        %4692 = vmatprep.subr.bf16.mxu0 0
        %4693 = vmatpush1.bf16.msra.mxu0 %v4690
        %4694 = vmatprep.subr.bf16.mxu0 0
        %4695 = vmatpush1.bf16.msra.mxu0 0
        %4696 = vmatprep.subr.bf16.mxu0 0
        %4697 = vmatpush1.bf16.msra.mxu0 0
        %4698 = vmatprep.subr.bf16.mxu0 0
        %4699 = vmatpush1.bf16.msra.mxu0 0
        %4700 = vmatprep.subr.bf16.mxu0 0
        %4701 = vmatpush1.bf16.msra.mxu0 0
        %4702 = vmatprep.subr.bf16.mxu0 0
        %4703 = vmatpush1.bf16.msra.mxu0 0
        %4704 = vmatprep.subr.bf16.mxu0 0
        %4705 = vmatpush1.bf16.msra.mxu0 0
        %4706 = vmatprep.subr.bf16.mxu0 0
        %4707 = vmatpush1.bf16.msra.mxu0 0
        %4708 = vmatprep.subr.bf16.mxu0 0
        %4709 = vmatpush1.bf16.msra.mxu0 0
        %4710 = vmatprep.subr.bf16.mxu0 0
        %4711 = vmatpush1.bf16.msra.mxu0 0
        %4712 = vmatprep.subr.bf16.mxu0 0
        %4713 = vmatpush1.bf16.msra.mxu0 0
        %4714 = vmatprep.subr.bf16.mxu0 0
        %4715 = vmatpush1.bf16.msra.mxu0 0
        %4716 = vmatprep.subr.bf16.mxu0 0
        %4717 = vmatpush1.bf16.msra.mxu0 0
        %4718 = vmatprep.subr.bf16.mxu0 0
        %4719 = vmatpush1.bf16.msra.mxu0 0
        %4720 = vmatprep.subr.bf16.mxu0 0
        %4721 = vmatpush1.bf16.msra.mxu0 0
        %4722 = vmatprep.subr.bf16.mxu0 0
        %4723 = vmatpush1.bf16.msra.mxu0 0
        %4724 = vmatprep.mubr.bf16.mxu0 0
        %4725 = vmatmul.mubr.bf16.gmra.mrb[0].mxu0 %v4525
        %v4726 = vpop.f32.mrb[0].mxu0
        %v4727 = vadd.f32 0.0, %v4726
        %v4728 = vpop.f32.mrb[0].mxu0
        %v4729 = vpop.f32.mrb[0].mxu0
        %v4730 = vadd.f32 0.0, %v4729
        %v4731 = vpop.f32.mrb[0].mxu0
        %4732 = vdwg.mxu0
        %v4735 = vrot.slane %v4727, 5
        %v4736 = vrot.slane %v4730, 5
        %v4737 = vsel %vm3647, %v4735, %v4736
        %v4739 = vmax.f32 %v4727, %v4737
        %v4740 = vpack.c.bf16 %v4739, %v4739
        %v4742 = vshrl.u32 %v4740, 16
        %4744 = vrot.lane.b32.xlu0 %v4742, 80
        %v4745 = vpop.permute.xlu0 %4744
        %v4747 = vrot.slane %v4740, 1
        %4748 = vrot.lane.b32.xlu0 %v4747, 32
        %v4749 = vpop.permute.xlu0 %4748
        %v4750 = vrot.slane %v4742, 1
        %4751 = vrot.lane.b32.xlu0 %v4750, 112
        %v4752 = vpop.permute.xlu0 %4751
        %v4753 = vrot.slane %v4740, 2
        %4754 = vrot.lane.b32.xlu0 %v4753, 64
        %v4755 = vpop.permute.xlu0 %4754
        %v4757 = vsel %vm2830, %v4740, %v4745
        %v4759 = vsel %vm569, %v4745, %v4749
        %v4761 = vsel %vm4600, %v4759, %v4752
        %v4763 = vsel %vm563, %v4752, %v4755
        %vm4765 = vcmask 1040384
        %v4766 = vrot.slane %v4512, 7
        %v4767 = vrot.slane %v4513, 7
        %v4768 = vsel %vm4765, %v4766, %v4767
        %v4770 = vsel %vm3584, %v4768, 0
        %4772 = vmatprep.subr.bf16.mxu0 0
        %4773 = vmatpush1.bf16.msra.mxu0 %v4770
        %4774 = vmatprep.subr.bf16.mxu0 0
        %4775 = vmatpush1.bf16.msra.mxu0 0
        %4776 = vmatprep.subr.bf16.mxu0 0
        %4777 = vmatpush1.bf16.msra.mxu0 0
        %4778 = vmatprep.subr.bf16.mxu0 0
        %4779 = vmatpush1.bf16.msra.mxu0 0
        %4780 = vmatprep.subr.bf16.mxu0 0
        %4781 = vmatpush1.bf16.msra.mxu0 0
        %4782 = vmatprep.subr.bf16.mxu0 0
        %4783 = vmatpush1.bf16.msra.mxu0 0
        %4784 = vmatprep.subr.bf16.mxu0 0
        %4785 = vmatpush1.bf16.msra.mxu0 0
        %4786 = vmatprep.subr.bf16.mxu0 0
        %4787 = vmatpush1.bf16.msra.mxu0 0
        %4788 = vmatprep.subr.bf16.mxu0 0
        %4789 = vmatpush1.bf16.msra.mxu0 0
        %4790 = vmatprep.subr.bf16.mxu0 0
        %4791 = vmatpush1.bf16.msra.mxu0 0
        %4792 = vmatprep.subr.bf16.mxu0 0
        %4793 = vmatpush1.bf16.msra.mxu0 0
        %4794 = vmatprep.subr.bf16.mxu0 0
        %4795 = vmatpush1.bf16.msra.mxu0 0
        %4796 = vmatprep.subr.bf16.mxu0 0
        %4797 = vmatpush1.bf16.msra.mxu0 0
        %4798 = vmatprep.subr.bf16.mxu0 0
        %4799 = vmatpush1.bf16.msra.mxu0 0
        %4800 = vmatprep.subr.bf16.mxu0 0
        %4801 = vmatpush1.bf16.msra.mxu0 0
        %4802 = vmatprep.subr.bf16.mxu0 0
        %4803 = vmatpush1.bf16.msra.mxu0 0
        %4804 = vmatprep.mubr.bf16.mxu0 0
        %4805 = vmatmul.mubr.bf16.gmra.mrb[0].mxu0 %v4525
        %v4806 = vpop.f32.mrb[0].mxu0
        %v4807 = vadd.f32 0.0, %v4806
        %v4808 = vpop.f32.mrb[0].mxu0
        %v4809 = vpop.f32.mrb[0].mxu0
        %v4810 = vadd.f32 0.0, %v4809
        %v4811 = vpop.f32.mrb[0].mxu0
        %4812 = vdwg.mxu0
        %v4815 = vrot.slane %v4807, 5
        %v4816 = vrot.slane %v4810, 5
        %v4817 = vsel %vm3647, %v4815, %v4816
        %v4819 = vmax.f32 %v4807, %v4817
        %v4820 = vpack.c.bf16 %v4819, %v4819
        %v4822 = vshrl.u32 %v4820, 16
        %4824 = vrot.lane.b32.xlu0 %v4822, 80
        %v4825 = vpop.permute.xlu0 %4824
        %v4827 = vrot.slane %v4820, 1
        %4828 = vrot.lane.b32.xlu0 %v4827, 32
        %v4829 = vpop.permute.xlu0 %4828
        %v4830 = vrot.slane %v4822, 1
        %4831 = vrot.lane.b32.xlu0 %v4830, 112
        %v4832 = vpop.permute.xlu0 %4831
        %v4833 = vrot.slane %v4820, 2
        %4834 = vrot.lane.b32.xlu0 %v4833, 64
        %v4835 = vpop.permute.xlu0 %4834
        %v4837 = vsel %vm2830, %v4820, %v4825
        %v4839 = vsel %vm569, %v4825, %v4829
        %v4841 = vsel %vm4600, %v4839, %v4832
        %v4843 = vsel %vm563, %v4832, %v4835
        %v4845 = vrot.slane %v4513, 4
        %v4846 = vrot.slane %v4514, 4
        %v4847 = vsel %vm1074, %v4845, %v4846
        %v4849 = vsel %vm3584, %v4847, 0
        %4851 = vmatprep.subr.bf16.mxu0 0
        %4852 = vmatpush1.bf16.msra.mxu0 %v4849
        %4853 = vmatprep.subr.bf16.mxu0 0
        %4854 = vmatpush1.bf16.msra.mxu0 0
        %4855 = vmatprep.subr.bf16.mxu0 0
        %4856 = vmatpush1.bf16.msra.mxu0 0
        %4857 = vmatprep.subr.bf16.mxu0 0
        %4858 = vmatpush1.bf16.msra.mxu0 0
        %4859 = vmatprep.subr.bf16.mxu0 0
        %4860 = vmatpush1.bf16.msra.mxu0 0
        %4861 = vmatprep.subr.bf16.mxu0 0
        %4862 = vmatpush1.bf16.msra.mxu0 0
        %4863 = vmatprep.subr.bf16.mxu0 0
        %4864 = vmatpush1.bf16.msra.mxu0 0
        %4865 = vmatprep.subr.bf16.mxu0 0
        %4866 = vmatpush1.bf16.msra.mxu0 0
        %4867 = vmatprep.subr.bf16.mxu0 0
        %4868 = vmatpush1.bf16.msra.mxu0 0
        %4869 = vmatprep.subr.bf16.mxu0 0
        %4870 = vmatpush1.bf16.msra.mxu0 0
        %4871 = vmatprep.subr.bf16.mxu0 0
        %4872 = vmatpush1.bf16.msra.mxu0 0
        %4873 = vmatprep.subr.bf16.mxu0 0
        %4874 = vmatpush1.bf16.msra.mxu0 0
        %4875 = vmatprep.subr.bf16.mxu0 0
        %4876 = vmatpush1.bf16.msra.mxu0 0
        %4877 = vmatprep.subr.bf16.mxu0 0
        %4878 = vmatpush1.bf16.msra.mxu0 0
        %4879 = vmatprep.subr.bf16.mxu0 0
        %4880 = vmatpush1.bf16.msra.mxu0 0
        %4881 = vmatprep.subr.bf16.mxu0 0
        %4882 = vmatpush1.bf16.msra.mxu0 0
        %4883 = vmatprep.mubr.bf16.mxu0 0
        %4884 = vmatmul.mubr.bf16.gmra.mrb[0].mxu0 %v4525
        %v4885 = vpop.f32.mrb[0].mxu0
        %v4886 = vadd.f32 0.0, %v4885
        %v4887 = vpop.f32.mrb[0].mxu0
        %v4888 = vpop.f32.mrb[0].mxu0
        %v4889 = vadd.f32 0.0, %v4888
        %v4890 = vpop.f32.mrb[0].mxu0
        %4891 = vdwg.mxu0
        %v4894 = vrot.slane %v4886, 5
        %v4895 = vrot.slane %v4889, 5
        %v4896 = vsel %vm3647, %v4894, %v4895
        %v4898 = vmax.f32 %v4886, %v4896
        %v4899 = vpack.c.bf16 %v4898, %v4898
        %v4901 = vshrl.u32 %v4899, 16
        %4903 = vrot.lane.b32.xlu0 %v4901, 80
        %v4904 = vpop.permute.xlu0 %4903
        %v4906 = vrot.slane %v4899, 1
        %4907 = vrot.lane.b32.xlu0 %v4906, 32
        %v4908 = vpop.permute.xlu0 %4907
        %v4909 = vrot.slane %v4901, 1
        %4910 = vrot.lane.b32.xlu0 %v4909, 112
        %v4911 = vpop.permute.xlu0 %4910
        %v4912 = vrot.slane %v4899, 2
        %4913 = vrot.lane.b32.xlu0 %v4912, 64
        %v4914 = vpop.permute.xlu0 %4913
        %v4916 = vsel %vm2830, %v4899, %v4904
        %v4918 = vsel %vm569, %v4904, %v4908
        %v4920 = vsel %vm4600, %v4918, %v4911
        %v4922 = vsel %vm563, %v4911, %v4914
        %v4923 = vrot.slane %v4514, 1
        %v4925 = vsel %vm3584, %v4923, 0
        %4927 = vmatprep.subr.bf16.mxu0 0
        %4928 = vmatpush1.bf16.msra.mxu0 %v4925
        %4929 = vmatprep.subr.bf16.mxu0 0
        %4930 = vmatpush1.bf16.msra.mxu0 0
        %4931 = vmatprep.subr.bf16.mxu0 0
        %4932 = vmatpush1.bf16.msra.mxu0 0
        %4933 = vmatprep.subr.bf16.mxu0 0
        %4934 = vmatpush1.bf16.msra.mxu0 0
        %4935 = vmatprep.subr.bf16.mxu0 0
        %4936 = vmatpush1.bf16.msra.mxu0 0
        %4937 = vmatprep.subr.bf16.mxu0 0
        %4938 = vmatpush1.bf16.msra.mxu0 0
        %4939 = vmatprep.subr.bf16.mxu0 0
        %4940 = vmatpush1.bf16.msra.mxu0 0
        %4941 = vmatprep.subr.bf16.mxu0 0
        %4942 = vmatpush1.bf16.msra.mxu0 0
        %4943 = vmatprep.subr.bf16.mxu0 0
        %4944 = vmatpush1.bf16.msra.mxu0 0
        %4945 = vmatprep.subr.bf16.mxu0 0
        %4946 = vmatpush1.bf16.msra.mxu0 0
        %4947 = vmatprep.subr.bf16.mxu0 0
        %4948 = vmatpush1.bf16.msra.mxu0 0
        %4949 = vmatprep.subr.bf16.mxu0 0
        %4950 = vmatpush1.bf16.msra.mxu0 0
        %4951 = vmatprep.subr.bf16.mxu0 0
        %4952 = vmatpush1.bf16.msra.mxu0 0
        %4953 = vmatprep.subr.bf16.mxu0 0
        %4954 = vmatpush1.bf16.msra.mxu0 0
        %4955 = vmatprep.subr.bf16.mxu0 0
        %4956 = vmatpush1.bf16.msra.mxu0 0
        %4957 = vmatprep.subr.bf16.mxu0 0
        %4958 = vmatpush1.bf16.msra.mxu0 0
        %4959 = vmatprep.mubr.bf16.mxu0 0
        %4960 = vmatmul.mubr.bf16.gmra.mrb[0].mxu0 %v4525
        %v4961 = vpop.f32.mrb[0].mxu0
        %v4962 = vadd.f32 0.0, %v4961
        %v4963 = vpop.f32.mrb[0].mxu0
        %v4964 = vpop.f32.mrb[0].mxu0
        %v4965 = vadd.f32 0.0, %v4964
        %v4966 = vpop.f32.mrb[0].mxu0
        %4967 = vdwg.mxu0
        %v4970 = vrot.slane %v4962, 5
        %v4971 = vrot.slane %v4965, 5
        %v4972 = vsel %vm3647, %v4970, %v4971
        %v4974 = vmax.f32 %v4962, %v4972
        %v4975 = vpack.c.bf16 %v4974, %v4974
        %v4977 = vshrl.u32 %v4975, 16
        %4979 = vrot.lane.b32.xlu0 %v4977, 80
        %v4980 = vpop.permute.xlu0 %4979
        %v4982 = vrot.slane %v4975, 1
        %4983 = vrot.lane.b32.xlu0 %v4982, 32
        %v4984 = vpop.permute.xlu0 %4983
        %v4985 = vrot.slane %v4977, 1
        %4986 = vrot.lane.b32.xlu0 %v4985, 112
        %v4987 = vpop.permute.xlu0 %4986
        %v4988 = vrot.slane %v4975, 2
        %4989 = vrot.lane.b32.xlu0 %v4988, 64
        %v4990 = vpop.permute.xlu0 %4989
        %v4992 = vsel %vm2830, %v4975, %v4980
        %v4994 = vsel %vm569, %v4980, %v4984
        %v4996 = vsel %vm4600, %v4994, %v4987
        %v4998 = vsel %vm563, %v4987, %v4990
        %v5000 = vrot.slane %v4514, 6
        %v5001 = vrot.slane %v4515, 6
        %v5002 = vsel %vm1096, %v5000, %v5001
        %v5004 = vsel %vm3584, %v5002, 0
        %5006 = vmatprep.subr.bf16.mxu0 0
        %5007 = vmatpush1.bf16.msra.mxu0 %v5004
        %5008 = vmatprep.subr.bf16.mxu0 0
        %5009 = vmatpush1.bf16.msra.mxu0 0
        %5010 = vmatprep.subr.bf16.mxu0 0
        %5011 = vmatpush1.bf16.msra.mxu0 0
        %5012 = vmatprep.subr.bf16.mxu0 0
        %5013 = vmatpush1.bf16.msra.mxu0 0
        %5014 = vmatprep.subr.bf16.mxu0 0
        %5015 = vmatpush1.bf16.msra.mxu0 0
        %5016 = vmatprep.subr.bf16.mxu0 0
        %5017 = vmatpush1.bf16.msra.mxu0 0
        %5018 = vmatprep.subr.bf16.mxu0 0
        %5019 = vmatpush1.bf16.msra.mxu0 0
        %5020 = vmatprep.subr.bf16.mxu0 0
        %5021 = vmatpush1.bf16.msra.mxu0 0
        %5022 = vmatprep.subr.bf16.mxu0 0
        %5023 = vmatpush1.bf16.msra.mxu0 0
        %5024 = vmatprep.subr.bf16.mxu0 0
        %5025 = vmatpush1.bf16.msra.mxu0 0
        %5026 = vmatprep.subr.bf16.mxu0 0
        %5027 = vmatpush1.bf16.msra.mxu0 0
        %5028 = vmatprep.subr.bf16.mxu0 0
        %5029 = vmatpush1.bf16.msra.mxu0 0
        %5030 = vmatprep.subr.bf16.mxu0 0
        %5031 = vmatpush1.bf16.msra.mxu0 0
        %5032 = vmatprep.subr.bf16.mxu0 0
        %5033 = vmatpush1.bf16.msra.mxu0 0
        %5034 = vmatprep.subr.bf16.mxu0 0
        %5035 = vmatpush1.bf16.msra.mxu0 0
        %5036 = vmatprep.subr.bf16.mxu0 0
        %5037 = vmatpush1.bf16.msra.mxu0 0
        %5038 = vmatprep.mubr.bf16.mxu0 0
        %5039 = vmatmul.mubr.bf16.gmra.mrb[0].mxu0 %v4525
        %v5040 = vpop.f32.mrb[0].mxu0
        %v5041 = vadd.f32 0.0, %v5040
        %v5042 = vpop.f32.mrb[0].mxu0
        %v5043 = vpop.f32.mrb[0].mxu0
        %v5044 = vadd.f32 0.0, %v5043
        %v5045 = vpop.f32.mrb[0].mxu0
        %5046 = vdwg.mxu0
        %v5049 = vrot.slane %v5041, 5
        %v5050 = vrot.slane %v5044, 5
        %v5051 = vsel %vm3647, %v5049, %v5050
        %v5053 = vmax.f32 %v5041, %v5051
        %v5054 = vpack.c.bf16 %v5053, %v5053
        %v5056 = vshrl.u32 %v5054, 16
        %5058 = vrot.lane.b32.xlu0 %v5056, 80
        %v5059 = vpop.permute.xlu0 %5058
        %v5061 = vrot.slane %v5054, 1
        %5062 = vrot.lane.b32.xlu0 %v5061, 32
        %v5063 = vpop.permute.xlu0 %5062
        %v5064 = vrot.slane %v5056, 1
        %5065 = vrot.lane.b32.xlu0 %v5064, 112
        %v5066 = vpop.permute.xlu0 %5065
        %v5067 = vrot.slane %v5054, 2
        %5068 = vrot.lane.b32.xlu0 %v5067, 64
        %v5069 = vpop.permute.xlu0 %5068
        %v5071 = vsel %vm2830, %v5054, %v5059
        %v5073 = vsel %vm569, %v5059, %v5063
        %v5075 = vsel %vm4600, %v5073, %v5066
        %v5077 = vsel %vm563, %v5066, %v5069
        %v5078 = vrot.slane %v4515, 3
        %v5080 = vsel %vm3584, %v5078, 0
        %5082 = vmatprep.subr.bf16.mxu0 0
        %5083 = vmatpush1.bf16.msra.mxu0 %v5080
        %5084 = vmatprep.subr.bf16.mxu0 0
        %5085 = vmatpush1.bf16.msra.mxu0 0
        %5086 = vmatprep.subr.bf16.mxu0 0
        %5087 = vmatpush1.bf16.msra.mxu0 0
        %5088 = vmatprep.subr.bf16.mxu0 0
        %5089 = vmatpush1.bf16.msra.mxu0 0
        %5090 = vmatprep.subr.bf16.mxu0 0
        %5091 = vmatpush1.bf16.msra.mxu0 0
        %5092 = vmatprep.subr.bf16.mxu0 0
        %5093 = vmatpush1.bf16.msra.mxu0 0
        %5094 = vmatprep.subr.bf16.mxu0 0
        %5095 = vmatpush1.bf16.msra.mxu0 0
        %5096 = vmatprep.subr.bf16.mxu0 0
        %5097 = vmatpush1.bf16.msra.mxu0 0
        %5098 = vmatprep.subr.bf16.mxu0 0
        %5099 = vmatpush1.bf16.msra.mxu0 0
        %5100 = vmatprep.subr.bf16.mxu0 0
        %5101 = vmatpush1.bf16.msra.mxu0 0
        %5102 = vmatprep.subr.bf16.mxu0 0
        %5103 = vmatpush1.bf16.msra.mxu0 0
        %5104 = vmatprep.subr.bf16.mxu0 0
        %5105 = vmatpush1.bf16.msra.mxu0 0
        %5106 = vmatprep.subr.bf16.mxu0 0
        %5107 = vmatpush1.bf16.msra.mxu0 0
        %5108 = vmatprep.subr.bf16.mxu0 0
        %5109 = vmatpush1.bf16.msra.mxu0 0
        %5110 = vmatprep.subr.bf16.mxu0 0
        %5111 = vmatpush1.bf16.msra.mxu0 0
        %5112 = vmatprep.subr.bf16.mxu0 0
        %5113 = vmatpush1.bf16.msra.mxu0 0
        %5114 = vmatprep.mubr.bf16.mxu0 0
        %5115 = vmatmul.mubr.bf16.gmra.mrb[0].mxu0 %v4525
        %v5116 = vpop.f32.mrb[0].mxu0
        %v5117 = vadd.f32 0.0, %v5116
        %v5118 = vpop.f32.mrb[0].mxu0
        %v5119 = vpop.f32.mrb[0].mxu0
        %v5120 = vadd.f32 0.0, %v5119
        %v5121 = vpop.f32.mrb[0].mxu0
        %5122 = vdwg.mxu0
        %v5125 = vrot.slane %v5117, 5
        %v5126 = vrot.slane %v5120, 5
        %v5127 = vsel %vm3647, %v5125, %v5126
        %v5129 = vmax.f32 %v5117, %v5127
        %v5130 = vpack.c.bf16 %v5129, %v5129
        %v5132 = vshrl.u32 %v5130, 16
        %5134 = vrot.lane.b32.xlu0 %v5132, 80
        %v5135 = vpop.permute.xlu0 %5134
        %v5137 = vrot.slane %v5130, 1
        %5138 = vrot.lane.b32.xlu0 %v5137, 32
        %v5139 = vpop.permute.xlu0 %5138
        %v5140 = vrot.slane %v5132, 1
        %5141 = vrot.lane.b32.xlu0 %v5140, 112
        %v5142 = vpop.permute.xlu0 %5141
        %v5143 = vrot.slane %v5130, 2
        %5144 = vrot.lane.b32.xlu0 %v5143, 64
        %v5145 = vpop.permute.xlu0 %5144
        %v5147 = vsel %vm2830, %v5130, %v5135
        %v5149 = vsel %vm569, %v5135, %v5139
        %v5151 = vsel %vm4600, %v5149, %v5142
        %v5153 = vsel %vm563, %v5142, %v5145
        %v5154 = vshll.u32 %v4681, 16
        %v5156 = vshll.u32 %v4685, 16
        %v5158 = vshll.u32 %v4687, 16
        %v5160 = vshll.u32 %v4679, 16
        %v5169 = vrot.slane %v4757, 7
        %v5170 = vrot.slane %v4761, 7
        %v5171 = vrot.slane %v4763, 7
        %v5172 = vrot.slane %v4755, 7
        %v5173 = vshll.u32 %v4837, 16
        %v5175 = vrot.slane %v5173, 7
        %v5176 = vshll.u32 %v4841, 16
        %v5178 = vrot.slane %v5176, 7
        %v5179 = vshll.u32 %v4843, 16
        %v5181 = vrot.slane %v5179, 7
        %v5182 = vshll.u32 %v4835, 16
        %v5184 = vrot.slane %v5182, 7
        %v5192 = vrot.slane %v4916, 6
        %v5193 = vrot.slane %v4920, 6
        %v5194 = vrot.slane %v4922, 6
        %v5195 = vrot.slane %v4914, 6
        %v5196 = vshll.u32 %v4992, 16
        %v5198 = vrot.slane %v5196, 6
        %v5199 = vshll.u32 %v4996, 16
        %v5201 = vrot.slane %v5199, 6
        %v5202 = vshll.u32 %v4998, 16
        %v5204 = vrot.slane %v5202, 6
        %v5205 = vshll.u32 %v4990, 16
        %v5207 = vrot.slane %v5205, 6
        %v5215 = vrot.slane %v5071, 5
        %v5216 = vrot.slane %v5075, 5
        %v5217 = vrot.slane %v5077, 5
        %v5218 = vrot.slane %v5069, 5
        %v5219 = vshll.u32 %v5147, 16
        %v5221 = vrot.slane %v5219, 5
        %v5222 = vshll.u32 %v5151, 16
        %v5224 = vrot.slane %v5222, 5
        %v5225 = vshll.u32 %v5153, 16
        %v5227 = vrot.slane %v5225, 5
        %v5228 = vshll.u32 %v5145, 16
        %v5230 = vrot.slane %v5228, 5
        %vm5235 = vsmask.f32 256
        %vm5236 = vmand %vm4765, %vm5235
        %v5237 = vsel %vm5236, %v4596, %v5154
        %v5238 = vsel %vm5236, %v4602, %v5156
        %v5239 = vsel %vm5236, %v4605, %v5158
        %v5240 = vsel %vm5236, %v4593, %v5160
        %v5243 = vsel %vm3627, %v5237, %v5169
        %v5247 = vsel %vm3627, %v5238, %v5170
        %v5251 = vsel %vm3627, %v5239, %v5171
        %v5255 = vsel %vm3627, %v5240, %v5172
        %vm5257 = vsmask.f32 1280
        %vm5258 = vmand %vm1096, %vm5257
        %v5259 = vsel %vm5258, %v5243, %v5175
        %v5260 = vsel %vm5258, %v5247, %v5178
        %v5261 = vsel %vm5258, %v5251, %v5181
        %v5262 = vsel %vm5258, %v5255, %v5184
        %v5265 = vsel %vm1204, %v5259, %v5192
        %v5269 = vsel %vm1204, %v5260, %v5193
        %v5273 = vsel %vm1204, %v5261, %v5194
        %v5277 = vsel %vm1204, %v5262, %v5195
        %vm5279 = vsmask.f32 2304
        %vm5280 = vmand %vm4609, %vm5279
        %v5281 = vsel %vm5280, %v5265, %v5198
        %v5282 = vsel %vm5280, %v5269, %v5201
        %v5283 = vsel %vm5280, %v5273, %v5204
        %v5284 = vsel %vm5280, %v5277, %v5207
        %v5287 = vsel %vm3647, %v5281, %v5215
        %v5291 = vsel %vm3647, %v5282, %v5216
        %v5295 = vsel %vm3647, %v5283, %v5217
        %v5299 = vsel %vm3647, %v5284, %v5218
        %vm5301 = vsmask.f32 3328
        %vm5302 = vmand %vm1074, %vm5301
        %v5303 = vsel %vm5302, %v5287, %v5221
        %v5304 = vsel %vm5302, %v5291, %v5224
        %v5305 = vsel %vm5302, %v5295, %v5227
        %v5306 = vsel %vm5302, %v5299, %v5230
        %v5307 = vld [vmem:[%s9] sm:$0xf]
        %v5308 = vld [vmem:[%s9 + $0x4] sm:$0xf]
        %v5309 = vld [vmem:[%s9 + $0x8] sm:$0xf]
        %v5310 = vld [vmem:[%s9 + $0xc] sm:$0xf]
        %v5311 = vld [vmem:[%s9 + $0x10] sm:$0xf]
        %v5312 = vld [vmem:[%s9 + $0x14] sm:$0xf]
        %v5313 = vld [vmem:[%s9 + $0x18] sm:$0xf]
        %v5314 = vld [vmem:[%s9 + $0x1c] sm:$0xf]
        %v5315 = vld [vmem:[%s9 + $0x20] sm:$0xf]
        %v5316 = vld [vmem:[%s9 + $0x24] sm:$0xf]
        %v5317 = vld [vmem:[%s9 + $0x28] sm:$0xf]
        %v5318 = vld [vmem:[%s9 + $0x2c] sm:$0xf]
        %v5319 = vld [vmem:[%s9 + $0x30] sm:$0xf]
        %v5320 = vld [vmem:[%s9 + $0x34] sm:$0xf]
        %v5321 = vld [vmem:[%s9 + $0x38] sm:$0xf]
        %v5322 = vld [vmem:[%s9 + $0x3c] sm:$0xf]
        %v5323 = vld [vmem:[%s9 + $0x40] sm:$0xf]
        %v5324 = vld [vmem:[%s9 + $0x44] sm:$0xf]
        %v5325 = vld [vmem:[%s9 + $0x48] sm:$0xf]
        %v5326 = vld [vmem:[%s9 + $0x4c] sm:$0xf]
        %v5327 = vld [vmem:[%s9 + $0x50] sm:$0xf]
        %v5328 = vld [vmem:[%s9 + $0x54] sm:$0xf]
        %v5329 = vld [vmem:[%s9 + $0x58] sm:$0xf]
        %v5330 = vld [vmem:[%s9 + $0x5c] sm:$0xf]
        %v5331 = vld [vmem:[%s9 + $0x60] sm:$0xf]
        %v5332 = vld [vmem:[%s9 + $0x64] sm:$0xf]
        %v5333 = vld [vmem:[%s9 + $0x68] sm:$0xf]
        %v5334 = vld [vmem:[%s9 + $0x6c] sm:$0xf]
        %v5335 = vld [vmem:[%s9 + $0x70] sm:$0xf]
        %v5336 = vld [vmem:[%s9 + $0x74] sm:$0xf]
        %v5337 = vld [vmem:[%s9 + $0x78] sm:$0xf]
        %v5338 = vld [vmem:[%s9 + $0x7c] sm:$0xf]
        %v5339 = vld [vmem:[%s9 + $0x80] sm:$0xf]
        %v5340 = vld [vmem:[%s9 + $0x84] sm:$0xf]
        %v5341 = vld [vmem:[%s9 + $0x88] sm:$0xf]
        %v5342 = vld [vmem:[%s9 + $0x8c] sm:$0xf]
        %v5343 = vld [vmem:[%s9 + $0x90] sm:$0xf]
        %v5344 = vld [vmem:[%s9 + $0x94] sm:$0xf]
        %v5345 = vld [vmem:[%s9 + $0x98] sm:$0xf]
        %v5346 = vld [vmem:[%s9 + $0x9c] sm:$0xf]
        %v5347 = vld [vmem:[%s9 + $0xa0] sm:$0xf]
        %v5348 = vld [vmem:[%s9 + $0xa4] sm:$0xf]
        %v5349 = vld [vmem:[%s9 + $0xa8] sm:$0xf]
        %v5350 = vld [vmem:[%s9 + $0xac] sm:$0xf]
        %v5351 = vld [vmem:[%s9 + $0xb0] sm:$0xf]
        %v5352 = vld [vmem:[%s9 + $0xb4] sm:$0xf]
        %v5353 = vld [vmem:[%s9 + $0xb8] sm:$0xf]
        %v5354 = vld [vmem:[%s9 + $0xbc] sm:$0xf]
        %v5355 = vld [vmem:[%s9 + $0xc0] sm:$0xf]
        %v5356 = vld [vmem:[%s9 + $0xc4] sm:$0xf]
        %v5357 = vld [vmem:[%s10] sm:$0x1]
        %v5359 = vlaneseq
        %v5360 = vshrl.u32 %v5359, 7
        %v5361 = vsub.s32 0, %v5360
        %v5362 = vrot.slane %v5357, %v5361
        %v5414 = vunpack.c.l.b16 %v5307
        %v5415 = vunpack.c.l.b16 %v5308
        %v5416 = vunpack.c.l.b16 %v5309
        %v5417 = vunpack.c.l.b16 %v5310
        %v5418 = vunpack.c.l.b16 %v5311
        %v5419 = vunpack.c.l.b16 %v5312
        %v5420 = vunpack.c.l.b16 %v5313
        %v5421 = vunpack.c.l.b16 %v5314
        %v5422 = vunpack.c.l.b16 %v5315
        %v5423 = vunpack.c.l.b16 %v5316
        %v5424 = vunpack.c.l.b16 %v5317
        %v5425 = vunpack.c.l.b16 %v5318
        %v5426 = vunpack.c.l.b16 %v5319
        %v5427 = vunpack.c.l.b16 %v5320
        %v5428 = vunpack.c.l.b16 %v5321
        %v5429 = vunpack.c.l.b16 %v5322
        %v5430 = vunpack.c.l.b16 %v5323
        %v5431 = vunpack.c.l.b16 %v5324
        %v5432 = vunpack.c.l.b16 %v5325
        %v5433 = vunpack.c.l.b16 %v5326
        %v5434 = vunpack.c.l.b16 %v5327
        %v5435 = vunpack.c.l.b16 %v5328
        %v5436 = vunpack.c.l.b16 %v5329
        %v5437 = vunpack.c.l.b16 %v5330
        %v5438 = vunpack.c.l.b16 %v5331
        %v5439 = vunpack.c.l.b16 %v5332
        %v5440 = vunpack.c.l.b16 %v5333
        %v5441 = vunpack.c.l.b16 %v5334
        %v5442 = vunpack.c.l.b16 %v5335
        %v5443 = vunpack.c.l.b16 %v5336
        %v5444 = vunpack.c.l.b16 %v5337
        %v5445 = vunpack.c.l.b16 %v5338
        %v5446 = vunpack.c.l.b16 %v5339
        %v5447 = vunpack.c.l.b16 %v5340
        %v5448 = vunpack.c.l.b16 %v5341
        %v5449 = vunpack.c.l.b16 %v5342
        %v5450 = vunpack.c.l.b16 %v5343
        %v5451 = vunpack.c.l.b16 %v5344
        %v5452 = vunpack.c.l.b16 %v5345
        %v5453 = vunpack.c.l.b16 %v5346
        %v5454 = vunpack.c.l.b16 %v5347
        %v5455 = vunpack.c.l.b16 %v5348
        %v5456 = vunpack.c.l.b16 %v5349
        %v5457 = vunpack.c.l.b16 %v5350
        %v5458 = vunpack.c.l.b16 %v5351
        %v5459 = vunpack.c.l.b16 %v5352
        %v5460 = vunpack.c.l.b16 %v5353
        %v5461 = vunpack.c.l.b16 %v5354
        %v5462 = vunpack.c.l.b16 %v5355
        %v5463 = vunpack.c.l.b16 %v5356
        %v5464 = vpack.c.b16 %v5415, %v5414
        %v5465 = vpack.c.b16 %v5417, %v5416
        %v5466 = vpack.c.b16 %v5419, %v5418
        %v5467 = vpack.c.b16 %v5421, %v5420
        %v5468 = vpack.c.b16 %v5423, %v5422
        %v5469 = vpack.c.b16 %v5425, %v5424
        %v5470 = vpack.c.b16 %v5427, %v5426
        %v5471 = vpack.c.b16 %v5429, %v5428
        %v5472 = vpack.c.b16 %v5431, %v5430
        %v5473 = vpack.c.b16 %v5433, %v5432
        %v5474 = vpack.c.b16 %v5435, %v5434
        %v5475 = vpack.c.b16 %v5437, %v5436
        %v5476 = vpack.c.b16 %v5439, %v5438
        %v5477 = vpack.c.b16 %v5441, %v5440
        %v5478 = vpack.c.b16 %v5443, %v5442
        %v5479 = vpack.c.b16 %v5445, %v5444
        %v5480 = vpack.c.b16 %v5447, %v5446
        %v5481 = vpack.c.b16 %v5449, %v5448
        %v5482 = vpack.c.b16 %v5451, %v5450
        %v5483 = vpack.c.b16 %v5453, %v5452
        %v5484 = vpack.c.b16 %v5455, %v5454
        %v5485 = vpack.c.b16 %v5457, %v5456
        %v5486 = vpack.c.b16 %v5459, %v5458
        %v5487 = vpack.c.b16 %v5461, %v5460
        %v5488 = vpack.c.b16 %v5463, %v5462
        %vm5514 = vcmask 130048
        %v5516 = vsel %vm5514, %v5306, 0
        %5518 = vmatprep.subr.bf16.mxu0 0
        %5519 = vmatpush1.bf16.msra.mxu0 %v5464
        %5520 = vmatprep.subr.bf16.mxu0 0
        %5521 = vmatpush1.bf16.msra.mxu0 %v5465
        %5522 = vmatprep.subr.bf16.mxu0 0
        %5523 = vmatpush1.bf16.msra.mxu0 %v5466
        %5524 = vmatprep.subr.bf16.mxu0 0
        %5525 = vmatpush1.bf16.msra.mxu0 %v5467
        %5526 = vmatprep.subr.bf16.mxu0 0
        %5527 = vmatpush1.bf16.msra.mxu0 %v5468
        %5528 = vmatprep.subr.bf16.mxu0 0
        %5529 = vmatpush1.bf16.msra.mxu0 %v5469
        %5530 = vmatprep.subr.bf16.mxu0 0
        %5531 = vmatpush1.bf16.msra.mxu0 %v5470
        %5532 = vmatprep.subr.bf16.mxu0 0
        %5533 = vmatpush1.bf16.msra.mxu0 %v5471
        %5534 = vmatprep.subr.bf16.mxu0 0
        %5535 = vmatpush1.bf16.msra.mxu0 %v5472
        %5536 = vmatprep.subr.bf16.mxu0 0
        %5537 = vmatpush1.bf16.msra.mxu0 %v5473
        %5538 = vmatprep.subr.bf16.mxu0 0
        %5539 = vmatpush1.bf16.msra.mxu0 %v5474
        %5540 = vmatprep.subr.bf16.mxu0 0
        %5541 = vmatpush1.bf16.msra.mxu0 %v5475
        %5542 = vmatprep.subr.bf16.mxu0 0
        %5543 = vmatpush1.bf16.msra.mxu0 %v5476
        %5544 = vmatprep.subr.bf16.mxu0 0
        %5545 = vmatpush1.bf16.msra.mxu0 %v5477
        %5546 = vmatprep.subr.bf16.mxu0 0
        %5547 = vmatpush1.bf16.msra.mxu0 %v5478
        %5548 = vmatprep.subr.bf16.mxu0 0
        %5549 = vmatpush1.bf16.msra.mxu0 %v5479
        %5550 = vmatprep.mubr.bf16.mxu0 %v5304
        %5551 = vmatmul.mubr.bf16.gmra.mrb[0].mxu0 %v5303
        %v5552 = vpop.f32.mrb[0].mxu0
        %v5553 = vadd.f32 %v5362, %v5552
        %v5554 = vpop.f32.mrb[0].mxu0
        %v5555 = vpop.f32.mrb[0].mxu0
        %v5556 = vpop.f32.mrb[0].mxu0
        %5557 = vdwg.mxu0
        %5558 = vmatprep.subr.bf16.mxu0 0
        %5559 = vmatpush1.bf16.msra.mxu0 %v5480
        %5560 = vmatprep.subr.bf16.mxu0 0
        %5561 = vmatpush1.bf16.msra.mxu0 %v5481
        %5562 = vmatprep.subr.bf16.mxu0 0
        %5563 = vmatpush1.bf16.msra.mxu0 %v5482
        %5564 = vmatprep.subr.bf16.mxu0 0
        %5565 = vmatpush1.bf16.msra.mxu0 %v5483
        %5566 = vmatprep.subr.bf16.mxu0 0
        %5567 = vmatpush1.bf16.msra.mxu0 %v5484
        %5568 = vmatprep.subr.bf16.mxu0 0
        %5569 = vmatpush1.bf16.msra.mxu0 %v5485
        %5570 = vmatprep.subr.bf16.mxu0 0
        %5571 = vmatpush1.bf16.msra.mxu0 %v5486
        %5572 = vmatprep.subr.bf16.mxu0 0
        %5573 = vmatpush1.bf16.msra.mxu0 %v5487
        %5574 = vmatprep.subr.bf16.mxu0 0
        %5575 = vmatpush1.bf16.msra.mxu0 %v5488
        %5576 = vmatprep.subr.bf16.mxu0 0
        %5577 = vmatpush1.bf16.msra.mxu0 0
        %5578 = vmatprep.subr.bf16.mxu0 0
        %5579 = vmatpush1.bf16.msra.mxu0 0
        %5580 = vmatprep.subr.bf16.mxu0 0
        %5581 = vmatpush1.bf16.msra.mxu0 0
        %5582 = vmatprep.subr.bf16.mxu0 0
        %5583 = vmatpush1.bf16.msra.mxu0 0
        %5584 = vmatprep.subr.bf16.mxu0 0
        %5585 = vmatpush1.bf16.msra.mxu0 0
        %5586 = vmatprep.subr.bf16.mxu0 0
        %5587 = vmatpush1.bf16.msra.mxu0 0
        %5588 = vmatprep.subr.bf16.mxu0 0
        %5589 = vmatpush1.bf16.msra.mxu0 0
        %5590 = vmatprep.mubr.bf16.mxu0 %v5516
        %5591 = vmatmul.mubr.bf16.gmra.mrb[0].mxu0 %v5305
        %v5592 = vpop.f32.mrb[0].mxu0
        %v5593 = vadd.f32 %v5553, %v5592
        %v5594 = vpop.f32.mrb[0].mxu0
        %v5595 = vpop.f32.mrb[0].mxu0
        %v5596 = vpop.f32.mrb[0].mxu0
        %5597 = vdwg.mxu0
        %v5598 = vmax.f32 %v5593, 0.0
        %v5599 = vpack.c.bf16 %v5598, %v5598
        %v5600 = vld [vmem:[%s11] sm:$0xf]
        %v5601 = vld [vmem:[%s11 + $0x4] sm:$0xf]
        %v5602 = vld [vmem:[%s11 + $0x8] sm:$0xf]
        %v5603 = vld [vmem:[%s11 + $0xc] sm:$0xf]
        %v5604 = vld [vmem:[%s11 + $0x10] sm:$0xf]
        %v5605 = vld [vmem:[%s11 + $0x14] sm:$0xf]
        %v5606 = vld [vmem:[%s11 + $0x18] sm:$0xf]
        %v5607 = vld [vmem:[%s11 + $0x1c] sm:$0xf]
        %v5608 = vld [vmem:[%s11 + $0x20] sm:$0xf]
        %v5609 = vld [vmem:[%s11 + $0x24] sm:$0xf]
        %v5610 = vld [vmem:[%s11 + $0x28] sm:$0xf]
        %v5611 = vld [vmem:[%s11 + $0x2c] sm:$0xf]
        %v5612 = vld [vmem:[%s11 + $0x30] sm:$0xf]
        %v5613 = vld [vmem:[%s11 + $0x34] sm:$0xf]
        %v5614 = vld [vmem:[%s11 + $0x38] sm:$0xf]
        %v5615 = vld [vmem:[%s12] sm:$0x1]
        %v5617 = vlaneseq
        %v5618 = vshrl.u32 %v5617, 7
        %v5619 = vsub.s32 0, %v5618
        %v5620 = vrot.slane %v5615, %v5619
        %v5637 = vunpack.c.l.b16 %v5600
        %v5638 = vunpack.c.l.b16 %v5601
        %v5639 = vunpack.c.l.b16 %v5602
        %v5640 = vunpack.c.l.b16 %v5603
        %v5641 = vunpack.c.l.b16 %v5604
        %v5642 = vunpack.c.l.b16 %v5605
        %v5643 = vunpack.c.l.b16 %v5606
        %v5644 = vunpack.c.l.b16 %v5607
        %v5645 = vunpack.c.l.b16 %v5608
        %v5646 = vunpack.c.l.b16 %v5609
        %v5647 = vunpack.c.l.b16 %v5610
        %v5648 = vunpack.c.l.b16 %v5611
        %v5649 = vunpack.c.l.b16 %v5612
        %v5650 = vunpack.c.l.b16 %v5613
        %v5651 = vunpack.c.l.b16 %v5614
        %v5652 = vpack.c.b16 %v5638, %v5637
        %v5653 = vpack.c.b16 %v5640, %v5639
        %v5654 = vpack.c.b16 %v5642, %v5641
        %v5655 = vpack.c.b16 %v5644, %v5643
        %v5656 = vpack.c.b16 %v5646, %v5645
        %v5657 = vpack.c.b16 %v5648, %v5647
        %v5658 = vpack.c.b16 %v5650, %v5649
        %v5659 = vpack.c.b16 %v5651, %v5651
        %vm5667 = vcmask 982016
        %v5669 = vsel %vm5667, %v5599, 0
        %v5672 = vsel %vm1188, %v5659, 0
        %5674 = vmatprep.subr.bf16.mxu0 0
        %5675 = vmatpush1.bf16.msra.mxu0 %v5652
        %5676 = vmatprep.subr.bf16.mxu0 0
        %5677 = vmatpush1.bf16.msra.mxu0 %v5653
        %5678 = vmatprep.subr.bf16.mxu0 0
        %5679 = vmatpush1.bf16.msra.mxu0 %v5654
        %5680 = vmatprep.subr.bf16.mxu0 0
        %5681 = vmatpush1.bf16.msra.mxu0 %v5655
        %5682 = vmatprep.subr.bf16.mxu0 0
        %5683 = vmatpush1.bf16.msra.mxu0 %v5656
        %5684 = vmatprep.subr.bf16.mxu0 0
        %5685 = vmatpush1.bf16.msra.mxu0 %v5657
        %5686 = vmatprep.subr.bf16.mxu0 0
        %5687 = vmatpush1.bf16.msra.mxu0 %v5658
        %5688 = vmatprep.subr.bf16.mxu0 0
        %5689 = vmatpush1.bf16.msra.mxu0 %v5672
        %5690 = vmatprep.subr.bf16.mxu0 0
        %5691 = vmatpush1.bf16.msra.mxu0 0
        %5692 = vmatprep.subr.bf16.mxu0 0
        %5693 = vmatpush1.bf16.msra.mxu0 0
        %5694 = vmatprep.subr.bf16.mxu0 0
        %5695 = vmatpush1.bf16.msra.mxu0 0
        %5696 = vmatprep.subr.bf16.mxu0 0
        %5697 = vmatpush1.bf16.msra.mxu0 0
        %5698 = vmatprep.subr.bf16.mxu0 0
        %5699 = vmatpush1.bf16.msra.mxu0 0
        %5700 = vmatprep.subr.bf16.mxu0 0
        %5701 = vmatpush1.bf16.msra.mxu0 0
        %5702 = vmatprep.subr.bf16.mxu0 0
        %5703 = vmatpush1.bf16.msra.mxu0 0
        %5704 = vmatprep.subr.bf16.mxu0 0
        %5705 = vmatpush1.bf16.msra.mxu0 0
        %5706 = vmatprep.mubr.bf16.mxu0 0
        %5707 = vmatmul.mubr.bf16.gmra.mrb[0].mxu0 %v5669
        %v5708 = vpop.f32.mrb[0].mxu0
        %v5709 = vadd.f32 %v5620, %v5708
        %v5710 = vpop.f32.mrb[0].mxu0
        %v5711 = vpop.f32.mrb[0].mxu0
        %v5712 = vpop.f32.mrb[0].mxu0
        %5713 = vdwg.mxu0
        %v5714 = vmax.f32 %v5709, 0.0
        %v5715 = vpack.c.bf16 %v5714, %v5714
        %v5716 = vld [vmem:[%s13] sm:$0xf]
        %v5717 = vld [vmem:[%s13 + $0x4] sm:$0xf]
        %v5718 = vld [vmem:[%s13 + $0x8] sm:$0xf]
        %v5719 = vld [vmem:[%s13 + $0xc] sm:$0xf]
        %v5720 = vld [vmem:[%s13 + $0x10] sm:$0xf]
        %v5721 = vld [vmem:[%s13 + $0x14] sm:$0xf]
        %v5722 = vld [vmem:[%s13 + $0x18] sm:$0xf]
        %v5723 = vld [vmem:[%s13 + $0x1c] sm:$0xf]
        %v5724 = vld [vmem:[%s13 + $0x20] sm:$0xf]
        %v5725 = vld [vmem:[%s13 + $0x24] sm:$0xf]
        %v5726 = vld [vmem:[%s13 + $0x28] sm:$0x3]
        %v5727 = vld [vmem:[%s14] sm:$0x1]
        %v5729 = vlaneseq
        %v5730 = vshrl.u32 %v5729, 7
        %v5731 = vsub.s32 0, %v5730
        %v5732 = vrot.slane %v5727, %v5731
        %v5745 = vunpack.c.l.b16 %v5716
        %v5746 = vunpack.c.l.b16 %v5717
        %v5747 = vunpack.c.l.b16 %v5718
        %v5748 = vunpack.c.l.b16 %v5719
        %v5749 = vunpack.c.l.b16 %v5720
        %v5750 = vunpack.c.l.b16 %v5721
        %v5751 = vunpack.c.l.b16 %v5722
        %v5752 = vunpack.c.l.b16 %v5723
        %v5753 = vunpack.c.l.b16 %v5724
        %v5754 = vunpack.c.l.b16 %v5725
        %v5755 = vunpack.c.l.b16 %v5726
        %v5756 = vpack.c.b16 %v5746, %v5745
        %v5757 = vpack.c.b16 %v5748, %v5747
        %v5758 = vpack.c.b16 %v5750, %v5749
        %v5759 = vpack.c.b16 %v5752, %v5751
        %v5760 = vpack.c.b16 %v5754, %v5753
        %v5761 = vpack.c.b16 %v5755, %v5755
        %v5768 = vsel %vm2822, %v5715, 0
        %v5771 = vsel %vm1204, %v5761, 0
        %5773 = vmatprep.subr.bf16.mxu0 0
        %5774 = vmatpush1.bf16.msra.mxu0 %v5756
        %5775 = vmatprep.subr.bf16.mxu0 0
        %5776 = vmatpush1.bf16.msra.mxu0 %v5757
        %5777 = vmatprep.subr.bf16.mxu0 0
        %5778 = vmatpush1.bf16.msra.mxu0 %v5758
        %5779 = vmatprep.subr.bf16.mxu0 0
        %5780 = vmatpush1.bf16.msra.mxu0 %v5759
        %5781 = vmatprep.subr.bf16.mxu0 0
        %5782 = vmatpush1.bf16.msra.mxu0 %v5760
        %5783 = vmatprep.subr.bf16.mxu0 0
        %5784 = vmatpush1.bf16.msra.mxu0 %v5771
        %5785 = vmatprep.subr.bf16.mxu0 0
        %5786 = vmatpush1.bf16.msra.mxu0 0
        %5787 = vmatprep.subr.bf16.mxu0 0
        %5788 = vmatpush1.bf16.msra.mxu0 0
        %5789 = vmatprep.subr.bf16.mxu0 0
        %5790 = vmatpush1.bf16.msra.mxu0 0
        %5791 = vmatprep.subr.bf16.mxu0 0
        %5792 = vmatpush1.bf16.msra.mxu0 0
        %5793 = vmatprep.subr.bf16.mxu0 0
        %5794 = vmatpush1.bf16.msra.mxu0 0
        %5795 = vmatprep.subr.bf16.mxu0 0
        %5796 = vmatpush1.bf16.msra.mxu0 0
        %5797 = vmatprep.subr.bf16.mxu0 0
        %5798 = vmatpush1.bf16.msra.mxu0 0
        %5799 = vmatprep.subr.bf16.mxu0 0
        %5800 = vmatpush1.bf16.msra.mxu0 0
        %5801 = vmatprep.subr.bf16.mxu0 0
        %5802 = vmatpush1.bf16.msra.mxu0 0
        %5803 = vmatprep.subr.bf16.mxu0 0
        %5804 = vmatpush1.bf16.msra.mxu0 0
        %5805 = vmatprep.mubr.bf16.mxu0 0
        %5806 = vmatmul.mubr.bf16.gmra.mrb[0].mxu0 %v5768
        %v5807 = vpop.f32.mrb[0].mxu0
        %v5808 = vadd.f32 %v5732, %v5807
        %v5809 = vpop.f32.mrb[0].mxu0
        %v5810 = vpop.f32.mrb[0].mxu0
        %v5811 = vpop.f32.mrb[0].mxu0
        %5812 = vdwg.mxu0
        %5813 = vst [vmem:[%s490] sm:$0xff] %v5808
        %s5814 = sand.u32 %s357, 1
        %s5815 = scalar_lea.sflag [#allocation3], %s5814
        %s5816 = sand.u32 %s357, 1
        %s5817 = smul.addr %s5816, 8
        %s5818 = scalar_lea.vmem [#allocation2], %s5817
        // Predicated region
        $region81: #{lenet_forward.1} parent=79 // pred_check
          %p5819 = pneg %p367
        $region82: #{lenet_forward.1} parent=79 // pred_check_branch
          %5821 = sbr.rel (%p5819) target = $region84
        $region83: #{lenet_forward.1} parent=79 // pred_region
          %s5823 = ssub.s32 128, 128
          %5824 = vsyncadd %s5815, %s5823
          %s5825 = smul.addr %s29, 128
          %s5826 = scalar_lea.hbm %s15, %s5825
          %s5828 = sshll.u32 %s5818, 4
          %s5829 = int_to_ptr.vmem [resolvable:$true] %s5828
          %5831 = dma.vmem_to_hbm [thread:$0]  %s5829, 128, %s5826, %s5815
        $region84: #{lenet_forward.1} parent=79 // pred_fallthru
          _
      $region80: #{lenet_forward.1} parent=5 // pred_fallthru
        _
      %p5832 = scmp.le.s32.totalorder 2, %s24
      // Predicated region
      $region85: #{lenet_forward.1} parent=5 // pred_check
        %p5833 = pneg %p5832
      $region86: #{lenet_forward.1} parent=5 // pred_check_branch
        %5835 = sbr.rel (%p5833) target = $region88
      $region87: #{lenet_forward.1} parent=5 // pred_region
        %s5836 = ssub.s32 %s24, 2
        // Predicated region
        $region89: #{lenet_forward.1} parent=87 // pred_check
          %p5837 = pneg %p373
        $region90: #{lenet_forward.1} parent=87 // pred_check_branch
          %5839 = sbr.rel (%p5837) target = $region92
        $region91: #{lenet_forward.1} parent=87 // pred_region
          %s5840 = sand.u32 %s358, 1
          %s5841 = scalar_lea.sflag [#allocation3], %s5840
          %s5842 = sand.u32 %s358, 1
          %s5843 = smul.addr %s5842, 8
          %s5844 = scalar_lea.vmem [#allocation2], %s5843
          %5845 = dma.done %s5841, 128
        $region92: #{lenet_forward.1} parent=87 // pred_fallthru
          _
      $region88: #{lenet_forward.1} parent=5 // pred_fallthru
        _
    $region6: #{lenet_forward.1} parent=1 // loop_footer
      %s28 = sadd.s32 1, %s24
    $region7: #{lenet_forward.1} parent=1 // loop_footer_branch
      %23 = sbr.rel target = $region3
    $region8: #{lenet_forward.1} parent=1 // loop_exit
      _
    %5846 = vsyncpa [#allocation3], 1
    %s5847 = scalar_lea.sflag [#allocation3], 1
    %5848 = vsyncpa %s5847, 1

</llo_original>
